<compile_context>
chip_gen: v7x
topology: tpu7x:2x2x1
jax: 0.10.0
libtpu: 0.0.40
codegen_flags: <defaults>
</compile_context>

<pallas_src>
import functools

import jax
import jax.numpy as jnp
import numpy as np
from jax.experimental import pallas as pl
from jax.experimental.pallas import tpu as pltpu

G = 10.0

_SUBLANES = 8                      # vreg sublanes
_LANES = 128                       # vreg lanes
_MAX_LANE_TILE = 512               # cap vreg pressure (4 vregs per live value)
_UNROLL_FULL_MAX_STEPS = 64        # fully unroll the time loop up to this T
_VMEM_BUDGET_BYTES = 24 * 1024 * 1024


def _round_up(x, m):
    return (x + m - 1) // m * m


def _rk4_step(theta, omega, c, dt, dt3, dt8):
    """One torchdiffeq rk4_alt_step_func (3/8 rule) step on (theta, omega).

    dtheta/dt = omega ; domega/dt = c * sin(theta), with c = -G/L hoisted.
    dt3 = dt/3 and dt8 = dt*0.125 are precomputed scalars (no vector divides).
    """
    k1t = omega
    k1o = c * jnp.sin(theta)

    y2t = theta + dt3 * k1t
    y2o = omega + dt3 * k1o
    k2t = y2o
    k2o = c * jnp.sin(y2t)

    y3t = theta + dt * k2t - dt3 * k1t
    y3o = omega + dt * k2o - dt3 * k1o
    k3t = y3o
    k3o = c * jnp.sin(y3t)

    y4t = theta + dt * (k1t - k2t + k3t)
    y4o = omega + dt * (k1o - k2o + k3o)
    k4t = y4o
    k4o = c * jnp.sin(y4t)

    theta = theta + dt8 * (k1t + 3.0 * (k2t + k3t) + k4t)
    omega = omega + dt8 * (k1o + 3.0 * (k2o + k3o) + k4o)
    return theta, omega


def rk4_pendulum_kernel(dt_ref, dt3_ref, dt8_ref, init_ref,
                        theta_out_ref, omega_out_ref, *, num_steps, unrolled):
    """RK4(3/8) pendulum integrator for one lane-tile of the batch.

    dt_ref/dt3_ref/dt8_ref : (T-1,) f32 SMEM (scalar prefetch)  dt, dt/3, dt/8
    init_ref  : (3, 8, dl_tile) f32 VMEM  rows: theta0, omega0, c = -G/L
    theta_out_ref / omega_out_ref : (T, 8, dl_tile) f32 VMEM trajectories
    """
    theta = init_ref[0]
    omega = init_ref[1]
    c = init_ref[2]

    # time point 0 is the initial state (full-tile, unmasked stores)
    theta_out_ref[0] = theta
    omega_out_ref[0] = omega

    if unrolled:
        # Small T: fully unrolled static loop, static SMEM reads / stores.
        for i in range(1, num_steps):
            theta, omega = _rk4_step(theta, omega, c,
                                     dt_ref[i - 1], dt3_ref[i - 1],
                                     dt8_ref[i - 1])
            theta_out_ref[i] = theta
            omega_out_ref[i] = omega
    else:
        # Large T: moderately unrolled fori_loop keeps code size and vreg
        # live-ranges bounded while retaining scheduler visibility.
        def body(i, carry):
            th, om = carry
            th, om = _rk4_step(th, om, c,
                               dt_ref[i - 1], dt3_ref[i - 1], dt8_ref[i - 1])
            theta_out_ref[i] = th
            omega_out_ref[i] = om
            return th, om

        jax.lax.fori_loop(1, num_steps, body, (theta, omega), unroll=8)


def _lane_tile(T, dl_min):
    """Lane-tile size: keep per-tile resident VMEM within budget (v7x-safe)."""
    per_lane_bytes = (3 * _SUBLANES + 2 * T * _SUBLANES) * 4 * 2  # x2 dbl-buf
    budget_lanes = max(
        _LANES, (_VMEM_BUDGET_BYTES // per_lane_bytes) // _LANES * _LANES)
    return min(dl_min, _MAX_LANE_TILE, budget_lanes)


def params_model_forward(z0, params, t, mini_batch=None):
    """Pallas equivalent of ParamsModel.forward (mini_batch is unused there)."""
    del mini_batch
    D = z0.shape[0]
    T = t.shape[0]
    f32 = jnp.float32

    # ---- batch packing: 8 sublanes x dl lanes so vector ops fill whole vregs
    dl_min = _round_up(max(pl.cdiv(D, _SUBLANES), _LANES), _LANES)
    dl_tile = _lane_tile(T, dl_min)
    dl = _round_up(dl_min, dl_tile)
    d_pad = _SUBLANES * dl
    grid_d = dl // dl_tile

    theta0 = z0[:, 0].astype(f32)
    omega0 = z0[:, 1].astype(f32)
    c = -G / params[:, 0].astype(f32)       # hoisted: one exact divide, once

    def pack(x):
        # padded lanes stay 0 -> derivatives identically 0, no inf/NaN
        return jnp.zeros((d_pad,), f32).at[:D].set(x).reshape(_SUBLANES, dl)

    init = jnp.stack([pack(theta0), pack(omega0), pack(c)], axis=0)  # (3,8,dl)

    t = t.astype(f32)
    dts = t[1:] - t[:-1]                    # (T-1,)
    dt3s = dts * (1.0 / 3.0)                # strength-reduced /3
    dt8s = dts * 0.125

    unrolled = T <= _UNROLL_FULL_MAX_STEPS
    kernel = functools.partial(rk4_pendulum_kernel,
                               num_steps=T, unrolled=unrolled)

    def dtile_map(d, dts_ref, dt3s_ref, dt8s_ref):   # prefetch refs positional
        return (0, 0, d)

    theta_out, omega_out = pl.pallas_call(
        kernel,
        out_shape=(jax.ShapeDtypeStruct((T, _SUBLANES, dl), f32),
                   jax.ShapeDtypeStruct((T, _SUBLANES, dl), f32)),
        grid_spec=pltpu.PrefetchScalarGridSpec(
            num_scalar_prefetch=3,
            grid=(grid_d,),
            in_specs=[pl.BlockSpec((3, _SUBLANES, dl_tile), dtile_map)],
            out_specs=[pl.BlockSpec((T, _SUBLANES, dl_tile), dtile_map),
                       pl.BlockSpec((T, _SUBLANES, dl_tile), dtile_map)],
        ),
        compiler_params=pltpu.CompilerParams(
            dimension_semantics=("parallel",)),
    )(dts, dt3s, dt8s, init)

    theta_traj = theta_out.reshape(T, d_pad)[:, :D]        # (T, D)
    omega_traj = omega_out.reshape(T, d_pad)[:, :D]        # (T, D)
    pred = jnp.stack([theta_traj, omega_traj], axis=-1)    # (T, D, 2)
    # == torch odeint(...).permute(1, 0, 2)[:, :, :2]
    return jnp.transpose(pred, (1, 0, 2))                  # (D, T, 2)


def reference_forward(z0, params, t):
    """Pure-JAX reference of the same fixed-grid RK4(3/8) integration."""
    y0 = jnp.concatenate([z0, params], axis=1).astype(jnp.float32)  # (D, 3)

    def f(y):
        theta, omega, L = y[:, 0], y[:, 1], y[:, 2]
        return jnp.stack([omega, -G / L * jnp.sin(theta), jnp.zeros_like(L)],
                         axis=1)

    def step(y, tt):
        t0, t1 = tt
        dt = t1 - t0
        k1 = f(y)
        k2 = f(y + dt * k1 / 3.0)
        k3 = f(y + dt * (k2 - k1 / 3.0))
        k4 = f(y + dt * (k1 - k2 + k3))
        y1 = y + dt * 0.125 * (k1 + 3.0 * (k2 + k3) + k4)
        return y1, y1

    _, ys = jax.lax.scan(step, y0, (t[:-1], t[1:]))
    ys = jnp.concatenate([y0[None], ys], axis=0)      # (T, D, 3)
    return jnp.transpose(ys, (1, 0, 2))[:, :, :2]     # (D, T, 2)


if __name__ == "__main__":
    key = jax.random.PRNGKey(0)
    k1, k2 = jax.random.split(key)

    data_size, T = 8, 8
    # Parameter shapes from ParamsModel.__init__: params (D,1), z0 (D,2).
    # Deterministic non-trivial values (ones/zeros init would give a trivially
    # zero trajectory).
    z0 = 0.3 * jax.random.normal(k1, (data_size, 2), dtype=jnp.float32)
    params = 1.0 + 0.2 * jnp.abs(
        jax.random.normal(k2, (data_size, 1), dtype=jnp.float32))   # L > 0
    t = jnp.linspace(0.0, 1.0, T, dtype=jnp.float32)
    mini_batch = jnp.zeros((data_size, 1), jnp.float32)   # unused, as in torch

    predicted = jax.block_until_ready(
        params_model_forward(z0, params, t, mini_batch))
    ref = reference_forward(z0, params, t)
    np.testing.assert_allclose(np.asarray(predicted), np.asarray(ref),
                               rtol=1e-5, atol=1e-5)
    assert predicted.shape == (data_size, T, 2)

    # Also exercise the fori_loop (large-T) code path.
    T2 = 81
    t2 = jnp.linspace(0.0, 2.0, T2, dtype=jnp.float32)
    predicted2 = jax.block_until_ready(
        params_model_forward(z0, params, t2, mini_batch))
    ref2 = reference_forward(z0, params, t2)
    np.testing.assert_allclose(np.asarray(predicted2), np.asarray(ref2),
                               rtol=1e-4, atol=1e-4)
    assert predicted2.shape == (data_size, T2, 2)

    print("KERNEL_OK")
</pallas_src>

<mosaic_0001>
module attributes {stable_mosaic.version = 11 : i64} {
  func.func @rk4_pendulum_kernel(%arg0: i32, %arg1: memref<7xf32, #tpu.memory_space<smem>>, %arg2: memref<7xf32, #tpu.memory_space<smem>>, %arg3: memref<7xf32, #tpu.memory_space<smem>>, %arg4: memref<3x8x128xf32, #tpu.memory_space<vmem>>, %arg5: memref<8x8x128xf32, #tpu.memory_space<vmem>>, %arg6: memref<8x8x128xf32, #tpu.memory_space<vmem>>) attributes {dimension_semantics = [#tpu.dimension_semantics<parallel>], iteration_bounds = array<i64: 1>, scalar_prefetch = 3 : i64, scratch_operands = 0 : i64, tpu.core_type = #tpu.core_type<tc>, window_params = [{transform_indices = @transform_0, window_bounds = array<i64: 3, 8, 128>}, {transform_indices = @transform_1, window_bounds = array<i64: 8, 8, 128>}, {transform_indices = @transform_2, window_bounds = array<i64: 8, 8, 128>}]} {
    %c0 = arith.constant 0 : index
    %c0_0 = arith.constant 0 : index
    %c0_1 = arith.constant 0 : index
    %0 = vector.load %arg4[%c0, %c0_0, %c0_1] : memref<3x8x128xf32, #tpu.memory_space<vmem>>, vector<1x8x128xf32>
    %1 = vector.shape_cast %0 : vector<1x8x128xf32> to vector<8x128xf32>
    %c1 = arith.constant 1 : index
    %c0_2 = arith.constant 0 : index
    %c0_3 = arith.constant 0 : index
    %2 = vector.load %arg4[%c1, %c0_2, %c0_3] : memref<3x8x128xf32, #tpu.memory_space<vmem>>, vector<1x8x128xf32>
    %3 = vector.shape_cast %2 : vector<1x8x128xf32> to vector<8x128xf32>
    %c2 = arith.constant 2 : index
    %c0_4 = arith.constant 0 : index
    %c0_5 = arith.constant 0 : index
    %4 = vector.load %arg4[%c2, %c0_4, %c0_5] : memref<3x8x128xf32, #tpu.memory_space<vmem>>, vector<1x8x128xf32>
    %5 = vector.shape_cast %4 : vector<1x8x128xf32> to vector<8x128xf32>
    %c0_6 = arith.constant 0 : index
    %c0_7 = arith.constant 0 : index
    %c0_8 = arith.constant 0 : index
    %6 = vector.load %arg5[%c0_6, %c0_7, %c0_8] : memref<8x8x128xf32, #tpu.memory_space<vmem>>, vector<1x8x128xf32>
    %7 = vector.shape_cast %6 : vector<1x8x128xf32> to vector<8x128xf32>
    %8 = vector.shape_cast %1 : vector<8x128xf32> to vector<1x8x128xf32>
    tpu.vector_store %arg5[%c0_6, %c0_7, %c0_8], %8 {strides = array<i32>} : memref<8x8x128xf32, #tpu.memory_space<vmem>>, vector<1x8x128xf32>,
    %c0_9 = arith.constant 0 : index
    %c0_10 = arith.constant 0 : index
    %c0_11 = arith.constant 0 : index
    %9 = vector.load %arg6[%c0_9, %c0_10, %c0_11] : memref<8x8x128xf32, #tpu.memory_space<vmem>>, vector<1x8x128xf32>
    %10 = vector.shape_cast %9 : vector<1x8x128xf32> to vector<8x128xf32>
    %11 = vector.shape_cast %3 : vector<8x128xf32> to vector<1x8x128xf32>
    tpu.vector_store %arg6[%c0_9, %c0_10, %c0_11], %11 {strides = array<i32>} : memref<8x8x128xf32, #tpu.memory_space<vmem>>, vector<1x8x128xf32>,
    %c0_12 = arith.constant 0 : index
    %12 = memref.load %arg1[%c0_12] : memref<7xf32, #tpu.memory_space<smem>>
    %c0_13 = arith.constant 0 : index
    %13 = memref.load %arg2[%c0_13] : memref<7xf32, #tpu.memory_space<smem>>
    %c0_14 = arith.constant 0 : index
    %14 = memref.load %arg3[%c0_14] : memref<7xf32, #tpu.memory_space<smem>>
    %15 = math.sin %1 : vector<8x128xf32>
    %16 = arith.mulf %5, %15 : vector<8x128xf32>
    %17 = vector.broadcast %13 : f32 to vector<8x128xf32>
    %18 = arith.mulf %17, %3 : vector<8x128xf32>
    %19 = arith.addf %1, %18 : vector<8x128xf32>
    %20 = vector.broadcast %13 : f32 to vector<8x128xf32>
    %21 = arith.mulf %20, %16 : vector<8x128xf32>
    %22 = arith.addf %3, %21 : vector<8x128xf32>
    %23 = math.sin %19 : vector<8x128xf32>
    %24 = arith.mulf %5, %23 : vector<8x128xf32>
    %25 = vector.broadcast %12 : f32 to vector<8x128xf32>
    %26 = arith.mulf %25, %22 : vector<8x128xf32>
    %27 = arith.addf %1, %26 : vector<8x128xf32>
    %28 = vector.broadcast %13 : f32 to vector<8x128xf32>
    %29 = arith.mulf %28, %3 : vector<8x128xf32>
    %30 = arith.subf %27, %29 : vector<8x128xf32>
    %31 = vector.broadcast %12 : f32 to vector<8x128xf32>
    %32 = arith.mulf %31, %24 : vector<8x128xf32>
    %33 = arith.addf %3, %32 : vector<8x128xf32>
    %34 = vector.broadcast %13 : f32 to vector<8x128xf32>
    %35 = arith.mulf %34, %16 : vector<8x128xf32>
    %36 = arith.subf %33, %35 : vector<8x128xf32>
    %37 = math.sin %30 : vector<8x128xf32>
    %38 = arith.mulf %5, %37 : vector<8x128xf32>
    %39 = arith.subf %3, %22 : vector<8x128xf32>
    %40 = arith.addf %39, %36 : vector<8x128xf32>
    %41 = vector.broadcast %12 : f32 to vector<8x128xf32>
    %42 = arith.mulf %41, %40 : vector<8x128xf32>
    %43 = arith.addf %1, %42 : vector<8x128xf32>
    %44 = arith.subf %16, %24 : vector<8x128xf32>
    %45 = arith.addf %44, %38 : vector<8x128xf32>
    %46 = vector.broadcast %12 : f32 to vector<8x128xf32>
    %47 = arith.mulf %46, %45 : vector<8x128xf32>
    %48 = arith.addf %3, %47 : vector<8x128xf32>
    %49 = math.sin %43 : vector<8x128xf32>
    %50 = arith.mulf %5, %49 : vector<8x128xf32>
    %51 = arith.addf %22, %36 : vector<8x128xf32>
    %cst = arith.constant 3.000000e+00 : f32
    %52 = vector.broadcast %cst : f32 to vector<8x128xf32>
    %53 = arith.mulf %52, %51 : vector<8x128xf32>
    %54 = arith.addf %3, %53 : vector<8x128xf32>
    %55 = arith.addf %54, %48 : vector<8x128xf32>
    %56 = vector.broadcast %14 : f32 to vector<8x128xf32>
    %57 = arith.mulf %56, %55 : vector<8x128xf32>
    %58 = arith.addf %1, %57 : vector<8x128xf32>
    %59 = arith.addf %24, %38 : vector<8x128xf32>
    %cst_15 = arith.constant 3.000000e+00 : f32
    %60 = vector.broadcast %cst_15 : f32 to vector<8x128xf32>
    %61 = arith.mulf %60, %59 : vector<8x128xf32>
    %62 = arith.addf %16, %61 : vector<8x128xf32>
    %63 = arith.addf %62, %50 : vector<8x128xf32>
    %64 = vector.broadcast %14 : f32 to vector<8x128xf32>
    %65 = arith.mulf %64, %63 : vector<8x128xf32>
    %66 = arith.addf %3, %65 : vector<8x128xf32>
    %c1_16 = arith.constant 1 : index
    %c0_17 = arith.constant 0 : index
    %c0_18 = arith.constant 0 : index
    %67 = vector.load %arg5[%c1_16, %c0_17, %c0_18] : memref<8x8x128xf32, #tpu.memory_space<vmem>>, vector<1x8x128xf32>
    %68 = vector.shape_cast %67 : vector<1x8x128xf32> to vector<8x128xf32>
    %69 = vector.shape_cast %58 : vector<8x128xf32> to vector<1x8x128xf32>
    tpu.vector_store %arg5[%c1_16, %c0_17, %c0_18], %69 {strides = array<i32>} : memref<8x8x128xf32, #tpu.memory_space<vmem>>, vector<1x8x128xf32>,
    %c1_19 = arith.constant 1 : index
    %c0_20 = arith.constant 0 : index
    %c0_21 = arith.constant 0 : index
    %70 = vector.load %arg6[%c1_19, %c0_20, %c0_21] : memref<8x8x128xf32, #tpu.memory_space<vmem>>, vector<1x8x128xf32>
    %71 = vector.shape_cast %70 : vector<1x8x128xf32> to vector<8x128xf32>
    %72 = vector.shape_cast %66 : vector<8x128xf32> to vector<1x8x128xf32>
    tpu.vector_store %arg6[%c1_19, %c0_20, %c0_21], %72 {strides = array<i32>} : memref<8x8x128xf32, #tpu.memory_space<vmem>>, vector<1x8x128xf32>,
    %c1_22 = arith.constant 1 : index
    %73 = memref.load %arg1[%c1_22] : memref<7xf32, #tpu.memory_space<smem>>
    %c1_23 = arith.constant 1 : index
    %74 = memref.load %arg2[%c1_23] : memref<7xf32, #tpu.memory_space<smem>>
    %c1_24 = arith.constant 1 : index
    %75 = memref.load %arg3[%c1_24] : memref<7xf32, #tpu.memory_space<smem>>
    %76 = math.sin %58 : vector<8x128xf32>
    %77 = arith.mulf %5, %76 : vector<8x128xf32>
    %78 = vector.broadcast %74 : f32 to vector<8x128xf32>
    %79 = arith.mulf %78, %66 : vector<8x128xf32>
    %80 = arith.addf %58, %79 : vector<8x128xf32>
    %81 = vector.broadcast %74 : f32 to vector<8x128xf32>
    %82 = arith.mulf %81, %77 : vector<8x128xf32>
    %83 = arith.addf %66, %82 : vector<8x128xf32>
    %84 = math.sin %80 : vector<8x128xf32>
    %85 = arith.mulf %5, %84 : vector<8x128xf32>
    %86 = vector.broadcast %73 : f32 to vector<8x128xf32>
    %87 = arith.mulf %86, %83 : vector<8x128xf32>
    %88 = arith.addf %58, %87 : vector<8x128xf32>
    %89 = vector.broadcast %74 : f32 to vector<8x128xf32>
    %90 = arith.mulf %89, %66 : vector<8x128xf32>
    %91 = arith.subf %88, %90 : vector<8x128xf32>
    %92 = vector.broadcast %73 : f32 to vector<8x128xf32>
    %93 = arith.mulf %92, %85 : vector<8x128xf32>
    %94 = arith.addf %66, %93 : vector<8x128xf32>
    %95 = vector.broadcast %74 : f32 to vector<8x128xf32>
    %96 = arith.mulf %95, %77 : vector<8x128xf32>
    %97 = arith.subf %94, %96 : vector<8x128xf32>
    %98 = math.sin %91 : vector<8x128xf32>
    %99 = arith.mulf %5, %98 : vector<8x128xf32>
    %100 = arith.subf %66, %83 : vector<8x128xf32>
    %101 = arith.addf %100, %97 : vector<8x128xf32>
    %102 = vector.broadcast %73 : f32 to vector<8x128xf32>
    %103 = arith.mulf %102, %101 : vector<8x128xf32>
    %104 = arith.addf %58, %103 : vector<8x128xf32>
    %105 = arith.subf %77, %85 : vector<8x128xf32>
    %106 = arith.addf %105, %99 : vector<8x128xf32>
    %107 = vector.broadcast %73 : f32 to vector<8x128xf32>
    %108 = arith.mulf %107, %106 : vector<8x128xf32>
    %109 = arith.addf %66, %108 : vector<8x128xf32>
    %110 = math.sin %104 : vector<8x128xf32>
    %111 = arith.mulf %5, %110 : vector<8x128xf32>
    %112 = arith.addf %83, %97 : vector<8x128xf32>
    %cst_25 = arith.constant 3.000000e+00 : f32
    %113 = vector.broadcast %cst_25 : f32 to vector<8x128xf32>
    %114 = arith.mulf %113, %112 : vector<8x128xf32>
    %115 = arith.addf %66, %114 : vector<8x128xf32>
    %116 = arith.addf %115, %109 : vector<8x128xf32>
    %117 = vector.broadcast %75 : f32 to vector<8x128xf32>
    %118 = arith.mulf %117, %116 : vector<8x128xf32>
    %119 = arith.addf %58, %118 : vector<8x128xf32>
    %120 = arith.addf %85, %99 : vector<8x128xf32>
    %cst_26 = arith.constant 3.000000e+00 : f32
    %121 = vector.broadcast %cst_26 : f32 to vector<8x128xf32>
    %122 = arith.mulf %121, %120 : vector<8x128xf32>
    %123 = arith.addf %77, %122 : vector<8x128xf32>
    %124 = arith.addf %123, %111 : vector<8x128xf32>
    %125 = vector.broadcast %75 : f32 to vector<8x128xf32>
    %126 = arith.mulf %125, %124 : vector<8x128xf32>
    %127 = arith.addf %66, %126 : vector<8x128xf32>
    %c2_27 = arith.constant 2 : index
    %c0_28 = arith.constant 0 : index
    %c0_29 = arith.constant 0 : index
    %128 = vector.load %arg5[%c2_27, %c0_28, %c0_29] : memref<8x8x128xf32, #tpu.memory_space<vmem>>, vector<1x8x128xf32>
    %129 = vector.shape_cast %128 : vector<1x8x128xf32> to vector<8x128xf32>
    %130 = vector.shape_cast %119 : vector<8x128xf32> to vector<1x8x128xf32>
    tpu.vector_store %arg5[%c2_27, %c0_28, %c0_29], %130 {strides = array<i32>} : memref<8x8x128xf32, #tpu.memory_space<vmem>>, vector<1x8x128xf32>,
    %c2_30 = arith.constant 2 : index
    %c0_31 = arith.constant 0 : index
    %c0_32 = arith.constant 0 : index
    %131 = vector.load %arg6[%c2_30, %c0_31, %c0_32] : memref<8x8x128xf32, #tpu.memory_space<vmem>>, vector<1x8x128xf32>
    %132 = vector.shape_cast %131 : vector<1x8x128xf32> to vector<8x128xf32>
    %133 = vector.shape_cast %127 : vector<8x128xf32> to vector<1x8x128xf32>
    tpu.vector_store %arg6[%c2_30, %c0_31, %c0_32], %133 {strides = array<i32>} : memref<8x8x128xf32, #tpu.memory_space<vmem>>, vector<1x8x128xf32>,
    %c2_33 = arith.constant 2 : index
    %134 = memref.load %arg1[%c2_33] : memref<7xf32, #tpu.memory_space<smem>>
    %c2_34 = arith.constant 2 : index
    %135 = memref.load %arg2[%c2_34] : memref<7xf32, #tpu.memory_space<smem>>
    %c2_35 = arith.constant 2 : index
    %136 = memref.load %arg3[%c2_35] : memref<7xf32, #tpu.memory_space<smem>>
    %137 = math.sin %119 : vector<8x128xf32>
    %138 = arith.mulf %5, %137 : vector<8x128xf32>
    %139 = vector.broadcast %135 : f32 to vector<8x128xf32>
    %140 = arith.mulf %139, %127 : vector<8x128xf32>
    %141 = arith.addf %119, %140 : vector<8x128xf32>
    %142 = vector.broadcast %135 : f32 to vector<8x128xf32>
    %143 = arith.mulf %142, %138 : vector<8x128xf32>
    %144 = arith.addf %127, %143 : vector<8x128xf32>
    %145 = math.sin %141 : vector<8x128xf32>
    %146 = arith.mulf %5, %145 : vector<8x128xf32>
    %147 = vector.broadcast %134 : f32 to vector<8x128xf32>
    %148 = arith.mulf %147, %144 : vector<8x128xf32>
    %149 = arith.addf %119, %148 : vector<8x128xf32>
    %150 = vector.broadcast %135 : f32 to vector<8x128xf32>
    %151 = arith.mulf %150, %127 : vector<8x128xf32>
    %152 = arith.subf %149, %151 : vector<8x128xf32>
    %153 = vector.broadcast %134 : f32 to vector<8x128xf32>
    %154 = arith.mulf %153, %146 : vector<8x128xf32>
    %155 = arith.addf %127, %154 : vector<8x128xf32>
    %156 = vector.broadcast %135 : f32 to vector<8x128xf32>
    %157 = arith.mulf %156, %138 : vector<8x128xf32>
    %158 = arith.subf %155, %157 : vector<8x128xf32>
    %159 = math.sin %152 : vector<8x128xf32>
    %160 = arith.mulf %5, %159 : vector<8x128xf32>
    %161 = arith.subf %127, %144 : vector<8x128xf32>
    %162 = arith.addf %161, %158 : vector<8x128xf32>
    %163 = vector.broadcast %134 : f32 to vector<8x128xf32>
    %164 = arith.mulf %163, %162 : vector<8x128xf32>
    %165 = arith.addf %119, %164 : vector<8x128xf32>
    %166 = arith.subf %138, %146 : vector<8x128xf32>
    %167 = arith.addf %166, %160 : vector<8x128xf32>
    %168 = vector.broadcast %134 : f32 to vector<8x128xf32>
    %169 = arith.mulf %168, %167 : vector<8x128xf32>
    %170 = arith.addf %127, %169 : vector<8x128xf32>
    %171 = math.sin %165 : vector<8x128xf32>
    %172 = arith.mulf %5, %171 : vector<8x128xf32>
    %173 = arith.addf %144, %158 : vector<8x128xf32>
    %cst_36 = arith.constant 3.000000e+00 : f32
    %174 = vector.broadcast %cst_36 : f32 to vector<8x128xf32>
    %175 = arith.mulf %174, %173 : vector<8x128xf32>
    %176 = arith.addf %127, %175 : vector<8x128xf32>
    %177 = arith.addf %176, %170 : vector<8x128xf32>
    %178 = vector.broadcast %136 : f32 to vector<8x128xf32>
    %179 = arith.mulf %178, %177 : vector<8x128xf32>
    %180 = arith.addf %119, %179 : vector<8x128xf32>
    %181 = arith.addf %146, %160 : vector<8x128xf32>
    %cst_37 = arith.constant 3.000000e+00 : f32
    %182 = vector.broadcast %cst_37 : f32 to vector<8x128xf32>
    %183 = arith.mulf %182, %181 : vector<8x128xf32>
    %184 = arith.addf %138, %183 : vector<8x128xf32>
    %185 = arith.addf %184, %172 : vector<8x128xf32>
    %186 = vector.broadcast %136 : f32 to vector<8x128xf32>
    %187 = arith.mulf %186, %185 : vector<8x128xf32>
    %188 = arith.addf %127, %187 : vector<8x128xf32>
    %c3 = arith.constant 3 : index
    %c0_38 = arith.constant 0 : index
    %c0_39 = arith.constant 0 : index
    %189 = vector.load %arg5[%c3, %c0_38, %c0_39] : memref<8x8x128xf32, #tpu.memory_space<vmem>>, vector<1x8x128xf32>
    %190 = vector.shape_cast %189 : vector<1x8x128xf32> to vector<8x128xf32>
    %191 = vector.shape_cast %180 : vector<8x128xf32> to vector<1x8x128xf32>
    tpu.vector_store %arg5[%c3, %c0_38, %c0_39], %191 {strides = array<i32>} : memref<8x8x128xf32, #tpu.memory_space<vmem>>, vector<1x8x128xf32>,
    %c3_40 = arith.constant 3 : index
    %c0_41 = arith.constant 0 : index
    %c0_42 = arith.constant 0 : index
    %192 = vector.load %arg6[%c3_40, %c0_41, %c0_42] : memref<8x8x128xf32, #tpu.memory_space<vmem>>, vector<1x8x128xf32>
    %193 = vector.shape_cast %192 : vector<1x8x128xf32> to vector<8x128xf32>
    %194 = vector.shape_cast %188 : vector<8x128xf32> to vector<1x8x128xf32>
    tpu.vector_store %arg6[%c3_40, %c0_41, %c0_42], %194 {strides = array<i32>} : memref<8x8x128xf32, #tpu.memory_space<vmem>>, vector<1x8x128xf32>,
    %c3_43 = arith.constant 3 : index
    %195 = memref.load %arg1[%c3_43] : memref<7xf32, #tpu.memory_space<smem>>
    %c3_44 = arith.constant 3 : index
    %196 = memref.load %arg2[%c3_44] : memref<7xf32, #tpu.memory_space<smem>>
    %c3_45 = arith.constant 3 : index
    %197 = memref.load %arg3[%c3_45] : memref<7xf32, #tpu.memory_space<smem>>
    %198 = math.sin %180 : vector<8x128xf32>
    %199 = arith.mulf %5, %198 : vector<8x128xf32>
    %200 = vector.broadcast %196 : f32 to vector<8x128xf32>
    %201 = arith.mulf %200, %188 : vector<8x128xf32>
    %202 = arith.addf %180, %201 : vector<8x128xf32>
    %203 = vector.broadcast %196 : f32 to vector<8x128xf32>
    %204 = arith.mulf %203, %199 : vector<8x128xf32>
    %205 = arith.addf %188, %204 : vector<8x128xf32>
    %206 = math.sin %202 : vector<8x128xf32>
    %207 = arith.mulf %5, %206 : vector<8x128xf32>
    %208 = vector.broadcast %195 : f32 to vector<8x128xf32>
    %209 = arith.mulf %208, %205 : vector<8x128xf32>
    %210 = arith.addf %180, %209 : vector<8x128xf32>
    %211 = vector.broadcast %196 : f32 to vector<8x128xf32>
    %212 = arith.mulf %211, %188 : vector<8x128xf32>
    %213 = arith.subf %210, %212 : vector<8x128xf32>
    %214 = vector.broadcast %195 : f32 to vector<8x128xf32>
    %215 = arith.mulf %214, %207 : vector<8x128xf32>
    %216 = arith.addf %188, %215 : vector<8x128xf32>
    %217 = vector.broadcast %196 : f32 to vector<8x128xf32>
    %218 = arith.mulf %217, %199 : vector<8x128xf32>
    %219 = arith.subf %216, %218 : vector<8x128xf32>
    %220 = math.sin %213 : vector<8x128xf32>
    %221 = arith.mulf %5, %220 : vector<8x128xf32>
    %222 = arith.subf %188, %205 : vector<8x128xf32>
    %223 = arith.addf %222, %219 : vector<8x128xf32>
    %224 = vector.broadcast %195 : f32 to vector<8x128xf32>
    %225 = arith.mulf %224, %223 : vector<8x128xf32>
    %226 = arith.addf %180, %225 : vector<8x128xf32>
    %227 = arith.subf %199, %207 : vector<8x128xf32>
    %228 = arith.addf %227, %221 : vector<8x128xf32>
    %229 = vector.broadcast %195 : f32 to vector<8x128xf32>
    %230 = arith.mulf %229, %228 : vector<8x128xf32>
    %231 = arith.addf %188, %230 : vector<8x128xf32>
    %232 = math.sin %226 : vector<8x128xf32>
    %233 = arith.mulf %5, %232 : vector<8x128xf32>
    %234 = arith.addf %205, %219 : vector<8x128xf32>
    %cst_46 = arith.constant 3.000000e+00 : f32
    %235 = vector.broadcast %cst_46 : f32 to vector<8x128xf32>
    %236 = arith.mulf %235, %234 : vector<8x128xf32>
    %237 = arith.addf %188, %236 : vector<8x128xf32>
    %238 = arith.addf %237, %231 : vector<8x128xf32>
    %239 = vector.broadcast %197 : f32 to vector<8x128xf32>
    %240 = arith.mulf %239, %238 : vector<8x128xf32>
    %241 = arith.addf %180, %240 : vector<8x128xf32>
    %242 = arith.addf %207, %221 : vector<8x128xf32>
    %cst_47 = arith.constant 3.000000e+00 : f32
    %243 = vector.broadcast %cst_47 : f32 to vector<8x128xf32>
    %244 = arith.mulf %243, %242 : vector<8x128xf32>
    %245 = arith.addf %199, %244 : vector<8x128xf32>
    %246 = arith.addf %245, %233 : vector<8x128xf32>
    %247 = vector.broadcast %197 : f32 to vector<8x128xf32>
    %248 = arith.mulf %247, %246 : vector<8x128xf32>
    %249 = arith.addf %188, %248 : vector<8x128xf32>
    %c4 = arith.constant 4 : index
    %c0_48 = arith.constant 0 : index
    %c0_49 = arith.constant 0 : index
    %250 = vector.load %arg5[%c4, %c0_48, %c0_49] : memref<8x8x128xf32, #tpu.memory_space<vmem>>, vector<1x8x128xf32>
    %251 = vector.shape_cast %250 : vector<1x8x128xf32> to vector<8x128xf32>
    %252 = vector.shape_cast %241 : vector<8x128xf32> to vector<1x8x128xf32>
    tpu.vector_store %arg5[%c4, %c0_48, %c0_49], %252 {strides = array<i32>} : memref<8x8x128xf32, #tpu.memory_space<vmem>>, vector<1x8x128xf32>,
    %c4_50 = arith.constant 4 : index
    %c0_51 = arith.constant 0 : index
    %c0_52 = arith.constant 0 : index
    %253 = vector.load %arg6[%c4_50, %c0_51, %c0_52] : memref<8x8x128xf32, #tpu.memory_space<vmem>>, vector<1x8x128xf32>
    %254 = vector.shape_cast %253 : vector<1x8x128xf32> to vector<8x128xf32>
    %255 = vector.shape_cast %249 : vector<8x128xf32> to vector<1x8x128xf32>
    tpu.vector_store %arg6[%c4_50, %c0_51, %c0_52], %255 {strides = array<i32>} : memref<8x8x128xf32, #tpu.memory_space<vmem>>, vector<1x8x128xf32>,
    %c4_53 = arith.constant 4 : index
    %256 = memref.load %arg1[%c4_53] : memref<7xf32, #tpu.memory_space<smem>>
    %c4_54 = arith.constant 4 : index
    %257 = memref.load %arg2[%c4_54] : memref<7xf32, #tpu.memory_space<smem>>
    %c4_55 = arith.constant 4 : index
    %258 = memref.load %arg3[%c4_55] : memref<7xf32, #tpu.memory_space<smem>>
    %259 = math.sin %241 : vector<8x128xf32>
    %260 = arith.mulf %5, %259 : vector<8x128xf32>
    %261 = vector.broadcast %257 : f32 to vector<8x128xf32>
    %262 = arith.mulf %261, %249 : vector<8x128xf32>
    %263 = arith.addf %241, %262 : vector<8x128xf32>
    %264 = vector.broadcast %257 : f32 to vector<8x128xf32>
    %265 = arith.mulf %264, %260 : vector<8x128xf32>
    %266 = arith.addf %249, %265 : vector<8x128xf32>
    %267 = math.sin %263 : vector<8x128xf32>
    %268 = arith.mulf %5, %267 : vector<8x128xf32>
    %269 = vector.broadcast %256 : f32 to vector<8x128xf32>
    %270 = arith.mulf %269, %266 : vector<8x128xf32>
    %271 = arith.addf %241, %270 : vector<8x128xf32>
    %272 = vector.broadcast %257 : f32 to vector<8x128xf32>
    %273 = arith.mulf %272, %249 : vector<8x128xf32>
    %274 = arith.subf %271, %273 : vector<8x128xf32>
    %275 = vector.broadcast %256 : f32 to vector<8x128xf32>
    %276 = arith.mulf %275, %268 : vector<8x128xf32>
    %277 = arith.addf %249, %276 : vector<8x128xf32>
    %278 = vector.broadcast %257 : f32 to vector<8x128xf32>
    %279 = arith.mulf %278, %260 : vector<8x128xf32>
    %280 = arith.subf %277, %279 : vector<8x128xf32>
    %281 = math.sin %274 : vector<8x128xf32>
    %282 = arith.mulf %5, %281 : vector<8x128xf32>
    %283 = arith.subf %249, %266 : vector<8x128xf32>
    %284 = arith.addf %283, %280 : vector<8x128xf32>
    %285 = vector.broadcast %256 : f32 to vector<8x128xf32>
    %286 = arith.mulf %285, %284 : vector<8x128xf32>
    %287 = arith.addf %241, %286 : vector<8x128xf32>
    %288 = arith.subf %260, %268 : vector<8x128xf32>
    %289 = arith.addf %288, %282 : vector<8x128xf32>
    %290 = vector.broadcast %256 : f32 to vector<8x128xf32>
    %291 = arith.mulf %290, %289 : vector<8x128xf32>
    %292 = arith.addf %249, %291 : vector<8x128xf32>
    %293 = math.sin %287 : vector<8x128xf32>
    %294 = arith.mulf %5, %293 : vector<8x128xf32>
    %295 = arith.addf %266, %280 : vector<8x128xf32>
    %cst_56 = arith.constant 3.000000e+00 : f32
    %296 = vector.broadcast %cst_56 : f32 to vector<8x128xf32>
    %297 = arith.mulf %296, %295 : vector<8x128xf32>
    %298 = arith.addf %249, %297 : vector<8x128xf32>
    %299 = arith.addf %298, %292 : vector<8x128xf32>
    %300 = vector.broadcast %258 : f32 to vector<8x128xf32>
    %301 = arith.mulf %300, %299 : vector<8x128xf32>
    %302 = arith.addf %241, %301 : vector<8x128xf32>
    %303 = arith.addf %268, %282 : vector<8x128xf32>
    %cst_57 = arith.constant 3.000000e+00 : f32
    %304 = vector.broadcast %cst_57 : f32 to vector<8x128xf32>
    %305 = arith.mulf %304, %303 : vector<8x128xf32>
    %306 = arith.addf %260, %305 : vector<8x128xf32>
    %307 = arith.addf %306, %294 : vector<8x128xf32>
    %308 = vector.broadcast %258 : f32 to vector<8x128xf32>
    %309 = arith.mulf %308, %307 : vector<8x128xf32>
    %310 = arith.addf %249, %309 : vector<8x128xf32>
    %c5 = arith.constant 5 : index
    %c0_58 = arith.constant 0 : index
    %c0_59 = arith.constant 0 : index
    %311 = vector.load %arg5[%c5, %c0_58, %c0_59] : memref<8x8x128xf32, #tpu.memory_space<vmem>>, vector<1x8x128xf32>
    %312 = vector.shape_cast %311 : vector<1x8x128xf32> to vector<8x128xf32>
    %313 = vector.shape_cast %302 : vector<8x128xf32> to vector<1x8x128xf32>
    tpu.vector_store %arg5[%c5, %c0_58, %c0_59], %313 {strides = array<i32>} : memref<8x8x128xf32, #tpu.memory_space<vmem>>, vector<1x8x128xf32>,
    %c5_60 = arith.constant 5 : index
    %c0_61 = arith.constant 0 : index
    %c0_62 = arith.constant 0 : index
    %314 = vector.load %arg6[%c5_60, %c0_61, %c0_62] : memref<8x8x128xf32, #tpu.memory_space<vmem>>, vector<1x8x128xf32>
    %315 = vector.shape_cast %314 : vector<1x8x128xf32> to vector<8x128xf32>
    %316 = vector.shape_cast %310 : vector<8x128xf32> to vector<1x8x128xf32>
    tpu.vector_store %arg6[%c5_60, %c0_61, %c0_62], %316 {strides = array<i32>} : memref<8x8x128xf32, #tpu.memory_space<vmem>>, vector<1x8x128xf32>,
    %c5_63 = arith.constant 5 : index
    %317 = memref.load %arg1[%c5_63] : memref<7xf32, #tpu.memory_space<smem>>
    %c5_64 = arith.constant 5 : index
    %318 = memref.load %arg2[%c5_64] : memref<7xf32, #tpu.memory_space<smem>>
    %c5_65 = arith.constant 5 : index
    %319 = memref.load %arg3[%c5_65] : memref<7xf32, #tpu.memory_space<smem>>
    %320 = math.sin %302 : vector<8x128xf32>
    %321 = arith.mulf %5, %320 : vector<8x128xf32>
    %322 = vector.broadcast %318 : f32 to vector<8x128xf32>
    %323 = arith.mulf %322, %310 : vector<8x128xf32>
    %324 = arith.addf %302, %323 : vector<8x128xf32>
    %325 = vector.broadcast %318 : f32 to vector<8x128xf32>
    %326 = arith.mulf %325, %321 : vector<8x128xf32>
    %327 = arith.addf %310, %326 : vector<8x128xf32>
    %328 = math.sin %324 : vector<8x128xf32>
    %329 = arith.mulf %5, %328 : vector<8x128xf32>
    %330 = vector.broadcast %317 : f32 to vector<8x128xf32>
    %331 = arith.mulf %330, %327 : vector<8x128xf32>
    %332 = arith.addf %302, %331 : vector<8x128xf32>
    %333 = vector.broadcast %318 : f32 to vector<8x128xf32>
    %334 = arith.mulf %333, %310 : vector<8x128xf32>
    %335 = arith.subf %332, %334 : vector<8x128xf32>
    %336 = vector.broadcast %317 : f32 to vector<8x128xf32>
    %337 = arith.mulf %336, %329 : vector<8x128xf32>
    %338 = arith.addf %310, %337 : vector<8x128xf32>
    %339 = vector.broadcast %318 : f32 to vector<8x128xf32>
    %340 = arith.mulf %339, %321 : vector<8x128xf32>
    %341 = arith.subf %338, %340 : vector<8x128xf32>
    %342 = math.sin %335 : vector<8x128xf32>
    %343 = arith.mulf %5, %342 : vector<8x128xf32>
    %344 = arith.subf %310, %327 : vector<8x128xf32>
    %345 = arith.addf %344, %341 : vector<8x128xf32>
    %346 = vector.broadcast %317 : f32 to vector<8x128xf32>
    %347 = arith.mulf %346, %345 : vector<8x128xf32>
    %348 = arith.addf %302, %347 : vector<8x128xf32>
    %349 = arith.subf %321, %329 : vector<8x128xf32>
    %350 = arith.addf %349, %343 : vector<8x128xf32>
    %351 = vector.broadcast %317 : f32 to vector<8x128xf32>
    %352 = arith.mulf %351, %350 : vector<8x128xf32>
    %353 = arith.addf %310, %352 : vector<8x128xf32>
    %354 = math.sin %348 : vector<8x128xf32>
    %355 = arith.mulf %5, %354 : vector<8x128xf32>
    %356 = arith.addf %327, %341 : vector<8x128xf32>
    %cst_66 = arith.constant 3.000000e+00 : f32
    %357 = vector.broadcast %cst_66 : f32 to vector<8x128xf32>
    %358 = arith.mulf %357, %356 : vector<8x128xf32>
    %359 = arith.addf %310, %358 : vector<8x128xf32>
    %360 = arith.addf %359, %353 : vector<8x128xf32>
    %361 = vector.broadcast %319 : f32 to vector<8x128xf32>
    %362 = arith.mulf %361, %360 : vector<8x128xf32>
    %363 = arith.addf %302, %362 : vector<8x128xf32>
    %364 = arith.addf %329, %343 : vector<8x128xf32>
    %cst_67 = arith.constant 3.000000e+00 : f32
    %365 = vector.broadcast %cst_67 : f32 to vector<8x128xf32>
    %366 = arith.mulf %365, %364 : vector<8x128xf32>
    %367 = arith.addf %321, %366 : vector<8x128xf32>
    %368 = arith.addf %367, %355 : vector<8x128xf32>
    %369 = vector.broadcast %319 : f32 to vector<8x128xf32>
    %370 = arith.mulf %369, %368 : vector<8x128xf32>
    %371 = arith.addf %310, %370 : vector<8x128xf32>
    %c6 = arith.constant 6 : index
    %c0_68 = arith.constant 0 : index
    %c0_69 = arith.constant 0 : index
    %372 = vector.load %arg5[%c6, %c0_68, %c0_69] : memref<8x8x128xf32, #tpu.memory_space<vmem>>, vector<1x8x128xf32>
    %373 = vector.shape_cast %372 : vector<1x8x128xf32> to vector<8x128xf32>
    %374 = vector.shape_cast %363 : vector<8x128xf32> to vector<1x8x128xf32>
    tpu.vector_store %arg5[%c6, %c0_68, %c0_69], %374 {strides = array<i32>} : memref<8x8x128xf32, #tpu.memory_space<vmem>>, vector<1x8x128xf32>,
    %c6_70 = arith.constant 6 : index
    %c0_71 = arith.constant 0 : index
    %c0_72 = arith.constant 0 : index
    %375 = vector.load %arg6[%c6_70, %c0_71, %c0_72] : memref<8x8x128xf32, #tpu.memory_space<vmem>>, vector<1x8x128xf32>
    %376 = vector.shape_cast %375 : vector<1x8x128xf32> to vector<8x128xf32>
    %377 = vector.shape_cast %371 : vector<8x128xf32> to vector<1x8x128xf32>
    tpu.vector_store %arg6[%c6_70, %c0_71, %c0_72], %377 {strides = array<i32>} : memref<8x8x128xf32, #tpu.memory_space<vmem>>, vector<1x8x128xf32>,
    %c6_73 = arith.constant 6 : index
    %378 = memref.load %arg1[%c6_73] : memref<7xf32, #tpu.memory_space<smem>>
    %c6_74 = arith.constant 6 : index
    %379 = memref.load %arg2[%c6_74] : memref<7xf32, #tpu.memory_space<smem>>
    %c6_75 = arith.constant 6 : index
    %380 = memref.load %arg3[%c6_75] : memref<7xf32, #tpu.memory_space<smem>>
    %381 = math.sin %363 : vector<8x128xf32>
    %382 = arith.mulf %5, %381 : vector<8x128xf32>
    %383 = vector.broadcast %379 : f32 to vector<8x128xf32>
    %384 = arith.mulf %383, %371 : vector<8x128xf32>
    %385 = arith.addf %363, %384 : vector<8x128xf32>
    %386 = vector.broadcast %379 : f32 to vector<8x128xf32>
    %387 = arith.mulf %386, %382 : vector<8x128xf32>
    %388 = arith.addf %371, %387 : vector<8x128xf32>
    %389 = math.sin %385 : vector<8x128xf32>
    %390 = arith.mulf %5, %389 : vector<8x128xf32>
    %391 = vector.broadcast %378 : f32 to vector<8x128xf32>
    %392 = arith.mulf %391, %388 : vector<8x128xf32>
    %393 = arith.addf %363, %392 : vector<8x128xf32>
    %394 = vector.broadcast %379 : f32 to vector<8x128xf32>
    %395 = arith.mulf %394, %371 : vector<8x128xf32>
    %396 = arith.subf %393, %395 : vector<8x128xf32>
    %397 = vector.broadcast %378 : f32 to vector<8x128xf32>
    %398 = arith.mulf %397, %390 : vector<8x128xf32>
    %399 = arith.addf %371, %398 : vector<8x128xf32>
    %400 = vector.broadcast %379 : f32 to vector<8x128xf32>
    %401 = arith.mulf %400, %382 : vector<8x128xf32>
    %402 = arith.subf %399, %401 : vector<8x128xf32>
    %403 = math.sin %396 : vector<8x128xf32>
    %404 = arith.mulf %5, %403 : vector<8x128xf32>
    %405 = arith.subf %371, %388 : vector<8x128xf32>
    %406 = arith.addf %405, %402 : vector<8x128xf32>
    %407 = vector.broadcast %378 : f32 to vector<8x128xf32>
    %408 = arith.mulf %407, %406 : vector<8x128xf32>
    %409 = arith.addf %363, %408 : vector<8x128xf32>
    %410 = arith.subf %382, %390 : vector<8x128xf32>
    %411 = arith.addf %410, %404 : vector<8x128xf32>
    %412 = vector.broadcast %378 : f32 to vector<8x128xf32>
    %413 = arith.mulf %412, %411 : vector<8x128xf32>
    %414 = arith.addf %371, %413 : vector<8x128xf32>
    %415 = math.sin %409 : vector<8x128xf32>
    %416 = arith.mulf %5, %415 : vector<8x128xf32>
    %417 = arith.addf %388, %402 : vector<8x128xf32>
    %cst_76 = arith.constant 3.000000e+00 : f32
    %418 = vector.broadcast %cst_76 : f32 to vector<8x128xf32>
    %419 = arith.mulf %418, %417 : vector<8x128xf32>
    %420 = arith.addf %371, %419 : vector<8x128xf32>
    %421 = arith.addf %420, %414 : vector<8x128xf32>
    %422 = vector.broadcast %380 : f32 to vector<8x128xf32>
    %423 = arith.mulf %422, %421 : vector<8x128xf32>
    %424 = arith.addf %363, %423 : vector<8x128xf32>
    %425 = arith.addf %390, %404 : vector<8x128xf32>
    %cst_77 = arith.constant 3.000000e+00 : f32
    %426 = vector.broadcast %cst_77 : f32 to vector<8x128xf32>
    %427 = arith.mulf %426, %425 : vector<8x128xf32>
    %428 = arith.addf %382, %427 : vector<8x128xf32>
    %429 = arith.addf %428, %416 : vector<8x128xf32>
    %430 = vector.broadcast %380 : f32 to vector<8x128xf32>
    %431 = arith.mulf %430, %429 : vector<8x128xf32>
    %432 = arith.addf %371, %431 : vector<8x128xf32>
    %c7 = arith.constant 7 : index
    %c0_78 = arith.constant 0 : index
    %c0_79 = arith.constant 0 : index
    %433 = vector.load %arg5[%c7, %c0_78, %c0_79] : memref<8x8x128xf32, #tpu.memory_space<vmem>>, vector<1x8x128xf32>
    %434 = vector.shape_cast %433 : vector<1x8x128xf32> to vector<8x128xf32>
    %435 = vector.shape_cast %424 : vector<8x128xf32> to vector<1x8x128xf32>
    tpu.vector_store %arg5[%c7, %c0_78, %c0_79], %435 {strides = array<i32>} : memref<8x8x128xf32, #tpu.memory_space<vmem>>, vector<1x8x128xf32>,
    %c7_80 = arith.constant 7 : index
    %c0_81 = arith.constant 0 : index
    %c0_82 = arith.constant 0 : index
    %436 = vector.load %arg6[%c7_80, %c0_81, %c0_82] : memref<8x8x128xf32, #tpu.memory_space<vmem>>, vector<1x8x128xf32>
    %437 = vector.shape_cast %436 : vector<1x8x128xf32> to vector<8x128xf32>
    %438 = vector.shape_cast %432 : vector<8x128xf32> to vector<1x8x128xf32>
    tpu.vector_store %arg6[%c7_80, %c0_81, %c0_82], %438 {strides = array<i32>} : memref<8x8x128xf32, #tpu.memory_space<vmem>>, vector<1x8x128xf32>,
    return
  }
  func.func @transform_0(%arg0: i32, %arg1: memref<7xf32, #tpu.memory_space<smem>>, %arg2: memref<7xf32, #tpu.memory_space<smem>>, %arg3: memref<7xf32, #tpu.memory_space<smem>>) -> (i32, i32, i32) {
    %c0_i32 = arith.constant 0 : i32
    %c0_i32_0 = arith.constant 0 : i32
    %c0_i32_1 = arith.constant 0 : i32
    return %c0_i32, %c0_i32_0, %arg0 : i32, i32, i32
  }
  func.func @transform_1(%arg0: i32, %arg1: memref<7xf32, #tpu.memory_space<smem>>, %arg2: memref<7xf32, #tpu.memory_space<smem>>, %arg3: memref<7xf32, #tpu.memory_space<smem>>) -> (i32, i32, i32) {
    %c0_i32 = arith.constant 0 : i32
    %c0_i32_0 = arith.constant 0 : i32
    %c0_i32_1 = arith.constant 0 : i32
    return %c0_i32, %c0_i32_0, %arg0 : i32, i32, i32
  }
  func.func @transform_2(%arg0: i32, %arg1: memref<7xf32, #tpu.memory_space<smem>>, %arg2: memref<7xf32, #tpu.memory_space<smem>>, %arg3: memref<7xf32, #tpu.memory_space<smem>>) -> (i32, i32, i32) {
    %c0_i32 = arith.constant 0 : i32
    %c0_i32_0 = arith.constant 0 : i32
    %c0_i32_1 = arith.constant 0 : i32
    return %c0_i32, %c0_i32_0, %arg0 : i32, i32, i32
  }
}

</mosaic_0001>

<llo_original>
// kernel: tpu_custom_call.1
$region0: #{tpu_custom_call.1}
  #allocation0 [shape = 'u32[]', space=smem, size = 0x4, offset = 0x4, fixed_abs, tag = 'smem constant byte address 0x4 - core index']
  #allocation1 [shape = 'u32[144,128]{1,0:T(1,128)}', space=vmem, size = 0x12000, scoped, tag = 'internal scratch']
  #allocation2 [shape = 's32[1]{0}', space=sflag, size = 0x4, scoped, tag = 'scoped memory for tpu_custom_call.1']
  #allocation3 [shape = 'u8[512]{0}', space=smem, size = 0x200, scoped, tag = 'prefetched SMEM operand 0']
  #allocation4 [shape = 'u8[512]{0}', space=smem, size = 0x200, scoped, tag = 'prefetched SMEM operand 1']
  #allocation5 [shape = 'u8[512]{0}', space=smem, size = 0x200, scoped, tag = 'prefetched SMEM operand 2']
  %s0 = inlined_call_operand.hbm [shape: f32[7], index: 0, kind: input, shape index: {}]
  %s1 = inlined_call_operand.vmem [shape: f32[7], index: 1, kind: input, shape index: {}]
  %s2 = inlined_call_operand.vmem [shape: f32[7], index: 2, kind: input, shape index: {}]
  %s3 = inlined_call_operand.hbm [shape: f32[3,8,128], index: 3, kind: input, shape index: {}]
  %s4 = inlined_call_operand.hbm [shape: f32[8,8,128], index: 4, kind: output, shape index: {0}]
  %s5 = inlined_call_operand.hbm [shape: f32[8,8,128], index: 5, kind: output, shape index: {1}]
  %6 = xla_tuple %s4, %s5
  %s7 = sld [smem:[#allocation0]]
  $region26: #{tpu_custom_call.1} parent=0
    _
  %s9 = ssub.s32 1, %s7
  %s10 = scalar_select 0, %s9, %s7
  %12 = dma.hbm_to_smem %s0, 16, [#allocation3], [#allocation2]
  %s13 = sshll.u32 %s1, 4
  %s14 = int_to_ptr.vmem [resolvable:$true] %s13
  %16 = dma.vmem_to_smem %s14, 16, [#allocation4], [#allocation2]
  %s17 = sshll.u32 %s2, 4
  %s18 = int_to_ptr.vmem [resolvable:$true] %s17
  %20 = dma.vmem_to_smem %s18, 16, [#allocation5], [#allocation2]
  %21 = dma.done [#allocation2], 48
  %22 = sfence
  $region1: #{tpu_custom_call.1} parent=0
    #allocation6 [shape = 'u8[12288]{0}', space=vmem, size = 0x3000, scoped, tag = 'input window, operand 3, single buffered']
    #allocation7 [shape = 's32[1]{0}', space=sflag, size = 0x4, scoped, tag = 'scoped memory for tpu_custom_call.1']
    #allocation8 [shape = 's32[1]{0}', space=sflag, size = 0x4, scoped, tag = 'scoped memory for tpu_custom_call.1']
    #allocation9 [shape = 'u8[32768]{0}', space=vmem, size = 0x8000, scoped, tag = 'output window, operand 0, single buffered']
    #allocation10 [shape = 'u8[32768]{0}', space=vmem, size = 0x8000, scoped, tag = 'output window, operand 1, single buffered']
    #allocation11 [shape = 's32[1]{0}', space=sflag, size = 0x4, scoped, tag = 'scoped memory for tpu_custom_call.1']
    %23 = vsyncpa [#allocation7], 0
    %24 = vsyncpa [#allocation8], 0
    %25 = vsyncpa [#allocation11], 0
    // Predicated region
    $region2: #{tpu_custom_call.1} parent=1 // pred_check
      _
    $region3: #{tpu_custom_call.1} parent=1 // pred_check_branch
      %27 = sbr.rel (0) target = $region5
    $region4: #{tpu_custom_call.1} parent=1 // pred_region
      %s29 = ssub.s32 384, 384
      %30 = vsyncadd [#allocation7], %s29
      %s31 = sshll.u32 [#allocation6], 4
      %s32 = int_to_ptr.vmem [resolvable:$true] %s31
      %37 = dma.hbm_to_vmem [thread:$0]  %s3, 384, %s32, [#allocation7], 128, 128, 8
    $region5: #{tpu_custom_call.1} parent=1 // pred_fallthru
      _
    // Predicated region
    $region6: #{tpu_custom_call.1} parent=1 // pred_check
      _
    $region7: #{tpu_custom_call.1} parent=1 // pred_check_branch
      %39 = sbr.rel (0) target = $region9
    $region8: #{tpu_custom_call.1} parent=1 // pred_region
      %40 = dma.done [#allocation7], 384
    $region9: #{tpu_custom_call.1} parent=1 // pred_fallthru
      _
    %v41 = vld [vmem:[#allocation6] sm:$0xff]
    %s42 = scalar_lea.vmem [#allocation6], 8
    %v43 = vld [vmem:[%s42] sm:$0xff]
    %s44 = scalar_lea.vmem [#allocation6], 16
    %v45 = vld [vmem:[%s44] sm:$0xff]
    %46 = vst [vmem:[#allocation9] sm:$0xff] %v41
    %47 = vst [vmem:[#allocation10] sm:$0xff] %v43
    %s48 = sld [smem:[#allocation3]]
    %s49 = sld [smem:[#allocation4]]
    %s50 = sld [smem:[#allocation5]]
    %v51 = vand.u32 2147483647, %v41
    %vm52 = vcmp.le.f32.partialorder %v51, 0.7853982
    %vm53 = vcmp.lt.s32.totalorder %v41, 0
    %v54 = vand.u32 %v41, 2139095040
    %v55 = vshrl.u32 %v54, 23
    %v56 = vsub.s32 %v55, 127
    %v57 = vand.u32 2147483647, %v41
    %v58 = vand.u32 %v57, 8388607
    %v59 = vor.u32 %v58, 8388608
    %v60 = vsub.s32 0, %v59
    %v61 = vadd.s32 %v56, 1
    %vm62 = vcmp.gt.s32.totalorder %v61, 0
    %v63 = vsel %vm62, %v61, 0
    %v64 = vshrl.u32 %v63, 5
    %v65 = vand.u32 %v63, 31
    %v66 = vsub.s32 32, %v65
    %v67 = vshrl.u32 683565275, %v66
    %v68 = vshll.u32 683565275, %v65
    %v69 = vshrl.u32 2475754826, %v66
    %v70 = vor.u32 %v68, %v69
    %v71 = vshll.u32 2475754826, %v65
    %v72 = vshrl.u32 2131351028, %v66
    %v73 = vor.u32 %v71, %v72
    %v74 = vshll.u32 2131351028, %v65
    %v75 = vshrl.u32 2102212464, %v66
    %v76 = vor.u32 %v74, %v75
    %v77 = vshll.u32 2102212464, %v65
    %v78 = vshrl.u32 920167782, %v66
    %v79 = vor.u32 %v77, %v78
    %v80 = vshll.u32 920167782, %v65
    %v81 = vshrl.u32 1326507024, %v66
    %v82 = vor.u32 %v80, %v81
    %vm83 = vcmp.lt.s32.totalorder %v64, 1
    %vm84 = vcmp.lt.s32.totalorder %v64, 2
    %vm85 = vcmp.lt.s32.totalorder %v64, 3
    %vm86 = vcmp.lt.s32.totalorder %v64, 4
    %v87 = vsel %vm83, %v67, %v70
    %v88 = vsel %vm86, %v76, 2102212464
    %v89 = vsel %vm85, %v73, %v88
    %v90 = vsel %vm84, %v87, %v89
    %v91 = vsel %vm83, %v70, %v73
    %v92 = vsel %vm86, %v79, 920167782
    %v93 = vsel %vm85, %v76, %v92
    %v94 = vsel %vm84, %v91, %v93
    %v95 = vsel %vm83, %v73, %v76
    %v96 = vsel %vm86, %v82, 1326507024
    %v97 = vsel %vm85, %v79, %v96
    %v98 = vsel %vm84, %v95, %v97
    %v99 = vshll.u32 %v59, 8
    %v100 = vmul.u32.u64.compose %v99, %v98
    %v101 = vextract.low.u32 %v100
    %v102 = vextract.high.u32 %v100
    %v103 = vmul.u32.u64.compose %v99, %v94
    %v104 = vextract.low.u32 %v103
    %v105 = vextract.high.u32 %v103
    %v106 = vmul.u32 %v99, %v90
    %v107 = vadd.s32 %v102, %v104
    %vm108 = vc.u32 %v102, %v104
    %v109 = vadd.s32 %v105, 1
    %v110 = vsel %vm108, %v109, %v105
    %v111 = vadd.s32 %v106, %v110
    %v112 = vadd.s32 %v111, 536870912
    %v113 = vshrl.u32 %v112, 30
    %v114 = vshll.u32 %v113, 30
    %v115 = vsub.s32 %v111, %v114
    %vm116 = vcmp.lt.s32.totalorder %v115, 0
    %v117 = vsub.s32 0, %v115
    %v118 = vsel %vm116, %v117, %v115
    %v119 = vclz %v118
    %v120 = vsub.s32 %v119, 2
    %vm121 = vcmp.gt.s32.totalorder 0, %v120
    %v122 = vsel %vm121, 0, %v120
    %v123 = vsub.s32 32, %v122
    %v124 = vshll.u32 %v115, %v122
    %v125 = vshrl.u32 %v107, %v123
    %v126 = vor.u32 %v124, %v125
    %v127 = vsub.s32 4294967266, %v122
    %v128 = vadd.s32 %v127, 127
    %v129 = vshll.u32 %v128, 23
    %v130 = vor.u32 4788187, %v129
    %v131 = vand.u32 2147483647, %v130
    %v133 = vcvt.s32.f32 %v126
    %v134 = vmul.f32 %v133, %v131
    %v135 = vxor.u32 %v134, 2147483648
    %v136 = vsel %vm53, %v135, %v134
    %v137 = vsub.s32 4, %v113
    %v138 = vsel %vm53, %v137, %v113
    %v139 = vsel %vm52, %v41, %v136
    %v140 = vsel %vm52, 0, %v138
    %v141 = vcosq.f32.pop %v139
    %v142 = vsinq.f32.pop %v139
    %vm143 = vweird.f32 %v41
    %v144 = vadd.s32 %v140, 3
    %v145 = vand.u32 %v144, 3
    %vm146 = vcmp.lt.s32.totalorder %v145, 2
    %vm147 = vcmp.eq.s32.totalorder %v145, 0
    %v148 = vxor.u32 %v142, 2147483648
    %v149 = vsel %vm147, %v141, %v148
    %vm150 = vcmp.eq.s32.totalorder %v145, 2
    %v151 = vxor.u32 %v141, 2147483648
    %v152 = vsel %vm150, %v151, %v142
    %v153 = vsel %vm146, %v149, %v152
    %v154 = vsel %vm143, nan, %v153
    %v155 = vmul.f32 %v45, %v154
    %v156 = vstv %s49
    %v157 = vmul.f32 %v156, %v43
    %v158 = vadd.f32 %v41, %v157
    %v159 = vmul.f32 %v156, %v155
    %v160 = vadd.f32 %v43, %v159
    %v161 = vand.u32 2147483647, %v158
    %vm162 = vcmp.le.f32.partialorder %v161, 0.7853982
    %vm163 = vcmp.lt.s32.totalorder %v158, 0
    %v164 = vand.u32 %v158, 2139095040
    %v165 = vshrl.u32 %v164, 23
    %v166 = vsub.s32 %v165, 127
    %v167 = vand.u32 2147483647, %v158
    %v168 = vand.u32 %v167, 8388607
    %v169 = vor.u32 %v168, 8388608
    %v170 = vsub.s32 0, %v169
    %v171 = vadd.s32 %v166, 1
    %vm172 = vcmp.gt.s32.totalorder %v171, 0
    %v173 = vsel %vm172, %v171, 0
    %v174 = vshrl.u32 %v173, 5
    %v175 = vand.u32 %v173, 31
    %v176 = vsub.s32 32, %v175
    %v177 = vshrl.u32 683565275, %v176
    %v178 = vshll.u32 683565275, %v175
    %v179 = vshrl.u32 2475754826, %v176
    %v180 = vor.u32 %v178, %v179
    %v181 = vshll.u32 2475754826, %v175
    %v182 = vshrl.u32 2131351028, %v176
    %v183 = vor.u32 %v181, %v182
    %v184 = vshll.u32 2131351028, %v175
    %v185 = vshrl.u32 2102212464, %v176
    %v186 = vor.u32 %v184, %v185
    %v187 = vshll.u32 2102212464, %v175
    %v188 = vshrl.u32 920167782, %v176
    %v189 = vor.u32 %v187, %v188
    %v190 = vshll.u32 920167782, %v175
    %v191 = vshrl.u32 1326507024, %v176
    %v192 = vor.u32 %v190, %v191
    %vm193 = vcmp.lt.s32.totalorder %v174, 1
    %vm194 = vcmp.lt.s32.totalorder %v174, 2
    %vm195 = vcmp.lt.s32.totalorder %v174, 3
    %vm196 = vcmp.lt.s32.totalorder %v174, 4
    %v197 = vsel %vm193, %v177, %v180
    %v198 = vsel %vm196, %v186, 2102212464
    %v199 = vsel %vm195, %v183, %v198
    %v200 = vsel %vm194, %v197, %v199
    %v201 = vsel %vm193, %v180, %v183
    %v202 = vsel %vm196, %v189, 920167782
    %v203 = vsel %vm195, %v186, %v202
    %v204 = vsel %vm194, %v201, %v203
    %v205 = vsel %vm193, %v183, %v186
    %v206 = vsel %vm196, %v192, 1326507024
    %v207 = vsel %vm195, %v189, %v206
    %v208 = vsel %vm194, %v205, %v207
    %v209 = vshll.u32 %v169, 8
    %v210 = vmul.u32.u64.compose %v209, %v208
    %v211 = vextract.low.u32 %v210
    %v212 = vextract.high.u32 %v210
    %v213 = vmul.u32.u64.compose %v209, %v204
    %v214 = vextract.low.u32 %v213
    %v215 = vextract.high.u32 %v213
    %v216 = vmul.u32 %v209, %v200
    %v217 = vadd.s32 %v212, %v214
    %vm218 = vc.u32 %v212, %v214
    %v219 = vadd.s32 %v215, 1
    %v220 = vsel %vm218, %v219, %v215
    %v221 = vadd.s32 %v216, %v220
    %v222 = vadd.s32 %v221, 536870912
    %v223 = vshrl.u32 %v222, 30
    %v224 = vshll.u32 %v223, 30
    %v225 = vsub.s32 %v221, %v224
    %vm226 = vcmp.lt.s32.totalorder %v225, 0
    %v227 = vsub.s32 0, %v225
    %v228 = vsel %vm226, %v227, %v225
    %v229 = vclz %v228
    %v230 = vsub.s32 %v229, 2
    %vm231 = vcmp.gt.s32.totalorder 0, %v230
    %v232 = vsel %vm231, 0, %v230
    %v233 = vsub.s32 32, %v232
    %v234 = vshll.u32 %v225, %v232
    %v235 = vshrl.u32 %v217, %v233
    %v236 = vor.u32 %v234, %v235
    %v237 = vsub.s32 4294967266, %v232
    %v238 = vadd.s32 %v237, 127
    %v239 = vshll.u32 %v238, 23
    %v240 = vor.u32 4788187, %v239
    %v241 = vand.u32 2147483647, %v240
    %v243 = vcvt.s32.f32 %v236
    %v244 = vmul.f32 %v243, %v241
    %v245 = vxor.u32 %v244, 2147483648
    %v246 = vsel %vm163, %v245, %v244
    %v247 = vsub.s32 4, %v223
    %v248 = vsel %vm163, %v247, %v223
    %v249 = vsel %vm162, %v158, %v246
    %v250 = vsel %vm162, 0, %v248
    %v251 = vcosq.f32.pop %v249
    %v252 = vsinq.f32.pop %v249
    %vm253 = vweird.f32 %v158
    %v254 = vadd.s32 %v250, 3
    %v255 = vand.u32 %v254, 3
    %vm256 = vcmp.lt.s32.totalorder %v255, 2
    %vm257 = vcmp.eq.s32.totalorder %v255, 0
    %v258 = vxor.u32 %v252, 2147483648
    %v259 = vsel %vm257, %v251, %v258
    %vm260 = vcmp.eq.s32.totalorder %v255, 2
    %v261 = vxor.u32 %v251, 2147483648
    %v262 = vsel %vm260, %v261, %v252
    %v263 = vsel %vm256, %v259, %v262
    %v264 = vsel %vm253, nan, %v263
    %v265 = vmul.f32 %v45, %v264
    %v266 = vstv %s48
    %v267 = vmul.f32 %v266, %v160
    %v268 = vadd.f32 %v41, %v267
    %v269 = vsub.f32 %v268, %v157
    %v270 = vmul.f32 %v266, %v265
    %v271 = vadd.f32 %v43, %v270
    %v272 = vsub.f32 %v271, %v159
    %v273 = vand.u32 2147483647, %v269
    %vm274 = vcmp.le.f32.partialorder %v273, 0.7853982
    %vm275 = vcmp.lt.s32.totalorder %v269, 0
    %v276 = vand.u32 %v269, 2139095040
    %v277 = vshrl.u32 %v276, 23
    %v278 = vsub.s32 %v277, 127
    %v279 = vand.u32 2147483647, %v269
    %v280 = vand.u32 %v279, 8388607
    %v281 = vor.u32 %v280, 8388608
    %v282 = vsub.s32 0, %v281
    %v283 = vadd.s32 %v278, 1
    %vm284 = vcmp.gt.s32.totalorder %v283, 0
    %v285 = vsel %vm284, %v283, 0
    %v286 = vshrl.u32 %v285, 5
    %v287 = vand.u32 %v285, 31
    %v288 = vsub.s32 32, %v287
    %v289 = vshrl.u32 683565275, %v288
    %v290 = vshll.u32 683565275, %v287
    %v291 = vshrl.u32 2475754826, %v288
    %v292 = vor.u32 %v290, %v291
    %v293 = vshll.u32 2475754826, %v287
    %v294 = vshrl.u32 2131351028, %v288
    %v295 = vor.u32 %v293, %v294
    %v296 = vshll.u32 2131351028, %v287
    %v297 = vshrl.u32 2102212464, %v288
    %v298 = vor.u32 %v296, %v297
    %v299 = vshll.u32 2102212464, %v287
    %v300 = vshrl.u32 920167782, %v288
    %v301 = vor.u32 %v299, %v300
    %v302 = vshll.u32 920167782, %v287
    %v303 = vshrl.u32 1326507024, %v288
    %v304 = vor.u32 %v302, %v303
    %vm305 = vcmp.lt.s32.totalorder %v286, 1
    %vm306 = vcmp.lt.s32.totalorder %v286, 2
    %vm307 = vcmp.lt.s32.totalorder %v286, 3
    %vm308 = vcmp.lt.s32.totalorder %v286, 4
    %v309 = vsel %vm305, %v289, %v292
    %v310 = vsel %vm308, %v298, 2102212464
    %v311 = vsel %vm307, %v295, %v310
    %v312 = vsel %vm306, %v309, %v311
    %v313 = vsel %vm305, %v292, %v295
    %v314 = vsel %vm308, %v301, 920167782
    %v315 = vsel %vm307, %v298, %v314
    %v316 = vsel %vm306, %v313, %v315
    %v317 = vsel %vm305, %v295, %v298
    %v318 = vsel %vm308, %v304, 1326507024
    %v319 = vsel %vm307, %v301, %v318
    %v320 = vsel %vm306, %v317, %v319
    %v321 = vshll.u32 %v281, 8
    %v322 = vmul.u32.u64.compose %v321, %v320
    %v323 = vextract.low.u32 %v322
    %v324 = vextract.high.u32 %v322
    %v325 = vmul.u32.u64.compose %v321, %v316
    %v326 = vextract.low.u32 %v325
    %v327 = vextract.high.u32 %v325
    %v328 = vmul.u32 %v321, %v312
    %v329 = vadd.s32 %v324, %v326
    %vm330 = vc.u32 %v324, %v326
    %v331 = vadd.s32 %v327, 1
    %v332 = vsel %vm330, %v331, %v327
    %v333 = vadd.s32 %v328, %v332
    %v334 = vadd.s32 %v333, 536870912
    %v335 = vshrl.u32 %v334, 30
    %v336 = vshll.u32 %v335, 30
    %v337 = vsub.s32 %v333, %v336
    %vm338 = vcmp.lt.s32.totalorder %v337, 0
    %v339 = vsub.s32 0, %v337
    %v340 = vsel %vm338, %v339, %v337
    %v341 = vclz %v340
    %v342 = vsub.s32 %v341, 2
    %vm343 = vcmp.gt.s32.totalorder 0, %v342
    %v344 = vsel %vm343, 0, %v342
    %v345 = vsub.s32 32, %v344
    %v346 = vshll.u32 %v337, %v344
    %v347 = vshrl.u32 %v329, %v345
    %v348 = vor.u32 %v346, %v347
    %v349 = vsub.s32 4294967266, %v344
    %v350 = vadd.s32 %v349, 127
    %v351 = vshll.u32 %v350, 23
    %v352 = vor.u32 4788187, %v351
    %v353 = vand.u32 2147483647, %v352
    %v355 = vcvt.s32.f32 %v348
    %v356 = vmul.f32 %v355, %v353
    %v357 = vxor.u32 %v356, 2147483648
    %v358 = vsel %vm275, %v357, %v356
    %v359 = vsub.s32 4, %v335
    %v360 = vsel %vm275, %v359, %v335
    %v361 = vsel %vm274, %v269, %v358
    %v362 = vsel %vm274, 0, %v360
    %v363 = vcosq.f32.pop %v361
    %v364 = vsinq.f32.pop %v361
    %vm365 = vweird.f32 %v269
    %v366 = vadd.s32 %v362, 3
    %v367 = vand.u32 %v366, 3
    %vm368 = vcmp.lt.s32.totalorder %v367, 2
    %vm369 = vcmp.eq.s32.totalorder %v367, 0
    %v370 = vxor.u32 %v364, 2147483648
    %v371 = vsel %vm369, %v363, %v370
    %vm372 = vcmp.eq.s32.totalorder %v367, 2
    %v373 = vxor.u32 %v363, 2147483648
    %v374 = vsel %vm372, %v373, %v364
    %v375 = vsel %vm368, %v371, %v374
    %v376 = vsel %vm365, nan, %v375
    %v377 = vmul.f32 %v45, %v376
    %v378 = vsub.f32 %v43, %v160
    %v379 = vadd.f32 %v378, %v272
    %v380 = vmul.f32 %v266, %v379
    %v381 = vadd.f32 %v41, %v380
    %v382 = vsub.f32 %v155, %v265
    %v383 = vadd.f32 %v382, %v377
    %v384 = vmul.f32 %v266, %v383
    %v385 = vadd.f32 %v43, %v384
    %v386 = vand.u32 2147483647, %v381
    %vm387 = vcmp.le.f32.partialorder %v386, 0.7853982
    %vm388 = vcmp.lt.s32.totalorder %v381, 0
    %v389 = vand.u32 %v381, 2139095040
    %v390 = vshrl.u32 %v389, 23
    %v391 = vsub.s32 %v390, 127
    %v392 = vand.u32 2147483647, %v381
    %v393 = vand.u32 %v392, 8388607
    %v394 = vor.u32 %v393, 8388608
    %v395 = vsub.s32 0, %v394
    %v396 = vadd.s32 %v391, 1
    %vm397 = vcmp.gt.s32.totalorder %v396, 0
    %v398 = vsel %vm397, %v396, 0
    %v399 = vshrl.u32 %v398, 5
    %v400 = vand.u32 %v398, 31
    %v401 = vsub.s32 32, %v400
    %v402 = vshrl.u32 683565275, %v401
    %v403 = vshll.u32 683565275, %v400
    %v404 = vshrl.u32 2475754826, %v401
    %v405 = vor.u32 %v403, %v404
    %v406 = vshll.u32 2475754826, %v400
    %v407 = vshrl.u32 2131351028, %v401
    %v408 = vor.u32 %v406, %v407
    %v409 = vshll.u32 2131351028, %v400
    %v410 = vshrl.u32 2102212464, %v401
    %v411 = vor.u32 %v409, %v410
    %v412 = vshll.u32 2102212464, %v400
    %v413 = vshrl.u32 920167782, %v401
    %v414 = vor.u32 %v412, %v413
    %v415 = vshll.u32 920167782, %v400
    %v416 = vshrl.u32 1326507024, %v401
    %v417 = vor.u32 %v415, %v416
    %vm418 = vcmp.lt.s32.totalorder %v399, 1
    %vm419 = vcmp.lt.s32.totalorder %v399, 2
    %vm420 = vcmp.lt.s32.totalorder %v399, 3
    %vm421 = vcmp.lt.s32.totalorder %v399, 4
    %v422 = vsel %vm418, %v402, %v405
    %v423 = vsel %vm421, %v411, 2102212464
    %v424 = vsel %vm420, %v408, %v423
    %v425 = vsel %vm419, %v422, %v424
    %v426 = vsel %vm418, %v405, %v408
    %v427 = vsel %vm421, %v414, 920167782
    %v428 = vsel %vm420, %v411, %v427
    %v429 = vsel %vm419, %v426, %v428
    %v430 = vsel %vm418, %v408, %v411
    %v431 = vsel %vm421, %v417, 1326507024
    %v432 = vsel %vm420, %v414, %v431
    %v433 = vsel %vm419, %v430, %v432
    %v434 = vshll.u32 %v394, 8
    %v435 = vmul.u32.u64.compose %v434, %v433
    %v436 = vextract.low.u32 %v435
    %v437 = vextract.high.u32 %v435
    %v438 = vmul.u32.u64.compose %v434, %v429
    %v439 = vextract.low.u32 %v438
    %v440 = vextract.high.u32 %v438
    %v441 = vmul.u32 %v434, %v425
    %v442 = vadd.s32 %v437, %v439
    %vm443 = vc.u32 %v437, %v439
    %v444 = vadd.s32 %v440, 1
    %v445 = vsel %vm443, %v444, %v440
    %v446 = vadd.s32 %v441, %v445
    %v447 = vadd.s32 %v446, 536870912
    %v448 = vshrl.u32 %v447, 30
    %v449 = vshll.u32 %v448, 30
    %v450 = vsub.s32 %v446, %v449
    %vm451 = vcmp.lt.s32.totalorder %v450, 0
    %v452 = vsub.s32 0, %v450
    %v453 = vsel %vm451, %v452, %v450
    %v454 = vclz %v453
    %v455 = vsub.s32 %v454, 2
    %vm456 = vcmp.gt.s32.totalorder 0, %v455
    %v457 = vsel %vm456, 0, %v455
    %v458 = vsub.s32 32, %v457
    %v459 = vshll.u32 %v450, %v457
    %v460 = vshrl.u32 %v442, %v458
    %v461 = vor.u32 %v459, %v460
    %v462 = vsub.s32 4294967266, %v457
    %v463 = vadd.s32 %v462, 127
    %v464 = vshll.u32 %v463, 23
    %v465 = vor.u32 4788187, %v464
    %v466 = vand.u32 2147483647, %v465
    %v468 = vcvt.s32.f32 %v461
    %v469 = vmul.f32 %v468, %v466
    %v470 = vxor.u32 %v469, 2147483648
    %v471 = vsel %vm388, %v470, %v469
    %v472 = vsub.s32 4, %v448
    %v473 = vsel %vm388, %v472, %v448
    %v474 = vsel %vm387, %v381, %v471
    %v475 = vsel %vm387, 0, %v473
    %v476 = vcosq.f32.pop %v474
    %v477 = vsinq.f32.pop %v474
    %vm478 = vweird.f32 %v381
    %v479 = vadd.s32 %v475, 3
    %v480 = vand.u32 %v479, 3
    %vm481 = vcmp.lt.s32.totalorder %v480, 2
    %vm482 = vcmp.eq.s32.totalorder %v480, 0
    %v483 = vxor.u32 %v477, 2147483648
    %v484 = vsel %vm482, %v476, %v483
    %vm485 = vcmp.eq.s32.totalorder %v480, 2
    %v486 = vxor.u32 %v476, 2147483648
    %v487 = vsel %vm485, %v486, %v477
    %v488 = vsel %vm481, %v484, %v487
    %v489 = vsel %vm478, nan, %v488
    %v490 = vmul.f32 %v45, %v489
    %v491 = vadd.f32 %v160, %v272
    %v492 = vmul.f32 %v491, 3.0
    %v493 = vadd.f32 %v43, %v492
    %v494 = vadd.f32 %v493, %v385
    %v495 = vstv %s50
    %v496 = vmul.f32 %v495, %v494
    %v497 = vadd.f32 %v41, %v496
    %v498 = vadd.f32 %v265, %v377
    %v499 = vmul.f32 %v498, 3.0
    %v500 = vadd.f32 %v155, %v499
    %v501 = vadd.f32 %v500, %v490
    %v502 = vmul.f32 %v495, %v501
    %v503 = vadd.f32 %v43, %v502
    %s504 = scalar_lea.vmem [#allocation9], 8
    %505 = vst [vmem:[%s504] sm:$0xff] %v497
    %s506 = scalar_lea.vmem [#allocation10], 8
    %507 = vst [vmem:[%s506] sm:$0xff] %v503
    %s508 = sld [smem:[#allocation3 + $0x1]]
    %s509 = sld [smem:[#allocation4 + $0x1]]
    %s510 = sld [smem:[#allocation5 + $0x1]]
    %v511 = vand.u32 2147483647, %v497
    %vm512 = vcmp.le.f32.partialorder %v511, 0.7853982
    %vm513 = vcmp.lt.s32.totalorder %v497, 0
    %v514 = vand.u32 %v497, 2139095040
    %v515 = vshrl.u32 %v514, 23
    %v516 = vsub.s32 %v515, 127
    %v517 = vand.u32 2147483647, %v497
    %v518 = vand.u32 %v517, 8388607
    %v519 = vor.u32 %v518, 8388608
    %v520 = vsub.s32 0, %v519
    %v521 = vadd.s32 %v516, 1
    %vm522 = vcmp.gt.s32.totalorder %v521, 0
    %v523 = vsel %vm522, %v521, 0
    %v524 = vshrl.u32 %v523, 5
    %v525 = vand.u32 %v523, 31
    %v526 = vsub.s32 32, %v525
    %v527 = vshrl.u32 683565275, %v526
    %v528 = vshll.u32 683565275, %v525
    %v529 = vshrl.u32 2475754826, %v526
    %v530 = vor.u32 %v528, %v529
    %v531 = vshll.u32 2475754826, %v525
    %v532 = vshrl.u32 2131351028, %v526
    %v533 = vor.u32 %v531, %v532
    %v534 = vshll.u32 2131351028, %v525
    %v535 = vshrl.u32 2102212464, %v526
    %v536 = vor.u32 %v534, %v535
    %v537 = vshll.u32 2102212464, %v525
    %v538 = vshrl.u32 920167782, %v526
    %v539 = vor.u32 %v537, %v538
    %v540 = vshll.u32 920167782, %v525
    %v541 = vshrl.u32 1326507024, %v526
    %v542 = vor.u32 %v540, %v541
    %vm543 = vcmp.lt.s32.totalorder %v524, 1
    %vm544 = vcmp.lt.s32.totalorder %v524, 2
    %vm545 = vcmp.lt.s32.totalorder %v524, 3
    %vm546 = vcmp.lt.s32.totalorder %v524, 4
    %v547 = vsel %vm543, %v527, %v530
    %v548 = vsel %vm546, %v536, 2102212464
    %v549 = vsel %vm545, %v533, %v548
    %v550 = vsel %vm544, %v547, %v549
    %v551 = vsel %vm543, %v530, %v533
    %v552 = vsel %vm546, %v539, 920167782
    %v553 = vsel %vm545, %v536, %v552
    %v554 = vsel %vm544, %v551, %v553
    %v555 = vsel %vm543, %v533, %v536
    %v556 = vsel %vm546, %v542, 1326507024
    %v557 = vsel %vm545, %v539, %v556
    %v558 = vsel %vm544, %v555, %v557
    %v559 = vshll.u32 %v519, 8
    %v560 = vmul.u32.u64.compose %v559, %v558
    %v561 = vextract.low.u32 %v560
    %v562 = vextract.high.u32 %v560
    %v563 = vmul.u32.u64.compose %v559, %v554
    %v564 = vextract.low.u32 %v563
    %v565 = vextract.high.u32 %v563
    %v566 = vmul.u32 %v559, %v550
    %v567 = vadd.s32 %v562, %v564
    %vm568 = vc.u32 %v562, %v564
    %v569 = vadd.s32 %v565, 1
    %v570 = vsel %vm568, %v569, %v565
    %v571 = vadd.s32 %v566, %v570
    %v572 = vadd.s32 %v571, 536870912
    %v573 = vshrl.u32 %v572, 30
    %v574 = vshll.u32 %v573, 30
    %v575 = vsub.s32 %v571, %v574
    %vm576 = vcmp.lt.s32.totalorder %v575, 0
    %v577 = vsub.s32 0, %v575
    %v578 = vsel %vm576, %v577, %v575
    %v579 = vclz %v578
    %v580 = vsub.s32 %v579, 2
    %vm581 = vcmp.gt.s32.totalorder 0, %v580
    %v582 = vsel %vm581, 0, %v580
    %v583 = vsub.s32 32, %v582
    %v584 = vshll.u32 %v575, %v582
    %v585 = vshrl.u32 %v567, %v583
    %v586 = vor.u32 %v584, %v585
    %v587 = vsub.s32 4294967266, %v582
    %v588 = vadd.s32 %v587, 127
    %v589 = vshll.u32 %v588, 23
    %v590 = vor.u32 4788187, %v589
    %v591 = vand.u32 2147483647, %v590
    %v593 = vcvt.s32.f32 %v586
    %v594 = vmul.f32 %v593, %v591
    %v595 = vxor.u32 %v594, 2147483648
    %v596 = vsel %vm513, %v595, %v594
    %v597 = vsub.s32 4, %v573
    %v598 = vsel %vm513, %v597, %v573
    %v599 = vsel %vm512, %v497, %v596
    %v600 = vsel %vm512, 0, %v598
    %v601 = vcosq.f32.pop %v599
    %v602 = vsinq.f32.pop %v599
    %vm603 = vweird.f32 %v497
    %v604 = vadd.s32 %v600, 3
    %v605 = vand.u32 %v604, 3
    %vm606 = vcmp.lt.s32.totalorder %v605, 2
    %vm607 = vcmp.eq.s32.totalorder %v605, 0
    %v608 = vxor.u32 %v602, 2147483648
    %v609 = vsel %vm607, %v601, %v608
    %vm610 = vcmp.eq.s32.totalorder %v605, 2
    %v611 = vxor.u32 %v601, 2147483648
    %v612 = vsel %vm610, %v611, %v602
    %v613 = vsel %vm606, %v609, %v612
    %v614 = vsel %vm603, nan, %v613
    %v615 = vmul.f32 %v45, %v614
    %v616 = vstv %s509
    %v617 = vmul.f32 %v616, %v503
    %v618 = vadd.f32 %v497, %v617
    %v619 = vmul.f32 %v616, %v615
    %v620 = vadd.f32 %v503, %v619
    %v621 = vand.u32 2147483647, %v618
    %vm622 = vcmp.le.f32.partialorder %v621, 0.7853982
    %vm623 = vcmp.lt.s32.totalorder %v618, 0
    %v624 = vand.u32 %v618, 2139095040
    %v625 = vshrl.u32 %v624, 23
    %v626 = vsub.s32 %v625, 127
    %v627 = vand.u32 2147483647, %v618
    %v628 = vand.u32 %v627, 8388607
    %v629 = vor.u32 %v628, 8388608
    %v630 = vsub.s32 0, %v629
    %v631 = vadd.s32 %v626, 1
    %vm632 = vcmp.gt.s32.totalorder %v631, 0
    %v633 = vsel %vm632, %v631, 0
    %v634 = vshrl.u32 %v633, 5
    %v635 = vand.u32 %v633, 31
    %v636 = vsub.s32 32, %v635
    %v637 = vshrl.u32 683565275, %v636
    %v638 = vshll.u32 683565275, %v635
    %v639 = vshrl.u32 2475754826, %v636
    %v640 = vor.u32 %v638, %v639
    %v641 = vshll.u32 2475754826, %v635
    %v642 = vshrl.u32 2131351028, %v636
    %v643 = vor.u32 %v641, %v642
    %v644 = vshll.u32 2131351028, %v635
    %v645 = vshrl.u32 2102212464, %v636
    %v646 = vor.u32 %v644, %v645
    %v647 = vshll.u32 2102212464, %v635
    %v648 = vshrl.u32 920167782, %v636
    %v649 = vor.u32 %v647, %v648
    %v650 = vshll.u32 920167782, %v635
    %v651 = vshrl.u32 1326507024, %v636
    %v652 = vor.u32 %v650, %v651
    %vm653 = vcmp.lt.s32.totalorder %v634, 1
    %vm654 = vcmp.lt.s32.totalorder %v634, 2
    %vm655 = vcmp.lt.s32.totalorder %v634, 3
    %vm656 = vcmp.lt.s32.totalorder %v634, 4
    %v657 = vsel %vm653, %v637, %v640
    %v658 = vsel %vm656, %v646, 2102212464
    %v659 = vsel %vm655, %v643, %v658
    %v660 = vsel %vm654, %v657, %v659
    %v661 = vsel %vm653, %v640, %v643
    %v662 = vsel %vm656, %v649, 920167782
    %v663 = vsel %vm655, %v646, %v662
    %v664 = vsel %vm654, %v661, %v663
    %v665 = vsel %vm653, %v643, %v646
    %v666 = vsel %vm656, %v652, 1326507024
    %v667 = vsel %vm655, %v649, %v666
    %v668 = vsel %vm654, %v665, %v667
    %v669 = vshll.u32 %v629, 8
    %v670 = vmul.u32.u64.compose %v669, %v668
    %v671 = vextract.low.u32 %v670
    %v672 = vextract.high.u32 %v670
    %v673 = vmul.u32.u64.compose %v669, %v664
    %v674 = vextract.low.u32 %v673
    %v675 = vextract.high.u32 %v673
    %v676 = vmul.u32 %v669, %v660
    %v677 = vadd.s32 %v672, %v674
    %vm678 = vc.u32 %v672, %v674
    %v679 = vadd.s32 %v675, 1
    %v680 = vsel %vm678, %v679, %v675
    %v681 = vadd.s32 %v676, %v680
    %v682 = vadd.s32 %v681, 536870912
    %v683 = vshrl.u32 %v682, 30
    %v684 = vshll.u32 %v683, 30
    %v685 = vsub.s32 %v681, %v684
    %vm686 = vcmp.lt.s32.totalorder %v685, 0
    %v687 = vsub.s32 0, %v685
    %v688 = vsel %vm686, %v687, %v685
    %v689 = vclz %v688
    %v690 = vsub.s32 %v689, 2
    %vm691 = vcmp.gt.s32.totalorder 0, %v690
    %v692 = vsel %vm691, 0, %v690
    %v693 = vsub.s32 32, %v692
    %v694 = vshll.u32 %v685, %v692
    %v695 = vshrl.u32 %v677, %v693
    %v696 = vor.u32 %v694, %v695
    %v697 = vsub.s32 4294967266, %v692
    %v698 = vadd.s32 %v697, 127
    %v699 = vshll.u32 %v698, 23
    %v700 = vor.u32 4788187, %v699
    %v701 = vand.u32 2147483647, %v700
    %v703 = vcvt.s32.f32 %v696
    %v704 = vmul.f32 %v703, %v701
    %v705 = vxor.u32 %v704, 2147483648
    %v706 = vsel %vm623, %v705, %v704
    %v707 = vsub.s32 4, %v683
    %v708 = vsel %vm623, %v707, %v683
    %v709 = vsel %vm622, %v618, %v706
    %v710 = vsel %vm622, 0, %v708
    %v711 = vcosq.f32.pop %v709
    %v712 = vsinq.f32.pop %v709
    %vm713 = vweird.f32 %v618
    %v714 = vadd.s32 %v710, 3
    %v715 = vand.u32 %v714, 3
    %vm716 = vcmp.lt.s32.totalorder %v715, 2
    %vm717 = vcmp.eq.s32.totalorder %v715, 0
    %v718 = vxor.u32 %v712, 2147483648
    %v719 = vsel %vm717, %v711, %v718
    %vm720 = vcmp.eq.s32.totalorder %v715, 2
    %v721 = vxor.u32 %v711, 2147483648
    %v722 = vsel %vm720, %v721, %v712
    %v723 = vsel %vm716, %v719, %v722
    %v724 = vsel %vm713, nan, %v723
    %v725 = vmul.f32 %v45, %v724
    %v726 = vstv %s508
    %v727 = vmul.f32 %v726, %v620
    %v728 = vadd.f32 %v497, %v727
    %v729 = vsub.f32 %v728, %v617
    %v730 = vmul.f32 %v726, %v725
    %v731 = vadd.f32 %v503, %v730
    %v732 = vsub.f32 %v731, %v619
    %v733 = vand.u32 2147483647, %v729
    %vm734 = vcmp.le.f32.partialorder %v733, 0.7853982
    %vm735 = vcmp.lt.s32.totalorder %v729, 0
    %v736 = vand.u32 %v729, 2139095040
    %v737 = vshrl.u32 %v736, 23
    %v738 = vsub.s32 %v737, 127
    %v739 = vand.u32 2147483647, %v729
    %v740 = vand.u32 %v739, 8388607
    %v741 = vor.u32 %v740, 8388608
    %v742 = vsub.s32 0, %v741
    %v743 = vadd.s32 %v738, 1
    %vm744 = vcmp.gt.s32.totalorder %v743, 0
    %v745 = vsel %vm744, %v743, 0
    %v746 = vshrl.u32 %v745, 5
    %v747 = vand.u32 %v745, 31
    %v748 = vsub.s32 32, %v747
    %v749 = vshrl.u32 683565275, %v748
    %v750 = vshll.u32 683565275, %v747
    %v751 = vshrl.u32 2475754826, %v748
    %v752 = vor.u32 %v750, %v751
    %v753 = vshll.u32 2475754826, %v747
    %v754 = vshrl.u32 2131351028, %v748
    %v755 = vor.u32 %v753, %v754
    %v756 = vshll.u32 2131351028, %v747
    %v757 = vshrl.u32 2102212464, %v748
    %v758 = vor.u32 %v756, %v757
    %v759 = vshll.u32 2102212464, %v747
    %v760 = vshrl.u32 920167782, %v748
    %v761 = vor.u32 %v759, %v760
    %v762 = vshll.u32 920167782, %v747
    %v763 = vshrl.u32 1326507024, %v748
    %v764 = vor.u32 %v762, %v763
    %vm765 = vcmp.lt.s32.totalorder %v746, 1
    %vm766 = vcmp.lt.s32.totalorder %v746, 2
    %vm767 = vcmp.lt.s32.totalorder %v746, 3
    %vm768 = vcmp.lt.s32.totalorder %v746, 4
    %v769 = vsel %vm765, %v749, %v752
    %v770 = vsel %vm768, %v758, 2102212464
    %v771 = vsel %vm767, %v755, %v770
    %v772 = vsel %vm766, %v769, %v771
    %v773 = vsel %vm765, %v752, %v755
    %v774 = vsel %vm768, %v761, 920167782
    %v775 = vsel %vm767, %v758, %v774
    %v776 = vsel %vm766, %v773, %v775
    %v777 = vsel %vm765, %v755, %v758
    %v778 = vsel %vm768, %v764, 1326507024
    %v779 = vsel %vm767, %v761, %v778
    %v780 = vsel %vm766, %v777, %v779
    %v781 = vshll.u32 %v741, 8
    %v782 = vmul.u32.u64.compose %v781, %v780
    %v783 = vextract.low.u32 %v782
    %v784 = vextract.high.u32 %v782
    %v785 = vmul.u32.u64.compose %v781, %v776
    %v786 = vextract.low.u32 %v785
    %v787 = vextract.high.u32 %v785
    %v788 = vmul.u32 %v781, %v772
    %v789 = vadd.s32 %v784, %v786
    %vm790 = vc.u32 %v784, %v786
    %v791 = vadd.s32 %v787, 1
    %v792 = vsel %vm790, %v791, %v787
    %v793 = vadd.s32 %v788, %v792
    %v794 = vadd.s32 %v793, 536870912
    %v795 = vshrl.u32 %v794, 30
    %v796 = vshll.u32 %v795, 30
    %v797 = vsub.s32 %v793, %v796
    %vm798 = vcmp.lt.s32.totalorder %v797, 0
    %v799 = vsub.s32 0, %v797
    %v800 = vsel %vm798, %v799, %v797
    %v801 = vclz %v800
    %v802 = vsub.s32 %v801, 2
    %vm803 = vcmp.gt.s32.totalorder 0, %v802
    %v804 = vsel %vm803, 0, %v802
    %v805 = vsub.s32 32, %v804
    %v806 = vshll.u32 %v797, %v804
    %v807 = vshrl.u32 %v789, %v805
    %v808 = vor.u32 %v806, %v807
    %v809 = vsub.s32 4294967266, %v804
    %v810 = vadd.s32 %v809, 127
    %v811 = vshll.u32 %v810, 23
    %v812 = vor.u32 4788187, %v811
    %v813 = vand.u32 2147483647, %v812
    %v815 = vcvt.s32.f32 %v808
    %v816 = vmul.f32 %v815, %v813
    %v817 = vxor.u32 %v816, 2147483648
    %v818 = vsel %vm735, %v817, %v816
    %v819 = vsub.s32 4, %v795
    %v820 = vsel %vm735, %v819, %v795
    %v821 = vsel %vm734, %v729, %v818
    %v822 = vsel %vm734, 0, %v820
    %v823 = vcosq.f32.pop %v821
    %v824 = vsinq.f32.pop %v821
    %vm825 = vweird.f32 %v729
    %v826 = vadd.s32 %v822, 3
    %v827 = vand.u32 %v826, 3
    %vm828 = vcmp.lt.s32.totalorder %v827, 2
    %vm829 = vcmp.eq.s32.totalorder %v827, 0
    %v830 = vxor.u32 %v824, 2147483648
    %v831 = vsel %vm829, %v823, %v830
    %vm832 = vcmp.eq.s32.totalorder %v827, 2
    %v833 = vxor.u32 %v823, 2147483648
    %v834 = vsel %vm832, %v833, %v824
    %v835 = vsel %vm828, %v831, %v834
    %v836 = vsel %vm825, nan, %v835
    %v837 = vmul.f32 %v45, %v836
    %v838 = vsub.f32 %v503, %v620
    %v839 = vadd.f32 %v838, %v732
    %v840 = vmul.f32 %v726, %v839
    %v841 = vadd.f32 %v497, %v840
    %v842 = vsub.f32 %v615, %v725
    %v843 = vadd.f32 %v842, %v837
    %v844 = vmul.f32 %v726, %v843
    %v845 = vadd.f32 %v503, %v844
    %v846 = vand.u32 2147483647, %v841
    %vm847 = vcmp.le.f32.partialorder %v846, 0.7853982
    %vm848 = vcmp.lt.s32.totalorder %v841, 0
    %v849 = vand.u32 %v841, 2139095040
    %v850 = vshrl.u32 %v849, 23
    %v851 = vsub.s32 %v850, 127
    %v852 = vand.u32 2147483647, %v841
    %v853 = vand.u32 %v852, 8388607
    %v854 = vor.u32 %v853, 8388608
    %v855 = vsub.s32 0, %v854
    %v856 = vadd.s32 %v851, 1
    %vm857 = vcmp.gt.s32.totalorder %v856, 0
    %v858 = vsel %vm857, %v856, 0
    %v859 = vshrl.u32 %v858, 5
    %v860 = vand.u32 %v858, 31
    %v861 = vsub.s32 32, %v860
    %v862 = vshrl.u32 683565275, %v861
    %v863 = vshll.u32 683565275, %v860
    %v864 = vshrl.u32 2475754826, %v861
    %v865 = vor.u32 %v863, %v864
    %v866 = vshll.u32 2475754826, %v860
    %v867 = vshrl.u32 2131351028, %v861
    %v868 = vor.u32 %v866, %v867
    %v869 = vshll.u32 2131351028, %v860
    %v870 = vshrl.u32 2102212464, %v861
    %v871 = vor.u32 %v869, %v870
    %v872 = vshll.u32 2102212464, %v860
    %v873 = vshrl.u32 920167782, %v861
    %v874 = vor.u32 %v872, %v873
    %v875 = vshll.u32 920167782, %v860
    %v876 = vshrl.u32 1326507024, %v861
    %v877 = vor.u32 %v875, %v876
    %vm878 = vcmp.lt.s32.totalorder %v859, 1
    %vm879 = vcmp.lt.s32.totalorder %v859, 2
    %vm880 = vcmp.lt.s32.totalorder %v859, 3
    %vm881 = vcmp.lt.s32.totalorder %v859, 4
    %v882 = vsel %vm878, %v862, %v865
    %v883 = vsel %vm881, %v871, 2102212464
    %v884 = vsel %vm880, %v868, %v883
    %v885 = vsel %vm879, %v882, %v884
    %v886 = vsel %vm878, %v865, %v868
    %v887 = vsel %vm881, %v874, 920167782
    %v888 = vsel %vm880, %v871, %v887
    %v889 = vsel %vm879, %v886, %v888
    %v890 = vsel %vm878, %v868, %v871
    %v891 = vsel %vm881, %v877, 1326507024
    %v892 = vsel %vm880, %v874, %v891
    %v893 = vsel %vm879, %v890, %v892
    %v894 = vshll.u32 %v854, 8
    %v895 = vmul.u32.u64.compose %v894, %v893
    %v896 = vextract.low.u32 %v895
    %v897 = vextract.high.u32 %v895
    %v898 = vmul.u32.u64.compose %v894, %v889
    %v899 = vextract.low.u32 %v898
    %v900 = vextract.high.u32 %v898
    %v901 = vmul.u32 %v894, %v885
    %v902 = vadd.s32 %v897, %v899
    %vm903 = vc.u32 %v897, %v899
    %v904 = vadd.s32 %v900, 1
    %v905 = vsel %vm903, %v904, %v900
    %v906 = vadd.s32 %v901, %v905
    %v907 = vadd.s32 %v906, 536870912
    %v908 = vshrl.u32 %v907, 30
    %v909 = vshll.u32 %v908, 30
    %v910 = vsub.s32 %v906, %v909
    %vm911 = vcmp.lt.s32.totalorder %v910, 0
    %v912 = vsub.s32 0, %v910
    %v913 = vsel %vm911, %v912, %v910
    %v914 = vclz %v913
    %v915 = vsub.s32 %v914, 2
    %vm916 = vcmp.gt.s32.totalorder 0, %v915
    %v917 = vsel %vm916, 0, %v915
    %v918 = vsub.s32 32, %v917
    %v919 = vshll.u32 %v910, %v917
    %v920 = vshrl.u32 %v902, %v918
    %v921 = vor.u32 %v919, %v920
    %v922 = vsub.s32 4294967266, %v917
    %v923 = vadd.s32 %v922, 127
    %v924 = vshll.u32 %v923, 23
    %v925 = vor.u32 4788187, %v924
    %v926 = vand.u32 2147483647, %v925
    %v928 = vcvt.s32.f32 %v921
    %v929 = vmul.f32 %v928, %v926
    %v930 = vxor.u32 %v929, 2147483648
    %v931 = vsel %vm848, %v930, %v929
    %v932 = vsub.s32 4, %v908
    %v933 = vsel %vm848, %v932, %v908
    %v934 = vsel %vm847, %v841, %v931
    %v935 = vsel %vm847, 0, %v933
    %v936 = vcosq.f32.pop %v934
    %v937 = vsinq.f32.pop %v934
    %vm938 = vweird.f32 %v841
    %v939 = vadd.s32 %v935, 3
    %v940 = vand.u32 %v939, 3
    %vm941 = vcmp.lt.s32.totalorder %v940, 2
    %vm942 = vcmp.eq.s32.totalorder %v940, 0
    %v943 = vxor.u32 %v937, 2147483648
    %v944 = vsel %vm942, %v936, %v943
    %vm945 = vcmp.eq.s32.totalorder %v940, 2
    %v946 = vxor.u32 %v936, 2147483648
    %v947 = vsel %vm945, %v946, %v937
    %v948 = vsel %vm941, %v944, %v947
    %v949 = vsel %vm938, nan, %v948
    %v950 = vmul.f32 %v45, %v949
    %v951 = vadd.f32 %v620, %v732
    %v952 = vmul.f32 %v951, 3.0
    %v953 = vadd.f32 %v503, %v952
    %v954 = vadd.f32 %v953, %v845
    %v955 = vstv %s510
    %v956 = vmul.f32 %v955, %v954
    %v957 = vadd.f32 %v497, %v956
    %v958 = vadd.f32 %v725, %v837
    %v959 = vmul.f32 %v958, 3.0
    %v960 = vadd.f32 %v615, %v959
    %v961 = vadd.f32 %v960, %v950
    %v962 = vmul.f32 %v955, %v961
    %v963 = vadd.f32 %v503, %v962
    %s964 = scalar_lea.vmem [#allocation9], 16
    %965 = vst [vmem:[%s964] sm:$0xff] %v957
    %s966 = scalar_lea.vmem [#allocation10], 16
    %967 = vst [vmem:[%s966] sm:$0xff] %v963
    %s968 = sld [smem:[#allocation3 + $0x2]]
    %s969 = sld [smem:[#allocation4 + $0x2]]
    %s970 = sld [smem:[#allocation5 + $0x2]]
    %v971 = vand.u32 2147483647, %v957
    %vm972 = vcmp.le.f32.partialorder %v971, 0.7853982
    %vm973 = vcmp.lt.s32.totalorder %v957, 0
    %v974 = vand.u32 %v957, 2139095040
    %v975 = vshrl.u32 %v974, 23
    %v976 = vsub.s32 %v975, 127
    %v977 = vand.u32 2147483647, %v957
    %v978 = vand.u32 %v977, 8388607
    %v979 = vor.u32 %v978, 8388608
    %v980 = vsub.s32 0, %v979
    %v981 = vadd.s32 %v976, 1
    %vm982 = vcmp.gt.s32.totalorder %v981, 0
    %v983 = vsel %vm982, %v981, 0
    %v984 = vshrl.u32 %v983, 5
    %v985 = vand.u32 %v983, 31
    %v986 = vsub.s32 32, %v985
    %v987 = vshrl.u32 683565275, %v986
    %v988 = vshll.u32 683565275, %v985
    %v989 = vshrl.u32 2475754826, %v986
    %v990 = vor.u32 %v988, %v989
    %v991 = vshll.u32 2475754826, %v985
    %v992 = vshrl.u32 2131351028, %v986
    %v993 = vor.u32 %v991, %v992
    %v994 = vshll.u32 2131351028, %v985
    %v995 = vshrl.u32 2102212464, %v986
    %v996 = vor.u32 %v994, %v995
    %v997 = vshll.u32 2102212464, %v985
    %v998 = vshrl.u32 920167782, %v986
    %v999 = vor.u32 %v997, %v998
    %v1000 = vshll.u32 920167782, %v985
    %v1001 = vshrl.u32 1326507024, %v986
    %v1002 = vor.u32 %v1000, %v1001
    %vm1003 = vcmp.lt.s32.totalorder %v984, 1
    %vm1004 = vcmp.lt.s32.totalorder %v984, 2
    %vm1005 = vcmp.lt.s32.totalorder %v984, 3
    %vm1006 = vcmp.lt.s32.totalorder %v984, 4
    %v1007 = vsel %vm1003, %v987, %v990
    %v1008 = vsel %vm1006, %v996, 2102212464
    %v1009 = vsel %vm1005, %v993, %v1008
    %v1010 = vsel %vm1004, %v1007, %v1009
    %v1011 = vsel %vm1003, %v990, %v993
    %v1012 = vsel %vm1006, %v999, 920167782
    %v1013 = vsel %vm1005, %v996, %v1012
    %v1014 = vsel %vm1004, %v1011, %v1013
    %v1015 = vsel %vm1003, %v993, %v996
    %v1016 = vsel %vm1006, %v1002, 1326507024
    %v1017 = vsel %vm1005, %v999, %v1016
    %v1018 = vsel %vm1004, %v1015, %v1017
    %v1019 = vshll.u32 %v979, 8
    %v1020 = vmul.u32.u64.compose %v1019, %v1018
    %v1021 = vextract.low.u32 %v1020
    %v1022 = vextract.high.u32 %v1020
    %v1023 = vmul.u32.u64.compose %v1019, %v1014
    %v1024 = vextract.low.u32 %v1023
    %v1025 = vextract.high.u32 %v1023
    %v1026 = vmul.u32 %v1019, %v1010
    %v1027 = vadd.s32 %v1022, %v1024
    %vm1028 = vc.u32 %v1022, %v1024
    %v1029 = vadd.s32 %v1025, 1
    %v1030 = vsel %vm1028, %v1029, %v1025
    %v1031 = vadd.s32 %v1026, %v1030
    %v1032 = vadd.s32 %v1031, 536870912
    %v1033 = vshrl.u32 %v1032, 30
    %v1034 = vshll.u32 %v1033, 30
    %v1035 = vsub.s32 %v1031, %v1034
    %vm1036 = vcmp.lt.s32.totalorder %v1035, 0
    %v1037 = vsub.s32 0, %v1035
    %v1038 = vsel %vm1036, %v1037, %v1035
    %v1039 = vclz %v1038
    %v1040 = vsub.s32 %v1039, 2
    %vm1041 = vcmp.gt.s32.totalorder 0, %v1040
    %v1042 = vsel %vm1041, 0, %v1040
    %v1043 = vsub.s32 32, %v1042
    %v1044 = vshll.u32 %v1035, %v1042
    %v1045 = vshrl.u32 %v1027, %v1043
    %v1046 = vor.u32 %v1044, %v1045
    %v1047 = vsub.s32 4294967266, %v1042
    %v1048 = vadd.s32 %v1047, 127
    %v1049 = vshll.u32 %v1048, 23
    %v1050 = vor.u32 4788187, %v1049
    %v1051 = vand.u32 2147483647, %v1050
    %v1053 = vcvt.s32.f32 %v1046
    %v1054 = vmul.f32 %v1053, %v1051
    %v1055 = vxor.u32 %v1054, 2147483648
    %v1056 = vsel %vm973, %v1055, %v1054
    %v1057 = vsub.s32 4, %v1033
    %v1058 = vsel %vm973, %v1057, %v1033
    %v1059 = vsel %vm972, %v957, %v1056
    %v1060 = vsel %vm972, 0, %v1058
    %v1061 = vcosq.f32.pop %v1059
    %v1062 = vsinq.f32.pop %v1059
    %vm1063 = vweird.f32 %v957
    %v1064 = vadd.s32 %v1060, 3
    %v1065 = vand.u32 %v1064, 3
    %vm1066 = vcmp.lt.s32.totalorder %v1065, 2
    %vm1067 = vcmp.eq.s32.totalorder %v1065, 0
    %v1068 = vxor.u32 %v1062, 2147483648
    %v1069 = vsel %vm1067, %v1061, %v1068
    %vm1070 = vcmp.eq.s32.totalorder %v1065, 2
    %v1071 = vxor.u32 %v1061, 2147483648
    %v1072 = vsel %vm1070, %v1071, %v1062
    %v1073 = vsel %vm1066, %v1069, %v1072
    %v1074 = vsel %vm1063, nan, %v1073
    %v1075 = vmul.f32 %v45, %v1074
    %v1076 = vstv %s969
    %v1077 = vmul.f32 %v1076, %v963
    %v1078 = vadd.f32 %v957, %v1077
    %v1079 = vmul.f32 %v1076, %v1075
    %v1080 = vadd.f32 %v963, %v1079
    %v1081 = vand.u32 2147483647, %v1078
    %vm1082 = vcmp.le.f32.partialorder %v1081, 0.7853982
    %vm1083 = vcmp.lt.s32.totalorder %v1078, 0
    %v1084 = vand.u32 %v1078, 2139095040
    %v1085 = vshrl.u32 %v1084, 23
    %v1086 = vsub.s32 %v1085, 127
    %v1087 = vand.u32 2147483647, %v1078
    %v1088 = vand.u32 %v1087, 8388607
    %v1089 = vor.u32 %v1088, 8388608
    %v1090 = vsub.s32 0, %v1089
    %v1091 = vadd.s32 %v1086, 1
    %vm1092 = vcmp.gt.s32.totalorder %v1091, 0
    %v1093 = vsel %vm1092, %v1091, 0
    %v1094 = vshrl.u32 %v1093, 5
    %v1095 = vand.u32 %v1093, 31
    %v1096 = vsub.s32 32, %v1095
    %v1097 = vshrl.u32 683565275, %v1096
    %v1098 = vshll.u32 683565275, %v1095
    %v1099 = vshrl.u32 2475754826, %v1096
    %v1100 = vor.u32 %v1098, %v1099
    %v1101 = vshll.u32 2475754826, %v1095
    %v1102 = vshrl.u32 2131351028, %v1096
    %v1103 = vor.u32 %v1101, %v1102
    %v1104 = vshll.u32 2131351028, %v1095
    %v1105 = vshrl.u32 2102212464, %v1096
    %v1106 = vor.u32 %v1104, %v1105
    %v1107 = vshll.u32 2102212464, %v1095
    %v1108 = vshrl.u32 920167782, %v1096
    %v1109 = vor.u32 %v1107, %v1108
    %v1110 = vshll.u32 920167782, %v1095
    %v1111 = vshrl.u32 1326507024, %v1096
    %v1112 = vor.u32 %v1110, %v1111
    %vm1113 = vcmp.lt.s32.totalorder %v1094, 1
    %vm1114 = vcmp.lt.s32.totalorder %v1094, 2
    %vm1115 = vcmp.lt.s32.totalorder %v1094, 3
    %vm1116 = vcmp.lt.s32.totalorder %v1094, 4
    %v1117 = vsel %vm1113, %v1097, %v1100
    %v1118 = vsel %vm1116, %v1106, 2102212464
    %v1119 = vsel %vm1115, %v1103, %v1118
    %v1120 = vsel %vm1114, %v1117, %v1119
    %v1121 = vsel %vm1113, %v1100, %v1103
    %v1122 = vsel %vm1116, %v1109, 920167782
    %v1123 = vsel %vm1115, %v1106, %v1122
    %v1124 = vsel %vm1114, %v1121, %v1123
    %v1125 = vsel %vm1113, %v1103, %v1106
    %v1126 = vsel %vm1116, %v1112, 1326507024
    %v1127 = vsel %vm1115, %v1109, %v1126
    %v1128 = vsel %vm1114, %v1125, %v1127
    %v1129 = vshll.u32 %v1089, 8
    %v1130 = vmul.u32.u64.compose %v1129, %v1128
    %v1131 = vextract.low.u32 %v1130
    %v1132 = vextract.high.u32 %v1130
    %v1133 = vmul.u32.u64.compose %v1129, %v1124
    %v1134 = vextract.low.u32 %v1133
    %v1135 = vextract.high.u32 %v1133
    %v1136 = vmul.u32 %v1129, %v1120
    %v1137 = vadd.s32 %v1132, %v1134
    %vm1138 = vc.u32 %v1132, %v1134
    %v1139 = vadd.s32 %v1135, 1
    %v1140 = vsel %vm1138, %v1139, %v1135
    %v1141 = vadd.s32 %v1136, %v1140
    %v1142 = vadd.s32 %v1141, 536870912
    %v1143 = vshrl.u32 %v1142, 30
    %v1144 = vshll.u32 %v1143, 30
    %v1145 = vsub.s32 %v1141, %v1144
    %vm1146 = vcmp.lt.s32.totalorder %v1145, 0
    %v1147 = vsub.s32 0, %v1145
    %v1148 = vsel %vm1146, %v1147, %v1145
    %v1149 = vclz %v1148
    %v1150 = vsub.s32 %v1149, 2
    %vm1151 = vcmp.gt.s32.totalorder 0, %v1150
    %v1152 = vsel %vm1151, 0, %v1150
    %v1153 = vsub.s32 32, %v1152
    %v1154 = vshll.u32 %v1145, %v1152
    %v1155 = vshrl.u32 %v1137, %v1153
    %v1156 = vor.u32 %v1154, %v1155
    %v1157 = vsub.s32 4294967266, %v1152
    %v1158 = vadd.s32 %v1157, 127
    %v1159 = vshll.u32 %v1158, 23
    %v1160 = vor.u32 4788187, %v1159
    %v1161 = vand.u32 2147483647, %v1160
    %v1163 = vcvt.s32.f32 %v1156
    %v1164 = vmul.f32 %v1163, %v1161
    %v1165 = vxor.u32 %v1164, 2147483648
    %v1166 = vsel %vm1083, %v1165, %v1164
    %v1167 = vsub.s32 4, %v1143
    %v1168 = vsel %vm1083, %v1167, %v1143
    %v1169 = vsel %vm1082, %v1078, %v1166
    %v1170 = vsel %vm1082, 0, %v1168
    %v1171 = vcosq.f32.pop %v1169
    %v1172 = vsinq.f32.pop %v1169
    %vm1173 = vweird.f32 %v1078
    %v1174 = vadd.s32 %v1170, 3
    %v1175 = vand.u32 %v1174, 3
    %vm1176 = vcmp.lt.s32.totalorder %v1175, 2
    %vm1177 = vcmp.eq.s32.totalorder %v1175, 0
    %v1178 = vxor.u32 %v1172, 2147483648
    %v1179 = vsel %vm1177, %v1171, %v1178
    %vm1180 = vcmp.eq.s32.totalorder %v1175, 2
    %v1181 = vxor.u32 %v1171, 2147483648
    %v1182 = vsel %vm1180, %v1181, %v1172
    %v1183 = vsel %vm1176, %v1179, %v1182
    %v1184 = vsel %vm1173, nan, %v1183
    %v1185 = vmul.f32 %v45, %v1184
    %v1186 = vstv %s968
    %v1187 = vmul.f32 %v1186, %v1080
    %v1188 = vadd.f32 %v957, %v1187
    %v1189 = vsub.f32 %v1188, %v1077
    %v1190 = vmul.f32 %v1186, %v1185
    %v1191 = vadd.f32 %v963, %v1190
    %v1192 = vsub.f32 %v1191, %v1079
    %v1193 = vand.u32 2147483647, %v1189
    %vm1194 = vcmp.le.f32.partialorder %v1193, 0.7853982
    %vm1195 = vcmp.lt.s32.totalorder %v1189, 0
    %v1196 = vand.u32 %v1189, 2139095040
    %v1197 = vshrl.u32 %v1196, 23
    %v1198 = vsub.s32 %v1197, 127
    %v1199 = vand.u32 2147483647, %v1189
    %v1200 = vand.u32 %v1199, 8388607
    %v1201 = vor.u32 %v1200, 8388608
    %v1202 = vsub.s32 0, %v1201
    %v1203 = vadd.s32 %v1198, 1
    %vm1204 = vcmp.gt.s32.totalorder %v1203, 0
    %v1205 = vsel %vm1204, %v1203, 0
    %v1206 = vshrl.u32 %v1205, 5
    %v1207 = vand.u32 %v1205, 31
    %v1208 = vsub.s32 32, %v1207
    %v1209 = vshrl.u32 683565275, %v1208
    %v1210 = vshll.u32 683565275, %v1207
    %v1211 = vshrl.u32 2475754826, %v1208
    %v1212 = vor.u32 %v1210, %v1211
    %v1213 = vshll.u32 2475754826, %v1207
    %v1214 = vshrl.u32 2131351028, %v1208
    %v1215 = vor.u32 %v1213, %v1214
    %v1216 = vshll.u32 2131351028, %v1207
    %v1217 = vshrl.u32 2102212464, %v1208
    %v1218 = vor.u32 %v1216, %v1217
    %v1219 = vshll.u32 2102212464, %v1207
    %v1220 = vshrl.u32 920167782, %v1208
    %v1221 = vor.u32 %v1219, %v1220
    %v1222 = vshll.u32 920167782, %v1207
    %v1223 = vshrl.u32 1326507024, %v1208
    %v1224 = vor.u32 %v1222, %v1223
    %vm1225 = vcmp.lt.s32.totalorder %v1206, 1
    %vm1226 = vcmp.lt.s32.totalorder %v1206, 2
    %vm1227 = vcmp.lt.s32.totalorder %v1206, 3
    %vm1228 = vcmp.lt.s32.totalorder %v1206, 4
    %v1229 = vsel %vm1225, %v1209, %v1212
    %v1230 = vsel %vm1228, %v1218, 2102212464
    %v1231 = vsel %vm1227, %v1215, %v1230
    %v1232 = vsel %vm1226, %v1229, %v1231
    %v1233 = vsel %vm1225, %v1212, %v1215
    %v1234 = vsel %vm1228, %v1221, 920167782
    %v1235 = vsel %vm1227, %v1218, %v1234
    %v1236 = vsel %vm1226, %v1233, %v1235
    %v1237 = vsel %vm1225, %v1215, %v1218
    %v1238 = vsel %vm1228, %v1224, 1326507024
    %v1239 = vsel %vm1227, %v1221, %v1238
    %v1240 = vsel %vm1226, %v1237, %v1239
    %v1241 = vshll.u32 %v1201, 8
    %v1242 = vmul.u32.u64.compose %v1241, %v1240
    %v1243 = vextract.low.u32 %v1242
    %v1244 = vextract.high.u32 %v1242
    %v1245 = vmul.u32.u64.compose %v1241, %v1236
    %v1246 = vextract.low.u32 %v1245
    %v1247 = vextract.high.u32 %v1245
    %v1248 = vmul.u32 %v1241, %v1232
    %v1249 = vadd.s32 %v1244, %v1246
    %vm1250 = vc.u32 %v1244, %v1246
    %v1251 = vadd.s32 %v1247, 1
    %v1252 = vsel %vm1250, %v1251, %v1247
    %v1253 = vadd.s32 %v1248, %v1252
    %v1254 = vadd.s32 %v1253, 536870912
    %v1255 = vshrl.u32 %v1254, 30
    %v1256 = vshll.u32 %v1255, 30
    %v1257 = vsub.s32 %v1253, %v1256
    %vm1258 = vcmp.lt.s32.totalorder %v1257, 0
    %v1259 = vsub.s32 0, %v1257
    %v1260 = vsel %vm1258, %v1259, %v1257
    %v1261 = vclz %v1260
    %v1262 = vsub.s32 %v1261, 2
    %vm1263 = vcmp.gt.s32.totalorder 0, %v1262
    %v1264 = vsel %vm1263, 0, %v1262
    %v1265 = vsub.s32 32, %v1264
    %v1266 = vshll.u32 %v1257, %v1264
    %v1267 = vshrl.u32 %v1249, %v1265
    %v1268 = vor.u32 %v1266, %v1267
    %v1269 = vsub.s32 4294967266, %v1264
    %v1270 = vadd.s32 %v1269, 127
    %v1271 = vshll.u32 %v1270, 23
    %v1272 = vor.u32 4788187, %v1271
    %v1273 = vand.u32 2147483647, %v1272
    %v1275 = vcvt.s32.f32 %v1268
    %v1276 = vmul.f32 %v1275, %v1273
    %v1277 = vxor.u32 %v1276, 2147483648
    %v1278 = vsel %vm1195, %v1277, %v1276
    %v1279 = vsub.s32 4, %v1255
    %v1280 = vsel %vm1195, %v1279, %v1255
    %v1281 = vsel %vm1194, %v1189, %v1278
    %v1282 = vsel %vm1194, 0, %v1280
    %v1283 = vcosq.f32.pop %v1281
    %v1284 = vsinq.f32.pop %v1281
    %vm1285 = vweird.f32 %v1189
    %v1286 = vadd.s32 %v1282, 3
    %v1287 = vand.u32 %v1286, 3
    %vm1288 = vcmp.lt.s32.totalorder %v1287, 2
    %vm1289 = vcmp.eq.s32.totalorder %v1287, 0
    %v1290 = vxor.u32 %v1284, 2147483648
    %v1291 = vsel %vm1289, %v1283, %v1290
    %vm1292 = vcmp.eq.s32.totalorder %v1287, 2
    %v1293 = vxor.u32 %v1283, 2147483648
    %v1294 = vsel %vm1292, %v1293, %v1284
    %v1295 = vsel %vm1288, %v1291, %v1294
    %v1296 = vsel %vm1285, nan, %v1295
    %v1297 = vmul.f32 %v45, %v1296
    %v1298 = vsub.f32 %v963, %v1080
    %v1299 = vadd.f32 %v1298, %v1192
    %v1300 = vmul.f32 %v1186, %v1299
    %v1301 = vadd.f32 %v957, %v1300
    %v1302 = vsub.f32 %v1075, %v1185
    %v1303 = vadd.f32 %v1302, %v1297
    %v1304 = vmul.f32 %v1186, %v1303
    %v1305 = vadd.f32 %v963, %v1304
    %v1306 = vand.u32 2147483647, %v1301
    %vm1307 = vcmp.le.f32.partialorder %v1306, 0.7853982
    %vm1308 = vcmp.lt.s32.totalorder %v1301, 0
    %v1309 = vand.u32 %v1301, 2139095040
    %v1310 = vshrl.u32 %v1309, 23
    %v1311 = vsub.s32 %v1310, 127
    %v1312 = vand.u32 2147483647, %v1301
    %v1313 = vand.u32 %v1312, 8388607
    %v1314 = vor.u32 %v1313, 8388608
    %v1315 = vsub.s32 0, %v1314
    %v1316 = vadd.s32 %v1311, 1
    %vm1317 = vcmp.gt.s32.totalorder %v1316, 0
    %v1318 = vsel %vm1317, %v1316, 0
    %v1319 = vshrl.u32 %v1318, 5
    %v1320 = vand.u32 %v1318, 31
    %v1321 = vsub.s32 32, %v1320
    %v1322 = vshrl.u32 683565275, %v1321
    %v1323 = vshll.u32 683565275, %v1320
    %v1324 = vshrl.u32 2475754826, %v1321
    %v1325 = vor.u32 %v1323, %v1324
    %v1326 = vshll.u32 2475754826, %v1320
    %v1327 = vshrl.u32 2131351028, %v1321
    %v1328 = vor.u32 %v1326, %v1327
    %v1329 = vshll.u32 2131351028, %v1320
    %v1330 = vshrl.u32 2102212464, %v1321
    %v1331 = vor.u32 %v1329, %v1330
    %v1332 = vshll.u32 2102212464, %v1320
    %v1333 = vshrl.u32 920167782, %v1321
    %v1334 = vor.u32 %v1332, %v1333
    %v1335 = vshll.u32 920167782, %v1320
    %v1336 = vshrl.u32 1326507024, %v1321
    %v1337 = vor.u32 %v1335, %v1336
    %vm1338 = vcmp.lt.s32.totalorder %v1319, 1
    %vm1339 = vcmp.lt.s32.totalorder %v1319, 2
    %vm1340 = vcmp.lt.s32.totalorder %v1319, 3
    %vm1341 = vcmp.lt.s32.totalorder %v1319, 4
    %v1342 = vsel %vm1338, %v1322, %v1325
    %v1343 = vsel %vm1341, %v1331, 2102212464
    %v1344 = vsel %vm1340, %v1328, %v1343
    %v1345 = vsel %vm1339, %v1342, %v1344
    %v1346 = vsel %vm1338, %v1325, %v1328
    %v1347 = vsel %vm1341, %v1334, 920167782
    %v1348 = vsel %vm1340, %v1331, %v1347
    %v1349 = vsel %vm1339, %v1346, %v1348
    %v1350 = vsel %vm1338, %v1328, %v1331
    %v1351 = vsel %vm1341, %v1337, 1326507024
    %v1352 = vsel %vm1340, %v1334, %v1351
    %v1353 = vsel %vm1339, %v1350, %v1352
    %v1354 = vshll.u32 %v1314, 8
    %v1355 = vmul.u32.u64.compose %v1354, %v1353
    %v1356 = vextract.low.u32 %v1355
    %v1357 = vextract.high.u32 %v1355
    %v1358 = vmul.u32.u64.compose %v1354, %v1349
    %v1359 = vextract.low.u32 %v1358
    %v1360 = vextract.high.u32 %v1358
    %v1361 = vmul.u32 %v1354, %v1345
    %v1362 = vadd.s32 %v1357, %v1359
    %vm1363 = vc.u32 %v1357, %v1359
    %v1364 = vadd.s32 %v1360, 1
    %v1365 = vsel %vm1363, %v1364, %v1360
    %v1366 = vadd.s32 %v1361, %v1365
    %v1367 = vadd.s32 %v1366, 536870912
    %v1368 = vshrl.u32 %v1367, 30
    %v1369 = vshll.u32 %v1368, 30
    %v1370 = vsub.s32 %v1366, %v1369
    %vm1371 = vcmp.lt.s32.totalorder %v1370, 0
    %v1372 = vsub.s32 0, %v1370
    %v1373 = vsel %vm1371, %v1372, %v1370
    %v1374 = vclz %v1373
    %v1375 = vsub.s32 %v1374, 2
    %vm1376 = vcmp.gt.s32.totalorder 0, %v1375
    %v1377 = vsel %vm1376, 0, %v1375
    %v1378 = vsub.s32 32, %v1377
    %v1379 = vshll.u32 %v1370, %v1377
    %v1380 = vshrl.u32 %v1362, %v1378
    %v1381 = vor.u32 %v1379, %v1380
    %v1382 = vsub.s32 4294967266, %v1377
    %v1383 = vadd.s32 %v1382, 127
    %v1384 = vshll.u32 %v1383, 23
    %v1385 = vor.u32 4788187, %v1384
    %v1386 = vand.u32 2147483647, %v1385
    %v1388 = vcvt.s32.f32 %v1381
    %v1389 = vmul.f32 %v1388, %v1386
    %v1390 = vxor.u32 %v1389, 2147483648
    %v1391 = vsel %vm1308, %v1390, %v1389
    %v1392 = vsub.s32 4, %v1368
    %v1393 = vsel %vm1308, %v1392, %v1368
    %v1394 = vsel %vm1307, %v1301, %v1391
    %v1395 = vsel %vm1307, 0, %v1393
    %v1396 = vcosq.f32.pop %v1394
    %v1397 = vsinq.f32.pop %v1394
    %vm1398 = vweird.f32 %v1301
    %v1399 = vadd.s32 %v1395, 3
    %v1400 = vand.u32 %v1399, 3
    %vm1401 = vcmp.lt.s32.totalorder %v1400, 2
    %vm1402 = vcmp.eq.s32.totalorder %v1400, 0
    %v1403 = vxor.u32 %v1397, 2147483648
    %v1404 = vsel %vm1402, %v1396, %v1403
    %vm1405 = vcmp.eq.s32.totalorder %v1400, 2
    %v1406 = vxor.u32 %v1396, 2147483648
    %v1407 = vsel %vm1405, %v1406, %v1397
    %v1408 = vsel %vm1401, %v1404, %v1407
    %v1409 = vsel %vm1398, nan, %v1408
    %v1410 = vmul.f32 %v45, %v1409
    %v1411 = vadd.f32 %v1080, %v1192
    %v1412 = vmul.f32 %v1411, 3.0
    %v1413 = vadd.f32 %v963, %v1412
    %v1414 = vadd.f32 %v1413, %v1305
    %v1415 = vstv %s970
    %v1416 = vmul.f32 %v1415, %v1414
    %v1417 = vadd.f32 %v957, %v1416
    %v1418 = vadd.f32 %v1185, %v1297
    %v1419 = vmul.f32 %v1418, 3.0
    %v1420 = vadd.f32 %v1075, %v1419
    %v1421 = vadd.f32 %v1420, %v1410
    %v1422 = vmul.f32 %v1415, %v1421
    %v1423 = vadd.f32 %v963, %v1422
    %s1424 = scalar_lea.vmem [#allocation9], 24
    %1425 = vst [vmem:[%s1424] sm:$0xff] %v1417
    %s1426 = scalar_lea.vmem [#allocation10], 24
    %1427 = vst [vmem:[%s1426] sm:$0xff] %v1423
    %s1428 = sld [smem:[#allocation3 + $0x3]]
    %s1429 = sld [smem:[#allocation4 + $0x3]]
    %s1430 = sld [smem:[#allocation5 + $0x3]]
    %v1431 = vand.u32 2147483647, %v1417
    %vm1432 = vcmp.le.f32.partialorder %v1431, 0.7853982
    %vm1433 = vcmp.lt.s32.totalorder %v1417, 0
    %v1434 = vand.u32 %v1417, 2139095040
    %v1435 = vshrl.u32 %v1434, 23
    %v1436 = vsub.s32 %v1435, 127
    %v1437 = vand.u32 2147483647, %v1417
    %v1438 = vand.u32 %v1437, 8388607
    %v1439 = vor.u32 %v1438, 8388608
    %v1440 = vsub.s32 0, %v1439
    %v1441 = vadd.s32 %v1436, 1
    %vm1442 = vcmp.gt.s32.totalorder %v1441, 0
    %v1443 = vsel %vm1442, %v1441, 0
    %v1444 = vshrl.u32 %v1443, 5
    %v1445 = vand.u32 %v1443, 31
    %v1446 = vsub.s32 32, %v1445
    %v1447 = vshrl.u32 683565275, %v1446
    %v1448 = vshll.u32 683565275, %v1445
    %v1449 = vshrl.u32 2475754826, %v1446
    %v1450 = vor.u32 %v1448, %v1449
    %v1451 = vshll.u32 2475754826, %v1445
    %v1452 = vshrl.u32 2131351028, %v1446
    %v1453 = vor.u32 %v1451, %v1452
    %v1454 = vshll.u32 2131351028, %v1445
    %v1455 = vshrl.u32 2102212464, %v1446
    %v1456 = vor.u32 %v1454, %v1455
    %v1457 = vshll.u32 2102212464, %v1445
    %v1458 = vshrl.u32 920167782, %v1446
    %v1459 = vor.u32 %v1457, %v1458
    %v1460 = vshll.u32 920167782, %v1445
    %v1461 = vshrl.u32 1326507024, %v1446
    %v1462 = vor.u32 %v1460, %v1461
    %vm1463 = vcmp.lt.s32.totalorder %v1444, 1
    %vm1464 = vcmp.lt.s32.totalorder %v1444, 2
    %vm1465 = vcmp.lt.s32.totalorder %v1444, 3
    %vm1466 = vcmp.lt.s32.totalorder %v1444, 4
    %v1467 = vsel %vm1463, %v1447, %v1450
    %v1468 = vsel %vm1466, %v1456, 2102212464
    %v1469 = vsel %vm1465, %v1453, %v1468
    %v1470 = vsel %vm1464, %v1467, %v1469
    %v1471 = vsel %vm1463, %v1450, %v1453
    %v1472 = vsel %vm1466, %v1459, 920167782
    %v1473 = vsel %vm1465, %v1456, %v1472
    %v1474 = vsel %vm1464, %v1471, %v1473
    %v1475 = vsel %vm1463, %v1453, %v1456
    %v1476 = vsel %vm1466, %v1462, 1326507024
    %v1477 = vsel %vm1465, %v1459, %v1476
    %v1478 = vsel %vm1464, %v1475, %v1477
    %v1479 = vshll.u32 %v1439, 8
    %v1480 = vmul.u32.u64.compose %v1479, %v1478
    %v1481 = vextract.low.u32 %v1480
    %v1482 = vextract.high.u32 %v1480
    %v1483 = vmul.u32.u64.compose %v1479, %v1474
    %v1484 = vextract.low.u32 %v1483
    %v1485 = vextract.high.u32 %v1483
    %v1486 = vmul.u32 %v1479, %v1470
    %v1487 = vadd.s32 %v1482, %v1484
    %vm1488 = vc.u32 %v1482, %v1484
    %v1489 = vadd.s32 %v1485, 1
    %v1490 = vsel %vm1488, %v1489, %v1485
    %v1491 = vadd.s32 %v1486, %v1490
    %v1492 = vadd.s32 %v1491, 536870912
    %v1493 = vshrl.u32 %v1492, 30
    %v1494 = vshll.u32 %v1493, 30
    %v1495 = vsub.s32 %v1491, %v1494
    %vm1496 = vcmp.lt.s32.totalorder %v1495, 0
    %v1497 = vsub.s32 0, %v1495
    %v1498 = vsel %vm1496, %v1497, %v1495
    %v1499 = vclz %v1498
    %v1500 = vsub.s32 %v1499, 2
    %vm1501 = vcmp.gt.s32.totalorder 0, %v1500
    %v1502 = vsel %vm1501, 0, %v1500
    %v1503 = vsub.s32 32, %v1502
    %v1504 = vshll.u32 %v1495, %v1502
    %v1505 = vshrl.u32 %v1487, %v1503
    %v1506 = vor.u32 %v1504, %v1505
    %v1507 = vsub.s32 4294967266, %v1502
    %v1508 = vadd.s32 %v1507, 127
    %v1509 = vshll.u32 %v1508, 23
    %v1510 = vor.u32 4788187, %v1509
    %v1511 = vand.u32 2147483647, %v1510
    %v1513 = vcvt.s32.f32 %v1506
    %v1514 = vmul.f32 %v1513, %v1511
    %v1515 = vxor.u32 %v1514, 2147483648
    %v1516 = vsel %vm1433, %v1515, %v1514
    %v1517 = vsub.s32 4, %v1493
    %v1518 = vsel %vm1433, %v1517, %v1493
    %v1519 = vsel %vm1432, %v1417, %v1516
    %v1520 = vsel %vm1432, 0, %v1518
    %v1521 = vcosq.f32.pop %v1519
    %v1522 = vsinq.f32.pop %v1519
    %vm1523 = vweird.f32 %v1417
    %v1524 = vadd.s32 %v1520, 3
    %v1525 = vand.u32 %v1524, 3
    %vm1526 = vcmp.lt.s32.totalorder %v1525, 2
    %vm1527 = vcmp.eq.s32.totalorder %v1525, 0
    %v1528 = vxor.u32 %v1522, 2147483648
    %v1529 = vsel %vm1527, %v1521, %v1528
    %vm1530 = vcmp.eq.s32.totalorder %v1525, 2
    %v1531 = vxor.u32 %v1521, 2147483648
    %v1532 = vsel %vm1530, %v1531, %v1522
    %v1533 = vsel %vm1526, %v1529, %v1532
    %v1534 = vsel %vm1523, nan, %v1533
    %v1535 = vmul.f32 %v45, %v1534
    %v1536 = vstv %s1429
    %v1537 = vmul.f32 %v1536, %v1423
    %v1538 = vadd.f32 %v1417, %v1537
    %v1539 = vmul.f32 %v1536, %v1535
    %v1540 = vadd.f32 %v1423, %v1539
    %v1541 = vand.u32 2147483647, %v1538
    %vm1542 = vcmp.le.f32.partialorder %v1541, 0.7853982
    %vm1543 = vcmp.lt.s32.totalorder %v1538, 0
    %v1544 = vand.u32 %v1538, 2139095040
    %v1545 = vshrl.u32 %v1544, 23
    %v1546 = vsub.s32 %v1545, 127
    %v1547 = vand.u32 2147483647, %v1538
    %v1548 = vand.u32 %v1547, 8388607
    %v1549 = vor.u32 %v1548, 8388608
    %v1550 = vsub.s32 0, %v1549
    %v1551 = vadd.s32 %v1546, 1
    %vm1552 = vcmp.gt.s32.totalorder %v1551, 0
    %v1553 = vsel %vm1552, %v1551, 0
    %v1554 = vshrl.u32 %v1553, 5
    %v1555 = vand.u32 %v1553, 31
    %v1556 = vsub.s32 32, %v1555
    %v1557 = vshrl.u32 683565275, %v1556
    %v1558 = vshll.u32 683565275, %v1555
    %v1559 = vshrl.u32 2475754826, %v1556
    %v1560 = vor.u32 %v1558, %v1559
    %v1561 = vshll.u32 2475754826, %v1555
    %v1562 = vshrl.u32 2131351028, %v1556
    %v1563 = vor.u32 %v1561, %v1562
    %v1564 = vshll.u32 2131351028, %v1555
    %v1565 = vshrl.u32 2102212464, %v1556
    %v1566 = vor.u32 %v1564, %v1565
    %v1567 = vshll.u32 2102212464, %v1555
    %v1568 = vshrl.u32 920167782, %v1556
    %v1569 = vor.u32 %v1567, %v1568
    %v1570 = vshll.u32 920167782, %v1555
    %v1571 = vshrl.u32 1326507024, %v1556
    %v1572 = vor.u32 %v1570, %v1571
    %vm1573 = vcmp.lt.s32.totalorder %v1554, 1
    %vm1574 = vcmp.lt.s32.totalorder %v1554, 2
    %vm1575 = vcmp.lt.s32.totalorder %v1554, 3
    %vm1576 = vcmp.lt.s32.totalorder %v1554, 4
    %v1577 = vsel %vm1573, %v1557, %v1560
    %v1578 = vsel %vm1576, %v1566, 2102212464
    %v1579 = vsel %vm1575, %v1563, %v1578
    %v1580 = vsel %vm1574, %v1577, %v1579
    %v1581 = vsel %vm1573, %v1560, %v1563
    %v1582 = vsel %vm1576, %v1569, 920167782
    %v1583 = vsel %vm1575, %v1566, %v1582
    %v1584 = vsel %vm1574, %v1581, %v1583
    %v1585 = vsel %vm1573, %v1563, %v1566
    %v1586 = vsel %vm1576, %v1572, 1326507024
    %v1587 = vsel %vm1575, %v1569, %v1586
    %v1588 = vsel %vm1574, %v1585, %v1587
    %v1589 = vshll.u32 %v1549, 8
    %v1590 = vmul.u32.u64.compose %v1589, %v1588
    %v1591 = vextract.low.u32 %v1590
    %v1592 = vextract.high.u32 %v1590
    %v1593 = vmul.u32.u64.compose %v1589, %v1584
    %v1594 = vextract.low.u32 %v1593
    %v1595 = vextract.high.u32 %v1593
    %v1596 = vmul.u32 %v1589, %v1580
    %v1597 = vadd.s32 %v1592, %v1594
    %vm1598 = vc.u32 %v1592, %v1594
    %v1599 = vadd.s32 %v1595, 1
    %v1600 = vsel %vm1598, %v1599, %v1595
    %v1601 = vadd.s32 %v1596, %v1600
    %v1602 = vadd.s32 %v1601, 536870912
    %v1603 = vshrl.u32 %v1602, 30
    %v1604 = vshll.u32 %v1603, 30
    %v1605 = vsub.s32 %v1601, %v1604
    %vm1606 = vcmp.lt.s32.totalorder %v1605, 0
    %v1607 = vsub.s32 0, %v1605
    %v1608 = vsel %vm1606, %v1607, %v1605
    %v1609 = vclz %v1608
    %v1610 = vsub.s32 %v1609, 2
    %vm1611 = vcmp.gt.s32.totalorder 0, %v1610
    %v1612 = vsel %vm1611, 0, %v1610
    %v1613 = vsub.s32 32, %v1612
    %v1614 = vshll.u32 %v1605, %v1612
    %v1615 = vshrl.u32 %v1597, %v1613
    %v1616 = vor.u32 %v1614, %v1615
    %v1617 = vsub.s32 4294967266, %v1612
    %v1618 = vadd.s32 %v1617, 127
    %v1619 = vshll.u32 %v1618, 23
    %v1620 = vor.u32 4788187, %v1619
    %v1621 = vand.u32 2147483647, %v1620
    %v1623 = vcvt.s32.f32 %v1616
    %v1624 = vmul.f32 %v1623, %v1621
    %v1625 = vxor.u32 %v1624, 2147483648
    %v1626 = vsel %vm1543, %v1625, %v1624
    %v1627 = vsub.s32 4, %v1603
    %v1628 = vsel %vm1543, %v1627, %v1603
    %v1629 = vsel %vm1542, %v1538, %v1626
    %v1630 = vsel %vm1542, 0, %v1628
    %v1631 = vcosq.f32.pop %v1629
    %v1632 = vsinq.f32.pop %v1629
    %vm1633 = vweird.f32 %v1538
    %v1634 = vadd.s32 %v1630, 3
    %v1635 = vand.u32 %v1634, 3
    %vm1636 = vcmp.lt.s32.totalorder %v1635, 2
    %vm1637 = vcmp.eq.s32.totalorder %v1635, 0
    %v1638 = vxor.u32 %v1632, 2147483648
    %v1639 = vsel %vm1637, %v1631, %v1638
    %vm1640 = vcmp.eq.s32.totalorder %v1635, 2
    %v1641 = vxor.u32 %v1631, 2147483648
    %v1642 = vsel %vm1640, %v1641, %v1632
    %v1643 = vsel %vm1636, %v1639, %v1642
    %v1644 = vsel %vm1633, nan, %v1643
    %v1645 = vmul.f32 %v45, %v1644
    %v1646 = vstv %s1428
    %v1647 = vmul.f32 %v1646, %v1540
    %v1648 = vadd.f32 %v1417, %v1647
    %v1649 = vsub.f32 %v1648, %v1537
    %v1650 = vmul.f32 %v1646, %v1645
    %v1651 = vadd.f32 %v1423, %v1650
    %v1652 = vsub.f32 %v1651, %v1539
    %v1653 = vand.u32 2147483647, %v1649
    %vm1654 = vcmp.le.f32.partialorder %v1653, 0.7853982
    %vm1655 = vcmp.lt.s32.totalorder %v1649, 0
    %v1656 = vand.u32 %v1649, 2139095040
    %v1657 = vshrl.u32 %v1656, 23
    %v1658 = vsub.s32 %v1657, 127
    %v1659 = vand.u32 2147483647, %v1649
    %v1660 = vand.u32 %v1659, 8388607
    %v1661 = vor.u32 %v1660, 8388608
    %v1662 = vsub.s32 0, %v1661
    %v1663 = vadd.s32 %v1658, 1
    %vm1664 = vcmp.gt.s32.totalorder %v1663, 0
    %v1665 = vsel %vm1664, %v1663, 0
    %v1666 = vshrl.u32 %v1665, 5
    %v1667 = vand.u32 %v1665, 31
    %v1668 = vsub.s32 32, %v1667
    %v1669 = vshrl.u32 683565275, %v1668
    %v1670 = vshll.u32 683565275, %v1667
    %v1671 = vshrl.u32 2475754826, %v1668
    %v1672 = vor.u32 %v1670, %v1671
    %v1673 = vshll.u32 2475754826, %v1667
    %v1674 = vshrl.u32 2131351028, %v1668
    %v1675 = vor.u32 %v1673, %v1674
    %v1676 = vshll.u32 2131351028, %v1667
    %v1677 = vshrl.u32 2102212464, %v1668
    %v1678 = vor.u32 %v1676, %v1677
    %v1679 = vshll.u32 2102212464, %v1667
    %v1680 = vshrl.u32 920167782, %v1668
    %v1681 = vor.u32 %v1679, %v1680
    %v1682 = vshll.u32 920167782, %v1667
    %v1683 = vshrl.u32 1326507024, %v1668
    %v1684 = vor.u32 %v1682, %v1683
    %vm1685 = vcmp.lt.s32.totalorder %v1666, 1
    %vm1686 = vcmp.lt.s32.totalorder %v1666, 2
    %vm1687 = vcmp.lt.s32.totalorder %v1666, 3
    %vm1688 = vcmp.lt.s32.totalorder %v1666, 4
    %v1689 = vsel %vm1685, %v1669, %v1672
    %v1690 = vsel %vm1688, %v1678, 2102212464
    %v1691 = vsel %vm1687, %v1675, %v1690
    %v1692 = vsel %vm1686, %v1689, %v1691
    %v1693 = vsel %vm1685, %v1672, %v1675
    %v1694 = vsel %vm1688, %v1681, 920167782
    %v1695 = vsel %vm1687, %v1678, %v1694
    %v1696 = vsel %vm1686, %v1693, %v1695
    %v1697 = vsel %vm1685, %v1675, %v1678
    %v1698 = vsel %vm1688, %v1684, 1326507024
    %v1699 = vsel %vm1687, %v1681, %v1698
    %v1700 = vsel %vm1686, %v1697, %v1699
    %v1701 = vshll.u32 %v1661, 8
    %v1702 = vmul.u32.u64.compose %v1701, %v1700
    %v1703 = vextract.low.u32 %v1702
    %v1704 = vextract.high.u32 %v1702
    %v1705 = vmul.u32.u64.compose %v1701, %v1696
    %v1706 = vextract.low.u32 %v1705
    %v1707 = vextract.high.u32 %v1705
    %v1708 = vmul.u32 %v1701, %v1692
    %v1709 = vadd.s32 %v1704, %v1706
    %vm1710 = vc.u32 %v1704, %v1706
    %v1711 = vadd.s32 %v1707, 1
    %v1712 = vsel %vm1710, %v1711, %v1707
    %v1713 = vadd.s32 %v1708, %v1712
    %v1714 = vadd.s32 %v1713, 536870912
    %v1715 = vshrl.u32 %v1714, 30
    %v1716 = vshll.u32 %v1715, 30
    %v1717 = vsub.s32 %v1713, %v1716
    %vm1718 = vcmp.lt.s32.totalorder %v1717, 0
    %v1719 = vsub.s32 0, %v1717
    %v1720 = vsel %vm1718, %v1719, %v1717
    %v1721 = vclz %v1720
    %v1722 = vsub.s32 %v1721, 2
    %vm1723 = vcmp.gt.s32.totalorder 0, %v1722
    %v1724 = vsel %vm1723, 0, %v1722
    %v1725 = vsub.s32 32, %v1724
    %v1726 = vshll.u32 %v1717, %v1724
    %v1727 = vshrl.u32 %v1709, %v1725
    %v1728 = vor.u32 %v1726, %v1727
    %v1729 = vsub.s32 4294967266, %v1724
    %v1730 = vadd.s32 %v1729, 127
    %v1731 = vshll.u32 %v1730, 23
    %v1732 = vor.u32 4788187, %v1731
    %v1733 = vand.u32 2147483647, %v1732
    %v1735 = vcvt.s32.f32 %v1728
    %v1736 = vmul.f32 %v1735, %v1733
    %v1737 = vxor.u32 %v1736, 2147483648
    %v1738 = vsel %vm1655, %v1737, %v1736
    %v1739 = vsub.s32 4, %v1715
    %v1740 = vsel %vm1655, %v1739, %v1715
    %v1741 = vsel %vm1654, %v1649, %v1738
    %v1742 = vsel %vm1654, 0, %v1740
    %v1743 = vcosq.f32.pop %v1741
    %v1744 = vsinq.f32.pop %v1741
    %vm1745 = vweird.f32 %v1649
    %v1746 = vadd.s32 %v1742, 3
    %v1747 = vand.u32 %v1746, 3
    %vm1748 = vcmp.lt.s32.totalorder %v1747, 2
    %vm1749 = vcmp.eq.s32.totalorder %v1747, 0
    %v1750 = vxor.u32 %v1744, 2147483648
    %v1751 = vsel %vm1749, %v1743, %v1750
    %vm1752 = vcmp.eq.s32.totalorder %v1747, 2
    %v1753 = vxor.u32 %v1743, 2147483648
    %v1754 = vsel %vm1752, %v1753, %v1744
    %v1755 = vsel %vm1748, %v1751, %v1754
    %v1756 = vsel %vm1745, nan, %v1755
    %v1757 = vmul.f32 %v45, %v1756
    %v1758 = vsub.f32 %v1423, %v1540
    %v1759 = vadd.f32 %v1758, %v1652
    %v1760 = vmul.f32 %v1646, %v1759
    %v1761 = vadd.f32 %v1417, %v1760
    %v1762 = vsub.f32 %v1535, %v1645
    %v1763 = vadd.f32 %v1762, %v1757
    %v1764 = vmul.f32 %v1646, %v1763
    %v1765 = vadd.f32 %v1423, %v1764
    %v1766 = vand.u32 2147483647, %v1761
    %vm1767 = vcmp.le.f32.partialorder %v1766, 0.7853982
    %vm1768 = vcmp.lt.s32.totalorder %v1761, 0
    %v1769 = vand.u32 %v1761, 2139095040
    %v1770 = vshrl.u32 %v1769, 23
    %v1771 = vsub.s32 %v1770, 127
    %v1772 = vand.u32 2147483647, %v1761
    %v1773 = vand.u32 %v1772, 8388607
    %v1774 = vor.u32 %v1773, 8388608
    %v1775 = vsub.s32 0, %v1774
    %v1776 = vadd.s32 %v1771, 1
    %vm1777 = vcmp.gt.s32.totalorder %v1776, 0
    %v1778 = vsel %vm1777, %v1776, 0
    %v1779 = vshrl.u32 %v1778, 5
    %v1780 = vand.u32 %v1778, 31
    %v1781 = vsub.s32 32, %v1780
    %v1782 = vshrl.u32 683565275, %v1781
    %v1783 = vshll.u32 683565275, %v1780
    %v1784 = vshrl.u32 2475754826, %v1781
    %v1785 = vor.u32 %v1783, %v1784
    %v1786 = vshll.u32 2475754826, %v1780
    %v1787 = vshrl.u32 2131351028, %v1781
    %v1788 = vor.u32 %v1786, %v1787
    %v1789 = vshll.u32 2131351028, %v1780
    %v1790 = vshrl.u32 2102212464, %v1781
    %v1791 = vor.u32 %v1789, %v1790
    %v1792 = vshll.u32 2102212464, %v1780
    %v1793 = vshrl.u32 920167782, %v1781
    %v1794 = vor.u32 %v1792, %v1793
    %v1795 = vshll.u32 920167782, %v1780
    %v1796 = vshrl.u32 1326507024, %v1781
    %v1797 = vor.u32 %v1795, %v1796
    %vm1798 = vcmp.lt.s32.totalorder %v1779, 1
    %vm1799 = vcmp.lt.s32.totalorder %v1779, 2
    %vm1800 = vcmp.lt.s32.totalorder %v1779, 3
    %vm1801 = vcmp.lt.s32.totalorder %v1779, 4
    %v1802 = vsel %vm1798, %v1782, %v1785
    %v1803 = vsel %vm1801, %v1791, 2102212464
    %v1804 = vsel %vm1800, %v1788, %v1803
    %v1805 = vsel %vm1799, %v1802, %v1804
    %v1806 = vsel %vm1798, %v1785, %v1788
    %v1807 = vsel %vm1801, %v1794, 920167782
    %v1808 = vsel %vm1800, %v1791, %v1807
    %v1809 = vsel %vm1799, %v1806, %v1808
    %v1810 = vsel %vm1798, %v1788, %v1791
    %v1811 = vsel %vm1801, %v1797, 1326507024
    %v1812 = vsel %vm1800, %v1794, %v1811
    %v1813 = vsel %vm1799, %v1810, %v1812
    %v1814 = vshll.u32 %v1774, 8
    %v1815 = vmul.u32.u64.compose %v1814, %v1813
    %v1816 = vextract.low.u32 %v1815
    %v1817 = vextract.high.u32 %v1815
    %v1818 = vmul.u32.u64.compose %v1814, %v1809
    %v1819 = vextract.low.u32 %v1818
    %v1820 = vextract.high.u32 %v1818
    %v1821 = vmul.u32 %v1814, %v1805
    %v1822 = vadd.s32 %v1817, %v1819
    %vm1823 = vc.u32 %v1817, %v1819
    %v1824 = vadd.s32 %v1820, 1
    %v1825 = vsel %vm1823, %v1824, %v1820
    %v1826 = vadd.s32 %v1821, %v1825
    %v1827 = vadd.s32 %v1826, 536870912
    %v1828 = vshrl.u32 %v1827, 30
    %v1829 = vshll.u32 %v1828, 30
    %v1830 = vsub.s32 %v1826, %v1829
    %vm1831 = vcmp.lt.s32.totalorder %v1830, 0
    %v1832 = vsub.s32 0, %v1830
    %v1833 = vsel %vm1831, %v1832, %v1830
    %v1834 = vclz %v1833
    %v1835 = vsub.s32 %v1834, 2
    %vm1836 = vcmp.gt.s32.totalorder 0, %v1835
    %v1837 = vsel %vm1836, 0, %v1835
    %v1838 = vsub.s32 32, %v1837
    %v1839 = vshll.u32 %v1830, %v1837
    %v1840 = vshrl.u32 %v1822, %v1838
    %v1841 = vor.u32 %v1839, %v1840
    %v1842 = vsub.s32 4294967266, %v1837
    %v1843 = vadd.s32 %v1842, 127
    %v1844 = vshll.u32 %v1843, 23
    %v1845 = vor.u32 4788187, %v1844
    %v1846 = vand.u32 2147483647, %v1845
    %v1848 = vcvt.s32.f32 %v1841
    %v1849 = vmul.f32 %v1848, %v1846
    %v1850 = vxor.u32 %v1849, 2147483648
    %v1851 = vsel %vm1768, %v1850, %v1849
    %v1852 = vsub.s32 4, %v1828
    %v1853 = vsel %vm1768, %v1852, %v1828
    %v1854 = vsel %vm1767, %v1761, %v1851
    %v1855 = vsel %vm1767, 0, %v1853
    %v1856 = vcosq.f32.pop %v1854
    %v1857 = vsinq.f32.pop %v1854
    %vm1858 = vweird.f32 %v1761
    %v1859 = vadd.s32 %v1855, 3
    %v1860 = vand.u32 %v1859, 3
    %vm1861 = vcmp.lt.s32.totalorder %v1860, 2
    %vm1862 = vcmp.eq.s32.totalorder %v1860, 0
    %v1863 = vxor.u32 %v1857, 2147483648
    %v1864 = vsel %vm1862, %v1856, %v1863
    %vm1865 = vcmp.eq.s32.totalorder %v1860, 2
    %v1866 = vxor.u32 %v1856, 2147483648
    %v1867 = vsel %vm1865, %v1866, %v1857
    %v1868 = vsel %vm1861, %v1864, %v1867
    %v1869 = vsel %vm1858, nan, %v1868
    %v1870 = vmul.f32 %v45, %v1869
    %v1871 = vadd.f32 %v1540, %v1652
    %v1872 = vmul.f32 %v1871, 3.0
    %v1873 = vadd.f32 %v1423, %v1872
    %v1874 = vadd.f32 %v1873, %v1765
    %v1875 = vstv %s1430
    %v1876 = vmul.f32 %v1875, %v1874
    %v1877 = vadd.f32 %v1417, %v1876
    %v1878 = vadd.f32 %v1645, %v1757
    %v1879 = vmul.f32 %v1878, 3.0
    %v1880 = vadd.f32 %v1535, %v1879
    %v1881 = vadd.f32 %v1880, %v1870
    %v1882 = vmul.f32 %v1875, %v1881
    %v1883 = vadd.f32 %v1423, %v1882
    %s1884 = scalar_lea.vmem [#allocation9], 32
    %1885 = vst [vmem:[%s1884] sm:$0xff] %v1877
    %s1886 = scalar_lea.vmem [#allocation10], 32
    %1887 = vst [vmem:[%s1886] sm:$0xff] %v1883
    %s1888 = sld [smem:[#allocation3 + $0x4]]
    %s1889 = sld [smem:[#allocation4 + $0x4]]
    %s1890 = sld [smem:[#allocation5 + $0x4]]
    %v1891 = vand.u32 2147483647, %v1877
    %vm1892 = vcmp.le.f32.partialorder %v1891, 0.7853982
    %vm1893 = vcmp.lt.s32.totalorder %v1877, 0
    %v1894 = vand.u32 %v1877, 2139095040
    %v1895 = vshrl.u32 %v1894, 23
    %v1896 = vsub.s32 %v1895, 127
    %v1897 = vand.u32 2147483647, %v1877
    %v1898 = vand.u32 %v1897, 8388607
    %v1899 = vor.u32 %v1898, 8388608
    %v1900 = vsub.s32 0, %v1899
    %v1901 = vadd.s32 %v1896, 1
    %vm1902 = vcmp.gt.s32.totalorder %v1901, 0
    %v1903 = vsel %vm1902, %v1901, 0
    %v1904 = vshrl.u32 %v1903, 5
    %v1905 = vand.u32 %v1903, 31
    %v1906 = vsub.s32 32, %v1905
    %v1907 = vshrl.u32 683565275, %v1906
    %v1908 = vshll.u32 683565275, %v1905
    %v1909 = vshrl.u32 2475754826, %v1906
    %v1910 = vor.u32 %v1908, %v1909
    %v1911 = vshll.u32 2475754826, %v1905
    %v1912 = vshrl.u32 2131351028, %v1906
    %v1913 = vor.u32 %v1911, %v1912
    %v1914 = vshll.u32 2131351028, %v1905
    %v1915 = vshrl.u32 2102212464, %v1906
    %v1916 = vor.u32 %v1914, %v1915
    %v1917 = vshll.u32 2102212464, %v1905
    %v1918 = vshrl.u32 920167782, %v1906
    %v1919 = vor.u32 %v1917, %v1918
    %v1920 = vshll.u32 920167782, %v1905
    %v1921 = vshrl.u32 1326507024, %v1906
    %v1922 = vor.u32 %v1920, %v1921
    %vm1923 = vcmp.lt.s32.totalorder %v1904, 1
    %vm1924 = vcmp.lt.s32.totalorder %v1904, 2
    %vm1925 = vcmp.lt.s32.totalorder %v1904, 3
    %vm1926 = vcmp.lt.s32.totalorder %v1904, 4
    %v1927 = vsel %vm1923, %v1907, %v1910
    %v1928 = vsel %vm1926, %v1916, 2102212464
    %v1929 = vsel %vm1925, %v1913, %v1928
    %v1930 = vsel %vm1924, %v1927, %v1929
    %v1931 = vsel %vm1923, %v1910, %v1913
    %v1932 = vsel %vm1926, %v1919, 920167782
    %v1933 = vsel %vm1925, %v1916, %v1932
    %v1934 = vsel %vm1924, %v1931, %v1933
    %v1935 = vsel %vm1923, %v1913, %v1916
    %v1936 = vsel %vm1926, %v1922, 1326507024
    %v1937 = vsel %vm1925, %v1919, %v1936
    %v1938 = vsel %vm1924, %v1935, %v1937
    %v1939 = vshll.u32 %v1899, 8
    %v1940 = vmul.u32.u64.compose %v1939, %v1938
    %v1941 = vextract.low.u32 %v1940
    %v1942 = vextract.high.u32 %v1940
    %v1943 = vmul.u32.u64.compose %v1939, %v1934
    %v1944 = vextract.low.u32 %v1943
    %v1945 = vextract.high.u32 %v1943
    %v1946 = vmul.u32 %v1939, %v1930
    %v1947 = vadd.s32 %v1942, %v1944
    %vm1948 = vc.u32 %v1942, %v1944
    %v1949 = vadd.s32 %v1945, 1
    %v1950 = vsel %vm1948, %v1949, %v1945
    %v1951 = vadd.s32 %v1946, %v1950
    %v1952 = vadd.s32 %v1951, 536870912
    %v1953 = vshrl.u32 %v1952, 30
    %v1954 = vshll.u32 %v1953, 30
    %v1955 = vsub.s32 %v1951, %v1954
    %vm1956 = vcmp.lt.s32.totalorder %v1955, 0
    %v1957 = vsub.s32 0, %v1955
    %v1958 = vsel %vm1956, %v1957, %v1955
    %v1959 = vclz %v1958
    %v1960 = vsub.s32 %v1959, 2
    %vm1961 = vcmp.gt.s32.totalorder 0, %v1960
    %v1962 = vsel %vm1961, 0, %v1960
    %v1963 = vsub.s32 32, %v1962
    %v1964 = vshll.u32 %v1955, %v1962
    %v1965 = vshrl.u32 %v1947, %v1963
    %v1966 = vor.u32 %v1964, %v1965
    %v1967 = vsub.s32 4294967266, %v1962
    %v1968 = vadd.s32 %v1967, 127
    %v1969 = vshll.u32 %v1968, 23
    %v1970 = vor.u32 4788187, %v1969
    %v1971 = vand.u32 2147483647, %v1970
    %v1973 = vcvt.s32.f32 %v1966
    %v1974 = vmul.f32 %v1973, %v1971
    %v1975 = vxor.u32 %v1974, 2147483648
    %v1976 = vsel %vm1893, %v1975, %v1974
    %v1977 = vsub.s32 4, %v1953
    %v1978 = vsel %vm1893, %v1977, %v1953
    %v1979 = vsel %vm1892, %v1877, %v1976
    %v1980 = vsel %vm1892, 0, %v1978
    %v1981 = vcosq.f32.pop %v1979
    %v1982 = vsinq.f32.pop %v1979
    %vm1983 = vweird.f32 %v1877
    %v1984 = vadd.s32 %v1980, 3
    %v1985 = vand.u32 %v1984, 3
    %vm1986 = vcmp.lt.s32.totalorder %v1985, 2
    %vm1987 = vcmp.eq.s32.totalorder %v1985, 0
    %v1988 = vxor.u32 %v1982, 2147483648
    %v1989 = vsel %vm1987, %v1981, %v1988
    %vm1990 = vcmp.eq.s32.totalorder %v1985, 2
    %v1991 = vxor.u32 %v1981, 2147483648
    %v1992 = vsel %vm1990, %v1991, %v1982
    %v1993 = vsel %vm1986, %v1989, %v1992
    %v1994 = vsel %vm1983, nan, %v1993
    %v1995 = vmul.f32 %v45, %v1994
    %v1996 = vstv %s1889
    %v1997 = vmul.f32 %v1996, %v1883
    %v1998 = vadd.f32 %v1877, %v1997
    %v1999 = vmul.f32 %v1996, %v1995
    %v2000 = vadd.f32 %v1883, %v1999
    %v2001 = vand.u32 2147483647, %v1998
    %vm2002 = vcmp.le.f32.partialorder %v2001, 0.7853982
    %vm2003 = vcmp.lt.s32.totalorder %v1998, 0
    %v2004 = vand.u32 %v1998, 2139095040
    %v2005 = vshrl.u32 %v2004, 23
    %v2006 = vsub.s32 %v2005, 127
    %v2007 = vand.u32 2147483647, %v1998
    %v2008 = vand.u32 %v2007, 8388607
    %v2009 = vor.u32 %v2008, 8388608
    %v2010 = vsub.s32 0, %v2009
    %v2011 = vadd.s32 %v2006, 1
    %vm2012 = vcmp.gt.s32.totalorder %v2011, 0
    %v2013 = vsel %vm2012, %v2011, 0
    %v2014 = vshrl.u32 %v2013, 5
    %v2015 = vand.u32 %v2013, 31
    %v2016 = vsub.s32 32, %v2015
    %v2017 = vshrl.u32 683565275, %v2016
    %v2018 = vshll.u32 683565275, %v2015
    %v2019 = vshrl.u32 2475754826, %v2016
    %v2020 = vor.u32 %v2018, %v2019
    %v2021 = vshll.u32 2475754826, %v2015
    %v2022 = vshrl.u32 2131351028, %v2016
    %v2023 = vor.u32 %v2021, %v2022
    %v2024 = vshll.u32 2131351028, %v2015
    %v2025 = vshrl.u32 2102212464, %v2016
    %v2026 = vor.u32 %v2024, %v2025
    %v2027 = vshll.u32 2102212464, %v2015
    %v2028 = vshrl.u32 920167782, %v2016
    %v2029 = vor.u32 %v2027, %v2028
    %v2030 = vshll.u32 920167782, %v2015
    %v2031 = vshrl.u32 1326507024, %v2016
    %v2032 = vor.u32 %v2030, %v2031
    %vm2033 = vcmp.lt.s32.totalorder %v2014, 1
    %vm2034 = vcmp.lt.s32.totalorder %v2014, 2
    %vm2035 = vcmp.lt.s32.totalorder %v2014, 3
    %vm2036 = vcmp.lt.s32.totalorder %v2014, 4
    %v2037 = vsel %vm2033, %v2017, %v2020
    %v2038 = vsel %vm2036, %v2026, 2102212464
    %v2039 = vsel %vm2035, %v2023, %v2038
    %v2040 = vsel %vm2034, %v2037, %v2039
    %v2041 = vsel %vm2033, %v2020, %v2023
    %v2042 = vsel %vm2036, %v2029, 920167782
    %v2043 = vsel %vm2035, %v2026, %v2042
    %v2044 = vsel %vm2034, %v2041, %v2043
    %v2045 = vsel %vm2033, %v2023, %v2026
    %v2046 = vsel %vm2036, %v2032, 1326507024
    %v2047 = vsel %vm2035, %v2029, %v2046
    %v2048 = vsel %vm2034, %v2045, %v2047
    %v2049 = vshll.u32 %v2009, 8
    %v2050 = vmul.u32.u64.compose %v2049, %v2048
    %v2051 = vextract.low.u32 %v2050
    %v2052 = vextract.high.u32 %v2050
    %v2053 = vmul.u32.u64.compose %v2049, %v2044
    %v2054 = vextract.low.u32 %v2053
    %v2055 = vextract.high.u32 %v2053
    %v2056 = vmul.u32 %v2049, %v2040
    %v2057 = vadd.s32 %v2052, %v2054
    %vm2058 = vc.u32 %v2052, %v2054
    %v2059 = vadd.s32 %v2055, 1
    %v2060 = vsel %vm2058, %v2059, %v2055
    %v2061 = vadd.s32 %v2056, %v2060
    %v2062 = vadd.s32 %v2061, 536870912
    %v2063 = vshrl.u32 %v2062, 30
    %v2064 = vshll.u32 %v2063, 30
    %v2065 = vsub.s32 %v2061, %v2064
    %vm2066 = vcmp.lt.s32.totalorder %v2065, 0
    %v2067 = vsub.s32 0, %v2065
    %v2068 = vsel %vm2066, %v2067, %v2065
    %v2069 = vclz %v2068
    %v2070 = vsub.s32 %v2069, 2
    %vm2071 = vcmp.gt.s32.totalorder 0, %v2070
    %v2072 = vsel %vm2071, 0, %v2070
    %v2073 = vsub.s32 32, %v2072
    %v2074 = vshll.u32 %v2065, %v2072
    %v2075 = vshrl.u32 %v2057, %v2073
    %v2076 = vor.u32 %v2074, %v2075
    %v2077 = vsub.s32 4294967266, %v2072
    %v2078 = vadd.s32 %v2077, 127
    %v2079 = vshll.u32 %v2078, 23
    %v2080 = vor.u32 4788187, %v2079
    %v2081 = vand.u32 2147483647, %v2080
    %v2083 = vcvt.s32.f32 %v2076
    %v2084 = vmul.f32 %v2083, %v2081
    %v2085 = vxor.u32 %v2084, 2147483648
    %v2086 = vsel %vm2003, %v2085, %v2084
    %v2087 = vsub.s32 4, %v2063
    %v2088 = vsel %vm2003, %v2087, %v2063
    %v2089 = vsel %vm2002, %v1998, %v2086
    %v2090 = vsel %vm2002, 0, %v2088
    %v2091 = vcosq.f32.pop %v2089
    %v2092 = vsinq.f32.pop %v2089
    %vm2093 = vweird.f32 %v1998
    %v2094 = vadd.s32 %v2090, 3
    %v2095 = vand.u32 %v2094, 3
    %vm2096 = vcmp.lt.s32.totalorder %v2095, 2
    %vm2097 = vcmp.eq.s32.totalorder %v2095, 0
    %v2098 = vxor.u32 %v2092, 2147483648
    %v2099 = vsel %vm2097, %v2091, %v2098
    %vm2100 = vcmp.eq.s32.totalorder %v2095, 2
    %v2101 = vxor.u32 %v2091, 2147483648
    %v2102 = vsel %vm2100, %v2101, %v2092
    %v2103 = vsel %vm2096, %v2099, %v2102
    %v2104 = vsel %vm2093, nan, %v2103
    %v2105 = vmul.f32 %v45, %v2104
    %v2106 = vstv %s1888
    %v2107 = vmul.f32 %v2106, %v2000
    %v2108 = vadd.f32 %v1877, %v2107
    %v2109 = vsub.f32 %v2108, %v1997
    %v2110 = vmul.f32 %v2106, %v2105
    %v2111 = vadd.f32 %v1883, %v2110
    %v2112 = vsub.f32 %v2111, %v1999
    %v2113 = vand.u32 2147483647, %v2109
    %vm2114 = vcmp.le.f32.partialorder %v2113, 0.7853982
    %vm2115 = vcmp.lt.s32.totalorder %v2109, 0
    %v2116 = vand.u32 %v2109, 2139095040
    %v2117 = vshrl.u32 %v2116, 23
    %v2118 = vsub.s32 %v2117, 127
    %v2119 = vand.u32 2147483647, %v2109
    %v2120 = vand.u32 %v2119, 8388607
    %v2121 = vor.u32 %v2120, 8388608
    %v2122 = vsub.s32 0, %v2121
    %v2123 = vadd.s32 %v2118, 1
    %vm2124 = vcmp.gt.s32.totalorder %v2123, 0
    %v2125 = vsel %vm2124, %v2123, 0
    %v2126 = vshrl.u32 %v2125, 5
    %v2127 = vand.u32 %v2125, 31
    %v2128 = vsub.s32 32, %v2127
    %v2129 = vshrl.u32 683565275, %v2128
    %v2130 = vshll.u32 683565275, %v2127
    %v2131 = vshrl.u32 2475754826, %v2128
    %v2132 = vor.u32 %v2130, %v2131
    %v2133 = vshll.u32 2475754826, %v2127
    %v2134 = vshrl.u32 2131351028, %v2128
    %v2135 = vor.u32 %v2133, %v2134
    %v2136 = vshll.u32 2131351028, %v2127
    %v2137 = vshrl.u32 2102212464, %v2128
    %v2138 = vor.u32 %v2136, %v2137
    %v2139 = vshll.u32 2102212464, %v2127
    %v2140 = vshrl.u32 920167782, %v2128
    %v2141 = vor.u32 %v2139, %v2140
    %v2142 = vshll.u32 920167782, %v2127
    %v2143 = vshrl.u32 1326507024, %v2128
    %v2144 = vor.u32 %v2142, %v2143
    %vm2145 = vcmp.lt.s32.totalorder %v2126, 1
    %vm2146 = vcmp.lt.s32.totalorder %v2126, 2
    %vm2147 = vcmp.lt.s32.totalorder %v2126, 3
    %vm2148 = vcmp.lt.s32.totalorder %v2126, 4
    %v2149 = vsel %vm2145, %v2129, %v2132
    %v2150 = vsel %vm2148, %v2138, 2102212464
    %v2151 = vsel %vm2147, %v2135, %v2150
    %v2152 = vsel %vm2146, %v2149, %v2151
    %v2153 = vsel %vm2145, %v2132, %v2135
    %v2154 = vsel %vm2148, %v2141, 920167782
    %v2155 = vsel %vm2147, %v2138, %v2154
    %v2156 = vsel %vm2146, %v2153, %v2155
    %v2157 = vsel %vm2145, %v2135, %v2138
    %v2158 = vsel %vm2148, %v2144, 1326507024
    %v2159 = vsel %vm2147, %v2141, %v2158
    %v2160 = vsel %vm2146, %v2157, %v2159
    %v2161 = vshll.u32 %v2121, 8
    %v2162 = vmul.u32.u64.compose %v2161, %v2160
    %v2163 = vextract.low.u32 %v2162
    %v2164 = vextract.high.u32 %v2162
    %v2165 = vmul.u32.u64.compose %v2161, %v2156
    %v2166 = vextract.low.u32 %v2165
    %v2167 = vextract.high.u32 %v2165
    %v2168 = vmul.u32 %v2161, %v2152
    %v2169 = vadd.s32 %v2164, %v2166
    %vm2170 = vc.u32 %v2164, %v2166
    %v2171 = vadd.s32 %v2167, 1
    %v2172 = vsel %vm2170, %v2171, %v2167
    %v2173 = vadd.s32 %v2168, %v2172
    %v2174 = vadd.s32 %v2173, 536870912
    %v2175 = vshrl.u32 %v2174, 30
    %v2176 = vshll.u32 %v2175, 30
    %v2177 = vsub.s32 %v2173, %v2176
    %vm2178 = vcmp.lt.s32.totalorder %v2177, 0
    %v2179 = vsub.s32 0, %v2177
    %v2180 = vsel %vm2178, %v2179, %v2177
    %v2181 = vclz %v2180
    %v2182 = vsub.s32 %v2181, 2
    %vm2183 = vcmp.gt.s32.totalorder 0, %v2182
    %v2184 = vsel %vm2183, 0, %v2182
    %v2185 = vsub.s32 32, %v2184
    %v2186 = vshll.u32 %v2177, %v2184
    %v2187 = vshrl.u32 %v2169, %v2185
    %v2188 = vor.u32 %v2186, %v2187
    %v2189 = vsub.s32 4294967266, %v2184
    %v2190 = vadd.s32 %v2189, 127
    %v2191 = vshll.u32 %v2190, 23
    %v2192 = vor.u32 4788187, %v2191
    %v2193 = vand.u32 2147483647, %v2192
    %v2195 = vcvt.s32.f32 %v2188
    %v2196 = vmul.f32 %v2195, %v2193
    %v2197 = vxor.u32 %v2196, 2147483648
    %v2198 = vsel %vm2115, %v2197, %v2196
    %v2199 = vsub.s32 4, %v2175
    %v2200 = vsel %vm2115, %v2199, %v2175
    %v2201 = vsel %vm2114, %v2109, %v2198
    %v2202 = vsel %vm2114, 0, %v2200
    %v2203 = vcosq.f32.pop %v2201
    %v2204 = vsinq.f32.pop %v2201
    %vm2205 = vweird.f32 %v2109
    %v2206 = vadd.s32 %v2202, 3
    %v2207 = vand.u32 %v2206, 3
    %vm2208 = vcmp.lt.s32.totalorder %v2207, 2
    %vm2209 = vcmp.eq.s32.totalorder %v2207, 0
    %v2210 = vxor.u32 %v2204, 2147483648
    %v2211 = vsel %vm2209, %v2203, %v2210
    %vm2212 = vcmp.eq.s32.totalorder %v2207, 2
    %v2213 = vxor.u32 %v2203, 2147483648
    %v2214 = vsel %vm2212, %v2213, %v2204
    %v2215 = vsel %vm2208, %v2211, %v2214
    %v2216 = vsel %vm2205, nan, %v2215
    %v2217 = vmul.f32 %v45, %v2216
    %v2218 = vsub.f32 %v1883, %v2000
    %v2219 = vadd.f32 %v2218, %v2112
    %v2220 = vmul.f32 %v2106, %v2219
    %v2221 = vadd.f32 %v1877, %v2220
    %v2222 = vsub.f32 %v1995, %v2105
    %v2223 = vadd.f32 %v2222, %v2217
    %v2224 = vmul.f32 %v2106, %v2223
    %v2225 = vadd.f32 %v1883, %v2224
    %v2226 = vand.u32 2147483647, %v2221
    %vm2227 = vcmp.le.f32.partialorder %v2226, 0.7853982
    %vm2228 = vcmp.lt.s32.totalorder %v2221, 0
    %v2229 = vand.u32 %v2221, 2139095040
    %v2230 = vshrl.u32 %v2229, 23
    %v2231 = vsub.s32 %v2230, 127
    %v2232 = vand.u32 2147483647, %v2221
    %v2233 = vand.u32 %v2232, 8388607
    %v2234 = vor.u32 %v2233, 8388608
    %v2235 = vsub.s32 0, %v2234
    %v2236 = vadd.s32 %v2231, 1
    %vm2237 = vcmp.gt.s32.totalorder %v2236, 0
    %v2238 = vsel %vm2237, %v2236, 0
    %v2239 = vshrl.u32 %v2238, 5
    %v2240 = vand.u32 %v2238, 31
    %v2241 = vsub.s32 32, %v2240
    %v2242 = vshrl.u32 683565275, %v2241
    %v2243 = vshll.u32 683565275, %v2240
    %v2244 = vshrl.u32 2475754826, %v2241
    %v2245 = vor.u32 %v2243, %v2244
    %v2246 = vshll.u32 2475754826, %v2240
    %v2247 = vshrl.u32 2131351028, %v2241
    %v2248 = vor.u32 %v2246, %v2247
    %v2249 = vshll.u32 2131351028, %v2240
    %v2250 = vshrl.u32 2102212464, %v2241
    %v2251 = vor.u32 %v2249, %v2250
    %v2252 = vshll.u32 2102212464, %v2240
    %v2253 = vshrl.u32 920167782, %v2241
    %v2254 = vor.u32 %v2252, %v2253
    %v2255 = vshll.u32 920167782, %v2240
    %v2256 = vshrl.u32 1326507024, %v2241
    %v2257 = vor.u32 %v2255, %v2256
    %vm2258 = vcmp.lt.s32.totalorder %v2239, 1
    %vm2259 = vcmp.lt.s32.totalorder %v2239, 2
    %vm2260 = vcmp.lt.s32.totalorder %v2239, 3
    %vm2261 = vcmp.lt.s32.totalorder %v2239, 4
    %v2262 = vsel %vm2258, %v2242, %v2245
    %v2263 = vsel %vm2261, %v2251, 2102212464
    %v2264 = vsel %vm2260, %v2248, %v2263
    %v2265 = vsel %vm2259, %v2262, %v2264
    %v2266 = vsel %vm2258, %v2245, %v2248
    %v2267 = vsel %vm2261, %v2254, 920167782
    %v2268 = vsel %vm2260, %v2251, %v2267
    %v2269 = vsel %vm2259, %v2266, %v2268
    %v2270 = vsel %vm2258, %v2248, %v2251
    %v2271 = vsel %vm2261, %v2257, 1326507024
    %v2272 = vsel %vm2260, %v2254, %v2271
    %v2273 = vsel %vm2259, %v2270, %v2272
    %v2274 = vshll.u32 %v2234, 8
    %v2275 = vmul.u32.u64.compose %v2274, %v2273
    %v2276 = vextract.low.u32 %v2275
    %v2277 = vextract.high.u32 %v2275
    %v2278 = vmul.u32.u64.compose %v2274, %v2269
    %v2279 = vextract.low.u32 %v2278
    %v2280 = vextract.high.u32 %v2278
    %v2281 = vmul.u32 %v2274, %v2265
    %v2282 = vadd.s32 %v2277, %v2279
    %vm2283 = vc.u32 %v2277, %v2279
    %v2284 = vadd.s32 %v2280, 1
    %v2285 = vsel %vm2283, %v2284, %v2280
    %v2286 = vadd.s32 %v2281, %v2285
    %v2287 = vadd.s32 %v2286, 536870912
    %v2288 = vshrl.u32 %v2287, 30
    %v2289 = vshll.u32 %v2288, 30
    %v2290 = vsub.s32 %v2286, %v2289
    %vm2291 = vcmp.lt.s32.totalorder %v2290, 0
    %v2292 = vsub.s32 0, %v2290
    %v2293 = vsel %vm2291, %v2292, %v2290
    %v2294 = vclz %v2293
    %v2295 = vsub.s32 %v2294, 2
    %vm2296 = vcmp.gt.s32.totalorder 0, %v2295
    %v2297 = vsel %vm2296, 0, %v2295
    %v2298 = vsub.s32 32, %v2297
    %v2299 = vshll.u32 %v2290, %v2297
    %v2300 = vshrl.u32 %v2282, %v2298
    %v2301 = vor.u32 %v2299, %v2300
    %v2302 = vsub.s32 4294967266, %v2297
    %v2303 = vadd.s32 %v2302, 127
    %v2304 = vshll.u32 %v2303, 23
    %v2305 = vor.u32 4788187, %v2304
    %v2306 = vand.u32 2147483647, %v2305
    %v2308 = vcvt.s32.f32 %v2301
    %v2309 = vmul.f32 %v2308, %v2306
    %v2310 = vxor.u32 %v2309, 2147483648
    %v2311 = vsel %vm2228, %v2310, %v2309
    %v2312 = vsub.s32 4, %v2288
    %v2313 = vsel %vm2228, %v2312, %v2288
    %v2314 = vsel %vm2227, %v2221, %v2311
    %v2315 = vsel %vm2227, 0, %v2313
    %v2316 = vcosq.f32.pop %v2314
    %v2317 = vsinq.f32.pop %v2314
    %vm2318 = vweird.f32 %v2221
    %v2319 = vadd.s32 %v2315, 3
    %v2320 = vand.u32 %v2319, 3
    %vm2321 = vcmp.lt.s32.totalorder %v2320, 2
    %vm2322 = vcmp.eq.s32.totalorder %v2320, 0
    %v2323 = vxor.u32 %v2317, 2147483648
    %v2324 = vsel %vm2322, %v2316, %v2323
    %vm2325 = vcmp.eq.s32.totalorder %v2320, 2
    %v2326 = vxor.u32 %v2316, 2147483648
    %v2327 = vsel %vm2325, %v2326, %v2317
    %v2328 = vsel %vm2321, %v2324, %v2327
    %v2329 = vsel %vm2318, nan, %v2328
    %v2330 = vmul.f32 %v45, %v2329
    %v2331 = vadd.f32 %v2000, %v2112
    %v2332 = vmul.f32 %v2331, 3.0
    %v2333 = vadd.f32 %v1883, %v2332
    %v2334 = vadd.f32 %v2333, %v2225
    %v2335 = vstv %s1890
    %v2336 = vmul.f32 %v2335, %v2334
    %v2337 = vadd.f32 %v1877, %v2336
    %v2338 = vadd.f32 %v2105, %v2217
    %v2339 = vmul.f32 %v2338, 3.0
    %v2340 = vadd.f32 %v1995, %v2339
    %v2341 = vadd.f32 %v2340, %v2330
    %v2342 = vmul.f32 %v2335, %v2341
    %v2343 = vadd.f32 %v1883, %v2342
    %s2344 = scalar_lea.vmem [#allocation9], 40
    %2345 = vst [vmem:[%s2344] sm:$0xff] %v2337
    %s2346 = scalar_lea.vmem [#allocation10], 40
    %2347 = vst [vmem:[%s2346] sm:$0xff] %v2343
    %s2348 = sld [smem:[#allocation3 + $0x5]]
    %s2349 = sld [smem:[#allocation4 + $0x5]]
    %s2350 = sld [smem:[#allocation5 + $0x5]]
    %v2351 = vand.u32 2147483647, %v2337
    %vm2352 = vcmp.le.f32.partialorder %v2351, 0.7853982
    %vm2353 = vcmp.lt.s32.totalorder %v2337, 0
    %v2354 = vand.u32 %v2337, 2139095040
    %v2355 = vshrl.u32 %v2354, 23
    %v2356 = vsub.s32 %v2355, 127
    %v2357 = vand.u32 2147483647, %v2337
    %v2358 = vand.u32 %v2357, 8388607
    %v2359 = vor.u32 %v2358, 8388608
    %v2360 = vsub.s32 0, %v2359
    %v2361 = vadd.s32 %v2356, 1
    %vm2362 = vcmp.gt.s32.totalorder %v2361, 0
    %v2363 = vsel %vm2362, %v2361, 0
    %v2364 = vshrl.u32 %v2363, 5
    %v2365 = vand.u32 %v2363, 31
    %v2366 = vsub.s32 32, %v2365
    %v2367 = vshrl.u32 683565275, %v2366
    %v2368 = vshll.u32 683565275, %v2365
    %v2369 = vshrl.u32 2475754826, %v2366
    %v2370 = vor.u32 %v2368, %v2369
    %v2371 = vshll.u32 2475754826, %v2365
    %v2372 = vshrl.u32 2131351028, %v2366
    %v2373 = vor.u32 %v2371, %v2372
    %v2374 = vshll.u32 2131351028, %v2365
    %v2375 = vshrl.u32 2102212464, %v2366
    %v2376 = vor.u32 %v2374, %v2375
    %v2377 = vshll.u32 2102212464, %v2365
    %v2378 = vshrl.u32 920167782, %v2366
    %v2379 = vor.u32 %v2377, %v2378
    %v2380 = vshll.u32 920167782, %v2365
    %v2381 = vshrl.u32 1326507024, %v2366
    %v2382 = vor.u32 %v2380, %v2381
    %vm2383 = vcmp.lt.s32.totalorder %v2364, 1
    %vm2384 = vcmp.lt.s32.totalorder %v2364, 2
    %vm2385 = vcmp.lt.s32.totalorder %v2364, 3
    %vm2386 = vcmp.lt.s32.totalorder %v2364, 4
    %v2387 = vsel %vm2383, %v2367, %v2370
    %v2388 = vsel %vm2386, %v2376, 2102212464
    %v2389 = vsel %vm2385, %v2373, %v2388
    %v2390 = vsel %vm2384, %v2387, %v2389
    %v2391 = vsel %vm2383, %v2370, %v2373
    %v2392 = vsel %vm2386, %v2379, 920167782
    %v2393 = vsel %vm2385, %v2376, %v2392
    %v2394 = vsel %vm2384, %v2391, %v2393
    %v2395 = vsel %vm2383, %v2373, %v2376
    %v2396 = vsel %vm2386, %v2382, 1326507024
    %v2397 = vsel %vm2385, %v2379, %v2396
    %v2398 = vsel %vm2384, %v2395, %v2397
    %v2399 = vshll.u32 %v2359, 8
    %v2400 = vmul.u32.u64.compose %v2399, %v2398
    %v2401 = vextract.low.u32 %v2400
    %v2402 = vextract.high.u32 %v2400
    %v2403 = vmul.u32.u64.compose %v2399, %v2394
    %v2404 = vextract.low.u32 %v2403
    %v2405 = vextract.high.u32 %v2403
    %v2406 = vmul.u32 %v2399, %v2390
    %v2407 = vadd.s32 %v2402, %v2404
    %vm2408 = vc.u32 %v2402, %v2404
    %v2409 = vadd.s32 %v2405, 1
    %v2410 = vsel %vm2408, %v2409, %v2405
    %v2411 = vadd.s32 %v2406, %v2410
    %v2412 = vadd.s32 %v2411, 536870912
    %v2413 = vshrl.u32 %v2412, 30
    %v2414 = vshll.u32 %v2413, 30
    %v2415 = vsub.s32 %v2411, %v2414
    %vm2416 = vcmp.lt.s32.totalorder %v2415, 0
    %v2417 = vsub.s32 0, %v2415
    %v2418 = vsel %vm2416, %v2417, %v2415
    %v2419 = vclz %v2418
    %v2420 = vsub.s32 %v2419, 2
    %vm2421 = vcmp.gt.s32.totalorder 0, %v2420
    %v2422 = vsel %vm2421, 0, %v2420
    %v2423 = vsub.s32 32, %v2422
    %v2424 = vshll.u32 %v2415, %v2422
    %v2425 = vshrl.u32 %v2407, %v2423
    %v2426 = vor.u32 %v2424, %v2425
    %v2427 = vsub.s32 4294967266, %v2422
    %v2428 = vadd.s32 %v2427, 127
    %v2429 = vshll.u32 %v2428, 23
    %v2430 = vor.u32 4788187, %v2429
    %v2431 = vand.u32 2147483647, %v2430
    %v2433 = vcvt.s32.f32 %v2426
    %v2434 = vmul.f32 %v2433, %v2431
    %v2435 = vxor.u32 %v2434, 2147483648
    %v2436 = vsel %vm2353, %v2435, %v2434
    %v2437 = vsub.s32 4, %v2413
    %v2438 = vsel %vm2353, %v2437, %v2413
    %v2439 = vsel %vm2352, %v2337, %v2436
    %v2440 = vsel %vm2352, 0, %v2438
    %v2441 = vcosq.f32.pop %v2439
    %v2442 = vsinq.f32.pop %v2439
    %vm2443 = vweird.f32 %v2337
    %v2444 = vadd.s32 %v2440, 3
    %v2445 = vand.u32 %v2444, 3
    %vm2446 = vcmp.lt.s32.totalorder %v2445, 2
    %vm2447 = vcmp.eq.s32.totalorder %v2445, 0
    %v2448 = vxor.u32 %v2442, 2147483648
    %v2449 = vsel %vm2447, %v2441, %v2448
    %vm2450 = vcmp.eq.s32.totalorder %v2445, 2
    %v2451 = vxor.u32 %v2441, 2147483648
    %v2452 = vsel %vm2450, %v2451, %v2442
    %v2453 = vsel %vm2446, %v2449, %v2452
    %v2454 = vsel %vm2443, nan, %v2453
    %v2455 = vmul.f32 %v45, %v2454
    %v2456 = vstv %s2349
    %v2457 = vmul.f32 %v2456, %v2343
    %v2458 = vadd.f32 %v2337, %v2457
    %v2459 = vmul.f32 %v2456, %v2455
    %v2460 = vadd.f32 %v2343, %v2459
    %v2461 = vand.u32 2147483647, %v2458
    %vm2462 = vcmp.le.f32.partialorder %v2461, 0.7853982
    %vm2463 = vcmp.lt.s32.totalorder %v2458, 0
    %v2464 = vand.u32 %v2458, 2139095040
    %v2465 = vshrl.u32 %v2464, 23
    %v2466 = vsub.s32 %v2465, 127
    %v2467 = vand.u32 2147483647, %v2458
    %v2468 = vand.u32 %v2467, 8388607
    %v2469 = vor.u32 %v2468, 8388608
    %v2470 = vsub.s32 0, %v2469
    %v2471 = vadd.s32 %v2466, 1
    %vm2472 = vcmp.gt.s32.totalorder %v2471, 0
    %v2473 = vsel %vm2472, %v2471, 0
    %v2474 = vshrl.u32 %v2473, 5
    %v2475 = vand.u32 %v2473, 31
    %v2476 = vsub.s32 32, %v2475
    %v2477 = vshrl.u32 683565275, %v2476
    %v2478 = vshll.u32 683565275, %v2475
    %v2479 = vshrl.u32 2475754826, %v2476
    %v2480 = vor.u32 %v2478, %v2479
    %v2481 = vshll.u32 2475754826, %v2475
    %v2482 = vshrl.u32 2131351028, %v2476
    %v2483 = vor.u32 %v2481, %v2482
    %v2484 = vshll.u32 2131351028, %v2475
    %v2485 = vshrl.u32 2102212464, %v2476
    %v2486 = vor.u32 %v2484, %v2485
    %v2487 = vshll.u32 2102212464, %v2475
    %v2488 = vshrl.u32 920167782, %v2476
    %v2489 = vor.u32 %v2487, %v2488
    %v2490 = vshll.u32 920167782, %v2475
    %v2491 = vshrl.u32 1326507024, %v2476
    %v2492 = vor.u32 %v2490, %v2491
    %vm2493 = vcmp.lt.s32.totalorder %v2474, 1
    %vm2494 = vcmp.lt.s32.totalorder %v2474, 2
    %vm2495 = vcmp.lt.s32.totalorder %v2474, 3
    %vm2496 = vcmp.lt.s32.totalorder %v2474, 4
    %v2497 = vsel %vm2493, %v2477, %v2480
    %v2498 = vsel %vm2496, %v2486, 2102212464
    %v2499 = vsel %vm2495, %v2483, %v2498
    %v2500 = vsel %vm2494, %v2497, %v2499
    %v2501 = vsel %vm2493, %v2480, %v2483
    %v2502 = vsel %vm2496, %v2489, 920167782
    %v2503 = vsel %vm2495, %v2486, %v2502
    %v2504 = vsel %vm2494, %v2501, %v2503
    %v2505 = vsel %vm2493, %v2483, %v2486
    %v2506 = vsel %vm2496, %v2492, 1326507024
    %v2507 = vsel %vm2495, %v2489, %v2506
    %v2508 = vsel %vm2494, %v2505, %v2507
    %v2509 = vshll.u32 %v2469, 8
    %v2510 = vmul.u32.u64.compose %v2509, %v2508
    %v2511 = vextract.low.u32 %v2510
    %v2512 = vextract.high.u32 %v2510
    %v2513 = vmul.u32.u64.compose %v2509, %v2504
    %v2514 = vextract.low.u32 %v2513
    %v2515 = vextract.high.u32 %v2513
    %v2516 = vmul.u32 %v2509, %v2500
    %v2517 = vadd.s32 %v2512, %v2514
    %vm2518 = vc.u32 %v2512, %v2514
    %v2519 = vadd.s32 %v2515, 1
    %v2520 = vsel %vm2518, %v2519, %v2515
    %v2521 = vadd.s32 %v2516, %v2520
    %v2522 = vadd.s32 %v2521, 536870912
    %v2523 = vshrl.u32 %v2522, 30
    %v2524 = vshll.u32 %v2523, 30
    %v2525 = vsub.s32 %v2521, %v2524
    %vm2526 = vcmp.lt.s32.totalorder %v2525, 0
    %v2527 = vsub.s32 0, %v2525
    %v2528 = vsel %vm2526, %v2527, %v2525
    %v2529 = vclz %v2528
    %v2530 = vsub.s32 %v2529, 2
    %vm2531 = vcmp.gt.s32.totalorder 0, %v2530
    %v2532 = vsel %vm2531, 0, %v2530
    %v2533 = vsub.s32 32, %v2532
    %v2534 = vshll.u32 %v2525, %v2532
    %v2535 = vshrl.u32 %v2517, %v2533
    %v2536 = vor.u32 %v2534, %v2535
    %v2537 = vsub.s32 4294967266, %v2532
    %v2538 = vadd.s32 %v2537, 127
    %v2539 = vshll.u32 %v2538, 23
    %v2540 = vor.u32 4788187, %v2539
    %v2541 = vand.u32 2147483647, %v2540
    %v2543 = vcvt.s32.f32 %v2536
    %v2544 = vmul.f32 %v2543, %v2541
    %v2545 = vxor.u32 %v2544, 2147483648
    %v2546 = vsel %vm2463, %v2545, %v2544
    %v2547 = vsub.s32 4, %v2523
    %v2548 = vsel %vm2463, %v2547, %v2523
    %v2549 = vsel %vm2462, %v2458, %v2546
    %v2550 = vsel %vm2462, 0, %v2548
    %v2551 = vcosq.f32.pop %v2549
    %v2552 = vsinq.f32.pop %v2549
    %vm2553 = vweird.f32 %v2458
    %v2554 = vadd.s32 %v2550, 3
    %v2555 = vand.u32 %v2554, 3
    %vm2556 = vcmp.lt.s32.totalorder %v2555, 2
    %vm2557 = vcmp.eq.s32.totalorder %v2555, 0
    %v2558 = vxor.u32 %v2552, 2147483648
    %v2559 = vsel %vm2557, %v2551, %v2558
    %vm2560 = vcmp.eq.s32.totalorder %v2555, 2
    %v2561 = vxor.u32 %v2551, 2147483648
    %v2562 = vsel %vm2560, %v2561, %v2552
    %v2563 = vsel %vm2556, %v2559, %v2562
    %v2564 = vsel %vm2553, nan, %v2563
    %v2565 = vmul.f32 %v45, %v2564
    %v2566 = vstv %s2348
    %v2567 = vmul.f32 %v2566, %v2460
    %v2568 = vadd.f32 %v2337, %v2567
    %v2569 = vsub.f32 %v2568, %v2457
    %v2570 = vmul.f32 %v2566, %v2565
    %v2571 = vadd.f32 %v2343, %v2570
    %v2572 = vsub.f32 %v2571, %v2459
    %v2573 = vand.u32 2147483647, %v2569
    %vm2574 = vcmp.le.f32.partialorder %v2573, 0.7853982
    %vm2575 = vcmp.lt.s32.totalorder %v2569, 0
    %v2576 = vand.u32 %v2569, 2139095040
    %v2577 = vshrl.u32 %v2576, 23
    %v2578 = vsub.s32 %v2577, 127
    %v2579 = vand.u32 2147483647, %v2569
    %v2580 = vand.u32 %v2579, 8388607
    %v2581 = vor.u32 %v2580, 8388608
    %v2582 = vsub.s32 0, %v2581
    %v2583 = vadd.s32 %v2578, 1
    %vm2584 = vcmp.gt.s32.totalorder %v2583, 0
    %v2585 = vsel %vm2584, %v2583, 0
    %v2586 = vshrl.u32 %v2585, 5
    %v2587 = vand.u32 %v2585, 31
    %v2588 = vsub.s32 32, %v2587
    %v2589 = vshrl.u32 683565275, %v2588
    %v2590 = vshll.u32 683565275, %v2587
    %v2591 = vshrl.u32 2475754826, %v2588
    %v2592 = vor.u32 %v2590, %v2591
    %v2593 = vshll.u32 2475754826, %v2587
    %v2594 = vshrl.u32 2131351028, %v2588
    %v2595 = vor.u32 %v2593, %v2594
    %v2596 = vshll.u32 2131351028, %v2587
    %v2597 = vshrl.u32 2102212464, %v2588
    %v2598 = vor.u32 %v2596, %v2597
    %v2599 = vshll.u32 2102212464, %v2587
    %v2600 = vshrl.u32 920167782, %v2588
    %v2601 = vor.u32 %v2599, %v2600
    %v2602 = vshll.u32 920167782, %v2587
    %v2603 = vshrl.u32 1326507024, %v2588
    %v2604 = vor.u32 %v2602, %v2603
    %vm2605 = vcmp.lt.s32.totalorder %v2586, 1
    %vm2606 = vcmp.lt.s32.totalorder %v2586, 2
    %vm2607 = vcmp.lt.s32.totalorder %v2586, 3
    %vm2608 = vcmp.lt.s32.totalorder %v2586, 4
    %v2609 = vsel %vm2605, %v2589, %v2592
    %v2610 = vsel %vm2608, %v2598, 2102212464
    %v2611 = vsel %vm2607, %v2595, %v2610
    %v2612 = vsel %vm2606, %v2609, %v2611
    %v2613 = vsel %vm2605, %v2592, %v2595
    %v2614 = vsel %vm2608, %v2601, 920167782
    %v2615 = vsel %vm2607, %v2598, %v2614
    %v2616 = vsel %vm2606, %v2613, %v2615
    %v2617 = vsel %vm2605, %v2595, %v2598
    %v2618 = vsel %vm2608, %v2604, 1326507024
    %v2619 = vsel %vm2607, %v2601, %v2618
    %v2620 = vsel %vm2606, %v2617, %v2619
    %v2621 = vshll.u32 %v2581, 8
    %v2622 = vmul.u32.u64.compose %v2621, %v2620
    %v2623 = vextract.low.u32 %v2622
    %v2624 = vextract.high.u32 %v2622
    %v2625 = vmul.u32.u64.compose %v2621, %v2616
    %v2626 = vextract.low.u32 %v2625
    %v2627 = vextract.high.u32 %v2625
    %v2628 = vmul.u32 %v2621, %v2612
    %v2629 = vadd.s32 %v2624, %v2626
    %vm2630 = vc.u32 %v2624, %v2626
    %v2631 = vadd.s32 %v2627, 1
    %v2632 = vsel %vm2630, %v2631, %v2627
    %v2633 = vadd.s32 %v2628, %v2632
    %v2634 = vadd.s32 %v2633, 536870912
    %v2635 = vshrl.u32 %v2634, 30
    %v2636 = vshll.u32 %v2635, 30
    %v2637 = vsub.s32 %v2633, %v2636
    %vm2638 = vcmp.lt.s32.totalorder %v2637, 0
    %v2639 = vsub.s32 0, %v2637
    %v2640 = vsel %vm2638, %v2639, %v2637
    %v2641 = vclz %v2640
    %v2642 = vsub.s32 %v2641, 2
    %vm2643 = vcmp.gt.s32.totalorder 0, %v2642
    %v2644 = vsel %vm2643, 0, %v2642
    %v2645 = vsub.s32 32, %v2644
    %v2646 = vshll.u32 %v2637, %v2644
    %v2647 = vshrl.u32 %v2629, %v2645
    %v2648 = vor.u32 %v2646, %v2647
    %v2649 = vsub.s32 4294967266, %v2644
    %v2650 = vadd.s32 %v2649, 127
    %v2651 = vshll.u32 %v2650, 23
    %v2652 = vor.u32 4788187, %v2651
    %v2653 = vand.u32 2147483647, %v2652
    %v2655 = vcvt.s32.f32 %v2648
    %v2656 = vmul.f32 %v2655, %v2653
    %v2657 = vxor.u32 %v2656, 2147483648
    %v2658 = vsel %vm2575, %v2657, %v2656
    %v2659 = vsub.s32 4, %v2635
    %v2660 = vsel %vm2575, %v2659, %v2635
    %v2661 = vsel %vm2574, %v2569, %v2658
    %v2662 = vsel %vm2574, 0, %v2660
    %v2663 = vcosq.f32.pop %v2661
    %v2664 = vsinq.f32.pop %v2661
    %vm2665 = vweird.f32 %v2569
    %v2666 = vadd.s32 %v2662, 3
    %v2667 = vand.u32 %v2666, 3
    %vm2668 = vcmp.lt.s32.totalorder %v2667, 2
    %vm2669 = vcmp.eq.s32.totalorder %v2667, 0
    %v2670 = vxor.u32 %v2664, 2147483648
    %v2671 = vsel %vm2669, %v2663, %v2670
    %vm2672 = vcmp.eq.s32.totalorder %v2667, 2
    %v2673 = vxor.u32 %v2663, 2147483648
    %v2674 = vsel %vm2672, %v2673, %v2664
    %v2675 = vsel %vm2668, %v2671, %v2674
    %v2676 = vsel %vm2665, nan, %v2675
    %v2677 = vmul.f32 %v45, %v2676
    %v2678 = vsub.f32 %v2343, %v2460
    %v2679 = vadd.f32 %v2678, %v2572
    %v2680 = vmul.f32 %v2566, %v2679
    %v2681 = vadd.f32 %v2337, %v2680
    %v2682 = vsub.f32 %v2455, %v2565
    %v2683 = vadd.f32 %v2682, %v2677
    %v2684 = vmul.f32 %v2566, %v2683
    %v2685 = vadd.f32 %v2343, %v2684
    %v2686 = vand.u32 2147483647, %v2681
    %vm2687 = vcmp.le.f32.partialorder %v2686, 0.7853982
    %vm2688 = vcmp.lt.s32.totalorder %v2681, 0
    %v2689 = vand.u32 %v2681, 2139095040
    %v2690 = vshrl.u32 %v2689, 23
    %v2691 = vsub.s32 %v2690, 127
    %v2692 = vand.u32 2147483647, %v2681
    %v2693 = vand.u32 %v2692, 8388607
    %v2694 = vor.u32 %v2693, 8388608
    %v2695 = vsub.s32 0, %v2694
    %v2696 = vadd.s32 %v2691, 1
    %vm2697 = vcmp.gt.s32.totalorder %v2696, 0
    %v2698 = vsel %vm2697, %v2696, 0
    %v2699 = vshrl.u32 %v2698, 5
    %v2700 = vand.u32 %v2698, 31
    %v2701 = vsub.s32 32, %v2700
    %v2702 = vshrl.u32 683565275, %v2701
    %v2703 = vshll.u32 683565275, %v2700
    %v2704 = vshrl.u32 2475754826, %v2701
    %v2705 = vor.u32 %v2703, %v2704
    %v2706 = vshll.u32 2475754826, %v2700
    %v2707 = vshrl.u32 2131351028, %v2701
    %v2708 = vor.u32 %v2706, %v2707
    %v2709 = vshll.u32 2131351028, %v2700
    %v2710 = vshrl.u32 2102212464, %v2701
    %v2711 = vor.u32 %v2709, %v2710
    %v2712 = vshll.u32 2102212464, %v2700
    %v2713 = vshrl.u32 920167782, %v2701
    %v2714 = vor.u32 %v2712, %v2713
    %v2715 = vshll.u32 920167782, %v2700
    %v2716 = vshrl.u32 1326507024, %v2701
    %v2717 = vor.u32 %v2715, %v2716
    %vm2718 = vcmp.lt.s32.totalorder %v2699, 1
    %vm2719 = vcmp.lt.s32.totalorder %v2699, 2
    %vm2720 = vcmp.lt.s32.totalorder %v2699, 3
    %vm2721 = vcmp.lt.s32.totalorder %v2699, 4
    %v2722 = vsel %vm2718, %v2702, %v2705
    %v2723 = vsel %vm2721, %v2711, 2102212464
    %v2724 = vsel %vm2720, %v2708, %v2723
    %v2725 = vsel %vm2719, %v2722, %v2724
    %v2726 = vsel %vm2718, %v2705, %v2708
    %v2727 = vsel %vm2721, %v2714, 920167782
    %v2728 = vsel %vm2720, %v2711, %v2727
    %v2729 = vsel %vm2719, %v2726, %v2728
    %v2730 = vsel %vm2718, %v2708, %v2711
    %v2731 = vsel %vm2721, %v2717, 1326507024
    %v2732 = vsel %vm2720, %v2714, %v2731
    %v2733 = vsel %vm2719, %v2730, %v2732
    %v2734 = vshll.u32 %v2694, 8
    %v2735 = vmul.u32.u64.compose %v2734, %v2733
    %v2736 = vextract.low.u32 %v2735
    %v2737 = vextract.high.u32 %v2735
    %v2738 = vmul.u32.u64.compose %v2734, %v2729
    %v2739 = vextract.low.u32 %v2738
    %v2740 = vextract.high.u32 %v2738
    %v2741 = vmul.u32 %v2734, %v2725
    %v2742 = vadd.s32 %v2737, %v2739
    %vm2743 = vc.u32 %v2737, %v2739
    %v2744 = vadd.s32 %v2740, 1
    %v2745 = vsel %vm2743, %v2744, %v2740
    %v2746 = vadd.s32 %v2741, %v2745
    %v2747 = vadd.s32 %v2746, 536870912
    %v2748 = vshrl.u32 %v2747, 30
    %v2749 = vshll.u32 %v2748, 30
    %v2750 = vsub.s32 %v2746, %v2749
    %vm2751 = vcmp.lt.s32.totalorder %v2750, 0
    %v2752 = vsub.s32 0, %v2750
    %v2753 = vsel %vm2751, %v2752, %v2750
    %v2754 = vclz %v2753
    %v2755 = vsub.s32 %v2754, 2
    %vm2756 = vcmp.gt.s32.totalorder 0, %v2755
    %v2757 = vsel %vm2756, 0, %v2755
    %v2758 = vsub.s32 32, %v2757
    %v2759 = vshll.u32 %v2750, %v2757
    %v2760 = vshrl.u32 %v2742, %v2758
    %v2761 = vor.u32 %v2759, %v2760
    %v2762 = vsub.s32 4294967266, %v2757
    %v2763 = vadd.s32 %v2762, 127
    %v2764 = vshll.u32 %v2763, 23
    %v2765 = vor.u32 4788187, %v2764
    %v2766 = vand.u32 2147483647, %v2765
    %v2768 = vcvt.s32.f32 %v2761
    %v2769 = vmul.f32 %v2768, %v2766
    %v2770 = vxor.u32 %v2769, 2147483648
    %v2771 = vsel %vm2688, %v2770, %v2769
    %v2772 = vsub.s32 4, %v2748
    %v2773 = vsel %vm2688, %v2772, %v2748
    %v2774 = vsel %vm2687, %v2681, %v2771
    %v2775 = vsel %vm2687, 0, %v2773
    %v2776 = vcosq.f32.pop %v2774
    %v2777 = vsinq.f32.pop %v2774
    %vm2778 = vweird.f32 %v2681
    %v2779 = vadd.s32 %v2775, 3
    %v2780 = vand.u32 %v2779, 3
    %vm2781 = vcmp.lt.s32.totalorder %v2780, 2
    %vm2782 = vcmp.eq.s32.totalorder %v2780, 0
    %v2783 = vxor.u32 %v2777, 2147483648
    %v2784 = vsel %vm2782, %v2776, %v2783
    %vm2785 = vcmp.eq.s32.totalorder %v2780, 2
    %v2786 = vxor.u32 %v2776, 2147483648
    %v2787 = vsel %vm2785, %v2786, %v2777
    %v2788 = vsel %vm2781, %v2784, %v2787
    %v2789 = vsel %vm2778, nan, %v2788
    %v2790 = vmul.f32 %v45, %v2789
    %v2791 = vadd.f32 %v2460, %v2572
    %v2792 = vmul.f32 %v2791, 3.0
    %v2793 = vadd.f32 %v2343, %v2792
    %v2794 = vadd.f32 %v2793, %v2685
    %v2795 = vstv %s2350
    %v2796 = vmul.f32 %v2795, %v2794
    %v2797 = vadd.f32 %v2337, %v2796
    %v2798 = vadd.f32 %v2565, %v2677
    %v2799 = vmul.f32 %v2798, 3.0
    %v2800 = vadd.f32 %v2455, %v2799
    %v2801 = vadd.f32 %v2800, %v2790
    %v2802 = vmul.f32 %v2795, %v2801
    %v2803 = vadd.f32 %v2343, %v2802
    %s2804 = scalar_lea.vmem [#allocation9], 48
    %2805 = vst [vmem:[%s2804] sm:$0xff] %v2797
    %s2806 = scalar_lea.vmem [#allocation10], 48
    %2807 = vst [vmem:[%s2806] sm:$0xff] %v2803
    %s2808 = sld [smem:[#allocation3 + $0x6]]
    %s2809 = sld [smem:[#allocation4 + $0x6]]
    %s2810 = sld [smem:[#allocation5 + $0x6]]
    %v2811 = vand.u32 2147483647, %v2797
    %vm2812 = vcmp.le.f32.partialorder %v2811, 0.7853982
    %vm2813 = vcmp.lt.s32.totalorder %v2797, 0
    %v2814 = vand.u32 %v2797, 2139095040
    %v2815 = vshrl.u32 %v2814, 23
    %v2816 = vsub.s32 %v2815, 127
    %v2817 = vand.u32 2147483647, %v2797
    %v2818 = vand.u32 %v2817, 8388607
    %v2819 = vor.u32 %v2818, 8388608
    %v2820 = vsub.s32 0, %v2819
    %v2821 = vadd.s32 %v2816, 1
    %vm2822 = vcmp.gt.s32.totalorder %v2821, 0
    %v2823 = vsel %vm2822, %v2821, 0
    %v2824 = vshrl.u32 %v2823, 5
    %v2825 = vand.u32 %v2823, 31
    %v2826 = vsub.s32 32, %v2825
    %v2827 = vshrl.u32 683565275, %v2826
    %v2828 = vshll.u32 683565275, %v2825
    %v2829 = vshrl.u32 2475754826, %v2826
    %v2830 = vor.u32 %v2828, %v2829
    %v2831 = vshll.u32 2475754826, %v2825
    %v2832 = vshrl.u32 2131351028, %v2826
    %v2833 = vor.u32 %v2831, %v2832
    %v2834 = vshll.u32 2131351028, %v2825
    %v2835 = vshrl.u32 2102212464, %v2826
    %v2836 = vor.u32 %v2834, %v2835
    %v2837 = vshll.u32 2102212464, %v2825
    %v2838 = vshrl.u32 920167782, %v2826
    %v2839 = vor.u32 %v2837, %v2838
    %v2840 = vshll.u32 920167782, %v2825
    %v2841 = vshrl.u32 1326507024, %v2826
    %v2842 = vor.u32 %v2840, %v2841
    %vm2843 = vcmp.lt.s32.totalorder %v2824, 1
    %vm2844 = vcmp.lt.s32.totalorder %v2824, 2
    %vm2845 = vcmp.lt.s32.totalorder %v2824, 3
    %vm2846 = vcmp.lt.s32.totalorder %v2824, 4
    %v2847 = vsel %vm2843, %v2827, %v2830
    %v2848 = vsel %vm2846, %v2836, 2102212464
    %v2849 = vsel %vm2845, %v2833, %v2848
    %v2850 = vsel %vm2844, %v2847, %v2849
    %v2851 = vsel %vm2843, %v2830, %v2833
    %v2852 = vsel %vm2846, %v2839, 920167782
    %v2853 = vsel %vm2845, %v2836, %v2852
    %v2854 = vsel %vm2844, %v2851, %v2853
    %v2855 = vsel %vm2843, %v2833, %v2836
    %v2856 = vsel %vm2846, %v2842, 1326507024
    %v2857 = vsel %vm2845, %v2839, %v2856
    %v2858 = vsel %vm2844, %v2855, %v2857
    %v2859 = vshll.u32 %v2819, 8
    %v2860 = vmul.u32.u64.compose %v2859, %v2858
    %v2861 = vextract.low.u32 %v2860
    %v2862 = vextract.high.u32 %v2860
    %v2863 = vmul.u32.u64.compose %v2859, %v2854
    %v2864 = vextract.low.u32 %v2863
    %v2865 = vextract.high.u32 %v2863
    %v2866 = vmul.u32 %v2859, %v2850
    %v2867 = vadd.s32 %v2862, %v2864
    %vm2868 = vc.u32 %v2862, %v2864
    %v2869 = vadd.s32 %v2865, 1
    %v2870 = vsel %vm2868, %v2869, %v2865
    %v2871 = vadd.s32 %v2866, %v2870
    %v2872 = vadd.s32 %v2871, 536870912
    %v2873 = vshrl.u32 %v2872, 30
    %v2874 = vshll.u32 %v2873, 30
    %v2875 = vsub.s32 %v2871, %v2874
    %vm2876 = vcmp.lt.s32.totalorder %v2875, 0
    %v2877 = vsub.s32 0, %v2875
    %v2878 = vsel %vm2876, %v2877, %v2875
    %v2879 = vclz %v2878
    %v2880 = vsub.s32 %v2879, 2
    %vm2881 = vcmp.gt.s32.totalorder 0, %v2880
    %v2882 = vsel %vm2881, 0, %v2880
    %v2883 = vsub.s32 32, %v2882
    %v2884 = vshll.u32 %v2875, %v2882
    %v2885 = vshrl.u32 %v2867, %v2883
    %v2886 = vor.u32 %v2884, %v2885
    %v2887 = vsub.s32 4294967266, %v2882
    %v2888 = vadd.s32 %v2887, 127
    %v2889 = vshll.u32 %v2888, 23
    %v2890 = vor.u32 4788187, %v2889
    %v2891 = vand.u32 2147483647, %v2890
    %v2893 = vcvt.s32.f32 %v2886
    %v2894 = vmul.f32 %v2893, %v2891
    %v2895 = vxor.u32 %v2894, 2147483648
    %v2896 = vsel %vm2813, %v2895, %v2894
    %v2897 = vsub.s32 4, %v2873
    %v2898 = vsel %vm2813, %v2897, %v2873
    %v2899 = vsel %vm2812, %v2797, %v2896
    %v2900 = vsel %vm2812, 0, %v2898
    %v2901 = vcosq.f32.pop %v2899
    %v2902 = vsinq.f32.pop %v2899
    %vm2903 = vweird.f32 %v2797
    %v2904 = vadd.s32 %v2900, 3
    %v2905 = vand.u32 %v2904, 3
    %vm2906 = vcmp.lt.s32.totalorder %v2905, 2
    %vm2907 = vcmp.eq.s32.totalorder %v2905, 0
    %v2908 = vxor.u32 %v2902, 2147483648
    %v2909 = vsel %vm2907, %v2901, %v2908
    %vm2910 = vcmp.eq.s32.totalorder %v2905, 2
    %v2911 = vxor.u32 %v2901, 2147483648
    %v2912 = vsel %vm2910, %v2911, %v2902
    %v2913 = vsel %vm2906, %v2909, %v2912
    %v2914 = vsel %vm2903, nan, %v2913
    %v2915 = vmul.f32 %v45, %v2914
    %v2916 = vstv %s2809
    %v2917 = vmul.f32 %v2916, %v2803
    %v2918 = vadd.f32 %v2797, %v2917
    %v2919 = vmul.f32 %v2916, %v2915
    %v2920 = vadd.f32 %v2803, %v2919
    %v2921 = vand.u32 2147483647, %v2918
    %vm2922 = vcmp.le.f32.partialorder %v2921, 0.7853982
    %vm2923 = vcmp.lt.s32.totalorder %v2918, 0
    %v2924 = vand.u32 %v2918, 2139095040
    %v2925 = vshrl.u32 %v2924, 23
    %v2926 = vsub.s32 %v2925, 127
    %v2927 = vand.u32 2147483647, %v2918
    %v2928 = vand.u32 %v2927, 8388607
    %v2929 = vor.u32 %v2928, 8388608
    %v2930 = vsub.s32 0, %v2929
    %v2931 = vadd.s32 %v2926, 1
    %vm2932 = vcmp.gt.s32.totalorder %v2931, 0
    %v2933 = vsel %vm2932, %v2931, 0
    %v2934 = vshrl.u32 %v2933, 5
    %v2935 = vand.u32 %v2933, 31
    %v2936 = vsub.s32 32, %v2935
    %v2937 = vshrl.u32 683565275, %v2936
    %v2938 = vshll.u32 683565275, %v2935
    %v2939 = vshrl.u32 2475754826, %v2936
    %v2940 = vor.u32 %v2938, %v2939
    %v2941 = vshll.u32 2475754826, %v2935
    %v2942 = vshrl.u32 2131351028, %v2936
    %v2943 = vor.u32 %v2941, %v2942
    %v2944 = vshll.u32 2131351028, %v2935
    %v2945 = vshrl.u32 2102212464, %v2936
    %v2946 = vor.u32 %v2944, %v2945
    %v2947 = vshll.u32 2102212464, %v2935
    %v2948 = vshrl.u32 920167782, %v2936
    %v2949 = vor.u32 %v2947, %v2948
    %v2950 = vshll.u32 920167782, %v2935
    %v2951 = vshrl.u32 1326507024, %v2936
    %v2952 = vor.u32 %v2950, %v2951
    %vm2953 = vcmp.lt.s32.totalorder %v2934, 1
    %vm2954 = vcmp.lt.s32.totalorder %v2934, 2
    %vm2955 = vcmp.lt.s32.totalorder %v2934, 3
    %vm2956 = vcmp.lt.s32.totalorder %v2934, 4
    %v2957 = vsel %vm2953, %v2937, %v2940
    %v2958 = vsel %vm2956, %v2946, 2102212464
    %v2959 = vsel %vm2955, %v2943, %v2958
    %v2960 = vsel %vm2954, %v2957, %v2959
    %v2961 = vsel %vm2953, %v2940, %v2943
    %v2962 = vsel %vm2956, %v2949, 920167782
    %v2963 = vsel %vm2955, %v2946, %v2962
    %v2964 = vsel %vm2954, %v2961, %v2963
    %v2965 = vsel %vm2953, %v2943, %v2946
    %v2966 = vsel %vm2956, %v2952, 1326507024
    %v2967 = vsel %vm2955, %v2949, %v2966
    %v2968 = vsel %vm2954, %v2965, %v2967
    %v2969 = vshll.u32 %v2929, 8
    %v2970 = vmul.u32.u64.compose %v2969, %v2968
    %v2971 = vextract.low.u32 %v2970
    %v2972 = vextract.high.u32 %v2970
    %v2973 = vmul.u32.u64.compose %v2969, %v2964
    %v2974 = vextract.low.u32 %v2973
    %v2975 = vextract.high.u32 %v2973
    %v2976 = vmul.u32 %v2969, %v2960
    %v2977 = vadd.s32 %v2972, %v2974
    %vm2978 = vc.u32 %v2972, %v2974
    %v2979 = vadd.s32 %v2975, 1
    %v2980 = vsel %vm2978, %v2979, %v2975
    %v2981 = vadd.s32 %v2976, %v2980
    %v2982 = vadd.s32 %v2981, 536870912
    %v2983 = vshrl.u32 %v2982, 30
    %v2984 = vshll.u32 %v2983, 30
    %v2985 = vsub.s32 %v2981, %v2984
    %vm2986 = vcmp.lt.s32.totalorder %v2985, 0
    %v2987 = vsub.s32 0, %v2985
    %v2988 = vsel %vm2986, %v2987, %v2985
    %v2989 = vclz %v2988
    %v2990 = vsub.s32 %v2989, 2
    %vm2991 = vcmp.gt.s32.totalorder 0, %v2990
    %v2992 = vsel %vm2991, 0, %v2990
    %v2993 = vsub.s32 32, %v2992
    %v2994 = vshll.u32 %v2985, %v2992
    %v2995 = vshrl.u32 %v2977, %v2993
    %v2996 = vor.u32 %v2994, %v2995
    %v2997 = vsub.s32 4294967266, %v2992
    %v2998 = vadd.s32 %v2997, 127
    %v2999 = vshll.u32 %v2998, 23
    %v3000 = vor.u32 4788187, %v2999
    %v3001 = vand.u32 2147483647, %v3000
    %v3003 = vcvt.s32.f32 %v2996
    %v3004 = vmul.f32 %v3003, %v3001
    %v3005 = vxor.u32 %v3004, 2147483648
    %v3006 = vsel %vm2923, %v3005, %v3004
    %v3007 = vsub.s32 4, %v2983
    %v3008 = vsel %vm2923, %v3007, %v2983
    %v3009 = vsel %vm2922, %v2918, %v3006
    %v3010 = vsel %vm2922, 0, %v3008
    %v3011 = vcosq.f32.pop %v3009
    %v3012 = vsinq.f32.pop %v3009
    %vm3013 = vweird.f32 %v2918
    %v3014 = vadd.s32 %v3010, 3
    %v3015 = vand.u32 %v3014, 3
    %vm3016 = vcmp.lt.s32.totalorder %v3015, 2
    %vm3017 = vcmp.eq.s32.totalorder %v3015, 0
    %v3018 = vxor.u32 %v3012, 2147483648
    %v3019 = vsel %vm3017, %v3011, %v3018
    %vm3020 = vcmp.eq.s32.totalorder %v3015, 2
    %v3021 = vxor.u32 %v3011, 2147483648
    %v3022 = vsel %vm3020, %v3021, %v3012
    %v3023 = vsel %vm3016, %v3019, %v3022
    %v3024 = vsel %vm3013, nan, %v3023
    %v3025 = vmul.f32 %v45, %v3024
    %v3026 = vstv %s2808
    %v3027 = vmul.f32 %v3026, %v2920
    %v3028 = vadd.f32 %v2797, %v3027
    %v3029 = vsub.f32 %v3028, %v2917
    %v3030 = vmul.f32 %v3026, %v3025
    %v3031 = vadd.f32 %v2803, %v3030
    %v3032 = vsub.f32 %v3031, %v2919
    %v3033 = vand.u32 2147483647, %v3029
    %vm3034 = vcmp.le.f32.partialorder %v3033, 0.7853982
    %vm3035 = vcmp.lt.s32.totalorder %v3029, 0
    %v3036 = vand.u32 %v3029, 2139095040
    %v3037 = vshrl.u32 %v3036, 23
    %v3038 = vsub.s32 %v3037, 127
    %v3039 = vand.u32 2147483647, %v3029
    %v3040 = vand.u32 %v3039, 8388607
    %v3041 = vor.u32 %v3040, 8388608
    %v3042 = vsub.s32 0, %v3041
    %v3043 = vadd.s32 %v3038, 1
    %vm3044 = vcmp.gt.s32.totalorder %v3043, 0
    %v3045 = vsel %vm3044, %v3043, 0
    %v3046 = vshrl.u32 %v3045, 5
    %v3047 = vand.u32 %v3045, 31
    %v3048 = vsub.s32 32, %v3047
    %v3049 = vshrl.u32 683565275, %v3048
    %v3050 = vshll.u32 683565275, %v3047
    %v3051 = vshrl.u32 2475754826, %v3048
    %v3052 = vor.u32 %v3050, %v3051
    %v3053 = vshll.u32 2475754826, %v3047
    %v3054 = vshrl.u32 2131351028, %v3048
    %v3055 = vor.u32 %v3053, %v3054
    %v3056 = vshll.u32 2131351028, %v3047
    %v3057 = vshrl.u32 2102212464, %v3048
    %v3058 = vor.u32 %v3056, %v3057
    %v3059 = vshll.u32 2102212464, %v3047
    %v3060 = vshrl.u32 920167782, %v3048
    %v3061 = vor.u32 %v3059, %v3060
    %v3062 = vshll.u32 920167782, %v3047
    %v3063 = vshrl.u32 1326507024, %v3048
    %v3064 = vor.u32 %v3062, %v3063
    %vm3065 = vcmp.lt.s32.totalorder %v3046, 1
    %vm3066 = vcmp.lt.s32.totalorder %v3046, 2
    %vm3067 = vcmp.lt.s32.totalorder %v3046, 3
    %vm3068 = vcmp.lt.s32.totalorder %v3046, 4
    %v3069 = vsel %vm3065, %v3049, %v3052
    %v3070 = vsel %vm3068, %v3058, 2102212464
    %v3071 = vsel %vm3067, %v3055, %v3070
    %v3072 = vsel %vm3066, %v3069, %v3071
    %v3073 = vsel %vm3065, %v3052, %v3055
    %v3074 = vsel %vm3068, %v3061, 920167782
    %v3075 = vsel %vm3067, %v3058, %v3074
    %v3076 = vsel %vm3066, %v3073, %v3075
    %v3077 = vsel %vm3065, %v3055, %v3058
    %v3078 = vsel %vm3068, %v3064, 1326507024
    %v3079 = vsel %vm3067, %v3061, %v3078
    %v3080 = vsel %vm3066, %v3077, %v3079
    %v3081 = vshll.u32 %v3041, 8
    %v3082 = vmul.u32.u64.compose %v3081, %v3080
    %v3083 = vextract.low.u32 %v3082
    %v3084 = vextract.high.u32 %v3082
    %v3085 = vmul.u32.u64.compose %v3081, %v3076
    %v3086 = vextract.low.u32 %v3085
    %v3087 = vextract.high.u32 %v3085
    %v3088 = vmul.u32 %v3081, %v3072
    %v3089 = vadd.s32 %v3084, %v3086
    %vm3090 = vc.u32 %v3084, %v3086
    %v3091 = vadd.s32 %v3087, 1
    %v3092 = vsel %vm3090, %v3091, %v3087
    %v3093 = vadd.s32 %v3088, %v3092
    %v3094 = vadd.s32 %v3093, 536870912
    %v3095 = vshrl.u32 %v3094, 30
    %v3096 = vshll.u32 %v3095, 30
    %v3097 = vsub.s32 %v3093, %v3096
    %vm3098 = vcmp.lt.s32.totalorder %v3097, 0
    %v3099 = vsub.s32 0, %v3097
    %v3100 = vsel %vm3098, %v3099, %v3097
    %v3101 = vclz %v3100
    %v3102 = vsub.s32 %v3101, 2
    %vm3103 = vcmp.gt.s32.totalorder 0, %v3102
    %v3104 = vsel %vm3103, 0, %v3102
    %v3105 = vsub.s32 32, %v3104
    %v3106 = vshll.u32 %v3097, %v3104
    %v3107 = vshrl.u32 %v3089, %v3105
    %v3108 = vor.u32 %v3106, %v3107
    %v3109 = vsub.s32 4294967266, %v3104
    %v3110 = vadd.s32 %v3109, 127
    %v3111 = vshll.u32 %v3110, 23
    %v3112 = vor.u32 4788187, %v3111
    %v3113 = vand.u32 2147483647, %v3112
    %v3115 = vcvt.s32.f32 %v3108
    %v3116 = vmul.f32 %v3115, %v3113
    %v3117 = vxor.u32 %v3116, 2147483648
    %v3118 = vsel %vm3035, %v3117, %v3116
    %v3119 = vsub.s32 4, %v3095
    %v3120 = vsel %vm3035, %v3119, %v3095
    %v3121 = vsel %vm3034, %v3029, %v3118
    %v3122 = vsel %vm3034, 0, %v3120
    %v3123 = vcosq.f32.pop %v3121
    %v3124 = vsinq.f32.pop %v3121
    %vm3125 = vweird.f32 %v3029
    %v3126 = vadd.s32 %v3122, 3
    %v3127 = vand.u32 %v3126, 3
    %vm3128 = vcmp.lt.s32.totalorder %v3127, 2
    %vm3129 = vcmp.eq.s32.totalorder %v3127, 0
    %v3130 = vxor.u32 %v3124, 2147483648
    %v3131 = vsel %vm3129, %v3123, %v3130
    %vm3132 = vcmp.eq.s32.totalorder %v3127, 2
    %v3133 = vxor.u32 %v3123, 2147483648
    %v3134 = vsel %vm3132, %v3133, %v3124
    %v3135 = vsel %vm3128, %v3131, %v3134
    %v3136 = vsel %vm3125, nan, %v3135
    %v3137 = vmul.f32 %v45, %v3136
    %v3138 = vsub.f32 %v2803, %v2920
    %v3139 = vadd.f32 %v3138, %v3032
    %v3140 = vmul.f32 %v3026, %v3139
    %v3141 = vadd.f32 %v2797, %v3140
    %v3142 = vsub.f32 %v2915, %v3025
    %v3143 = vadd.f32 %v3142, %v3137
    %v3144 = vmul.f32 %v3026, %v3143
    %v3145 = vadd.f32 %v2803, %v3144
    %v3146 = vand.u32 2147483647, %v3141
    %vm3147 = vcmp.le.f32.partialorder %v3146, 0.7853982
    %vm3148 = vcmp.lt.s32.totalorder %v3141, 0
    %v3149 = vand.u32 %v3141, 2139095040
    %v3150 = vshrl.u32 %v3149, 23
    %v3151 = vsub.s32 %v3150, 127
    %v3152 = vand.u32 2147483647, %v3141
    %v3153 = vand.u32 %v3152, 8388607
    %v3154 = vor.u32 %v3153, 8388608
    %v3155 = vsub.s32 0, %v3154
    %v3156 = vadd.s32 %v3151, 1
    %vm3157 = vcmp.gt.s32.totalorder %v3156, 0
    %v3158 = vsel %vm3157, %v3156, 0
    %v3159 = vshrl.u32 %v3158, 5
    %v3160 = vand.u32 %v3158, 31
    %v3161 = vsub.s32 32, %v3160
    %v3162 = vshrl.u32 683565275, %v3161
    %v3163 = vshll.u32 683565275, %v3160
    %v3164 = vshrl.u32 2475754826, %v3161
    %v3165 = vor.u32 %v3163, %v3164
    %v3166 = vshll.u32 2475754826, %v3160
    %v3167 = vshrl.u32 2131351028, %v3161
    %v3168 = vor.u32 %v3166, %v3167
    %v3169 = vshll.u32 2131351028, %v3160
    %v3170 = vshrl.u32 2102212464, %v3161
    %v3171 = vor.u32 %v3169, %v3170
    %v3172 = vshll.u32 2102212464, %v3160
    %v3173 = vshrl.u32 920167782, %v3161
    %v3174 = vor.u32 %v3172, %v3173
    %v3175 = vshll.u32 920167782, %v3160
    %v3176 = vshrl.u32 1326507024, %v3161
    %v3177 = vor.u32 %v3175, %v3176
    %vm3178 = vcmp.lt.s32.totalorder %v3159, 1
    %vm3179 = vcmp.lt.s32.totalorder %v3159, 2
    %vm3180 = vcmp.lt.s32.totalorder %v3159, 3
    %vm3181 = vcmp.lt.s32.totalorder %v3159, 4
    %v3182 = vsel %vm3178, %v3162, %v3165
    %v3183 = vsel %vm3181, %v3171, 2102212464
    %v3184 = vsel %vm3180, %v3168, %v3183
    %v3185 = vsel %vm3179, %v3182, %v3184
    %v3186 = vsel %vm3178, %v3165, %v3168
    %v3187 = vsel %vm3181, %v3174, 920167782
    %v3188 = vsel %vm3180, %v3171, %v3187
    %v3189 = vsel %vm3179, %v3186, %v3188
    %v3190 = vsel %vm3178, %v3168, %v3171
    %v3191 = vsel %vm3181, %v3177, 1326507024
    %v3192 = vsel %vm3180, %v3174, %v3191
    %v3193 = vsel %vm3179, %v3190, %v3192
    %v3194 = vshll.u32 %v3154, 8
    %v3195 = vmul.u32.u64.compose %v3194, %v3193
    %v3196 = vextract.low.u32 %v3195
    %v3197 = vextract.high.u32 %v3195
    %v3198 = vmul.u32.u64.compose %v3194, %v3189
    %v3199 = vextract.low.u32 %v3198
    %v3200 = vextract.high.u32 %v3198
    %v3201 = vmul.u32 %v3194, %v3185
    %v3202 = vadd.s32 %v3197, %v3199
    %vm3203 = vc.u32 %v3197, %v3199
    %v3204 = vadd.s32 %v3200, 1
    %v3205 = vsel %vm3203, %v3204, %v3200
    %v3206 = vadd.s32 %v3201, %v3205
    %v3207 = vadd.s32 %v3206, 536870912
    %v3208 = vshrl.u32 %v3207, 30
    %v3209 = vshll.u32 %v3208, 30
    %v3210 = vsub.s32 %v3206, %v3209
    %vm3211 = vcmp.lt.s32.totalorder %v3210, 0
    %v3212 = vsub.s32 0, %v3210
    %v3213 = vsel %vm3211, %v3212, %v3210
    %v3214 = vclz %v3213
    %v3215 = vsub.s32 %v3214, 2
    %vm3216 = vcmp.gt.s32.totalorder 0, %v3215
    %v3217 = vsel %vm3216, 0, %v3215
    %v3218 = vsub.s32 32, %v3217
    %v3219 = vshll.u32 %v3210, %v3217
    %v3220 = vshrl.u32 %v3202, %v3218
    %v3221 = vor.u32 %v3219, %v3220
    %v3222 = vsub.s32 4294967266, %v3217
    %v3223 = vadd.s32 %v3222, 127
    %v3224 = vshll.u32 %v3223, 23
    %v3225 = vor.u32 4788187, %v3224
    %v3226 = vand.u32 2147483647, %v3225
    %v3228 = vcvt.s32.f32 %v3221
    %v3229 = vmul.f32 %v3228, %v3226
    %v3230 = vxor.u32 %v3229, 2147483648
    %v3231 = vsel %vm3148, %v3230, %v3229
    %v3232 = vsub.s32 4, %v3208
    %v3233 = vsel %vm3148, %v3232, %v3208
    %v3234 = vsel %vm3147, %v3141, %v3231
    %v3235 = vsel %vm3147, 0, %v3233
    %v3236 = vcosq.f32.pop %v3234
    %v3237 = vsinq.f32.pop %v3234
    %vm3238 = vweird.f32 %v3141
    %v3239 = vadd.s32 %v3235, 3
    %v3240 = vand.u32 %v3239, 3
    %vm3241 = vcmp.lt.s32.totalorder %v3240, 2
    %vm3242 = vcmp.eq.s32.totalorder %v3240, 0
    %v3243 = vxor.u32 %v3237, 2147483648
    %v3244 = vsel %vm3242, %v3236, %v3243
    %vm3245 = vcmp.eq.s32.totalorder %v3240, 2
    %v3246 = vxor.u32 %v3236, 2147483648
    %v3247 = vsel %vm3245, %v3246, %v3237
    %v3248 = vsel %vm3241, %v3244, %v3247
    %v3249 = vsel %vm3238, nan, %v3248
    %v3250 = vmul.f32 %v45, %v3249
    %v3251 = vadd.f32 %v2920, %v3032
    %v3252 = vmul.f32 %v3251, 3.0
    %v3253 = vadd.f32 %v2803, %v3252
    %v3254 = vadd.f32 %v3253, %v3145
    %v3255 = vstv %s2810
    %v3256 = vmul.f32 %v3255, %v3254
    %v3257 = vadd.f32 %v2797, %v3256
    %v3258 = vadd.f32 %v3025, %v3137
    %v3259 = vmul.f32 %v3258, 3.0
    %v3260 = vadd.f32 %v2915, %v3259
    %v3261 = vadd.f32 %v3260, %v3250
    %v3262 = vmul.f32 %v3255, %v3261
    %v3263 = vadd.f32 %v2803, %v3262
    %s3264 = scalar_lea.vmem [#allocation9], 56
    %3265 = vst [vmem:[%s3264] sm:$0xff] %v3257
    %s3266 = scalar_lea.vmem [#allocation10], 56
    %3267 = vst [vmem:[%s3266] sm:$0xff] %v3263
    // Predicated region
    $region10: #{tpu_custom_call.1} parent=1 // pred_check
      _
    $region11: #{tpu_custom_call.1} parent=1 // pred_check_branch
      %3269 = sbr.rel (0) target = $region13
    $region12: #{tpu_custom_call.1} parent=1 // pred_region
      %s3271 = ssub.s32 1024, 1024
      %3272 = vsyncadd [#allocation8], %s3271
      %s3273 = sshll.u32 [#allocation9], 4
      %s3274 = int_to_ptr.vmem [resolvable:$true] %s3273
      %3279 = dma.vmem_to_hbm [thread:$0]  %s3274, 1024, %s4, [#allocation8], 128, 128, 8
    $region13: #{tpu_custom_call.1} parent=1 // pred_fallthru
      _
    // Predicated region
    $region14: #{tpu_custom_call.1} parent=1 // pred_check
      _
    $region15: #{tpu_custom_call.1} parent=1 // pred_check_branch
      %3281 = sbr.rel (0) target = $region17
    $region16: #{tpu_custom_call.1} parent=1 // pred_region
      %s3283 = ssub.s32 1024, 1024
      %3284 = vsyncadd [#allocation11], %s3283
      %s3285 = sshll.u32 [#allocation10], 4
      %s3286 = int_to_ptr.vmem [resolvable:$true] %s3285
      %3291 = dma.vmem_to_hbm [thread:$0]  %s3286, 1024, %s5, [#allocation11], 128, 128, 8
    $region17: #{tpu_custom_call.1} parent=1 // pred_fallthru
      _
    // Predicated region
    $region18: #{tpu_custom_call.1} parent=1 // pred_check
      _
    $region19: #{tpu_custom_call.1} parent=1 // pred_check_branch
      %3293 = sbr.rel (0) target = $region21
    $region20: #{tpu_custom_call.1} parent=1 // pred_region
      %3294 = dma.done [#allocation8], 1024
    $region21: #{tpu_custom_call.1} parent=1 // pred_fallthru
      _
    // Predicated region
    $region22: #{tpu_custom_call.1} parent=1 // pred_check
      _
    $region23: #{tpu_custom_call.1} parent=1 // pred_check_branch
      %3296 = sbr.rel (0) target = $region25
    $region24: #{tpu_custom_call.1} parent=1 // pred_region
      %3297 = dma.done [#allocation11], 1024
    $region25: #{tpu_custom_call.1} parent=1 // pred_fallthru
      _
    %3298 = vsyncpa [#allocation7], 1
    %3299 = vsyncpa [#allocation8], 1
    %3300 = vsyncpa [#allocation11], 1

</llo_original>
